<compile_context>
chip_gen: v7x
topology: tpu7x:2x2x1
jax: 0.10.0
libtpu: 0.0.40
codegen_flags: <defaults>
</compile_context>

<pallas_src>
import jax
import jax.numpy as jnp
from jax.experimental import pallas as pl
from jax.experimental.pallas import tpu as pltpu

EPS = 1e-5  # nn.BatchNorm2d default


def _detect_vmem_limit():
    """Scoped-VMEM budget: 3/4 of the physical per-core VMEM, clamped."""
    cap = None
    try:
        info = pltpu.get_tpu_info()
        cap = getattr(info, "vmem_capacity_bytes", None)
    except Exception:
        cap = None
    if not cap:
        cap = 64 * 1024 * 1024          # conservative (v7x physical)
    lim = (int(cap) * 3) // 4           # 48 MiB on v7x, 96 MiB on v5e/v6e
    return max(32 * 1024 * 1024, min(lim, 100 * 1024 * 1024))


_VMEM_LIMIT = _detect_vmem_limit()


# ---------------------------------------------------------------------------
# Pass 1: 3x3 conv as ONE (H*W, 9C) @ (9C, C) matmul + BN batch statistics.
# Grid: (NSPLIT "parallel", N//NSPLIT "arbitrary") — one padded image per step.
# ---------------------------------------------------------------------------
def _make_conv_stats_kernel(H, W, C):
    HW = H * W

    def kernel(xpad_ref, w_ref, y_ref, s1_ref, s2_ref):
        # xpad_ref: (1, H+2, W+2, C) bf16  one zero-padded image
        # w_ref   : (9*C, C)         bf16  tap-major conv weights (resident)
        # y_ref   : (1, H*W, C)      bf16  conv output for this image
        # s1_ref  : (1, 1, C)        f32   per-batch-chunk running sum
        # s2_ref  : (1, 1, C)        f32   per-batch-chunk running sum-of-squares
        @pl.when(pl.program_id(1) == 0)           # start of this chunk's loop
        def _init():
            s1_ref[...] = jnp.zeros_like(s1_ref)
            s2_ref[...] = jnp.zeros_like(s2_ref)

        x = xpad_ref[0]                           # (H+2, W+2, C) bf16

        # Build the im2col patch in VMEM only: 9 shifted (H*W, C) views packed
        # along K.  One MXU matmul with K = 9C keeps accumulation inside the
        # MXU (no multi-pass f32 accumulator streaming through VMEM).
        taps = []
        for dy in range(3):                       # tap order matches w layout
            for dx in range(3):
                taps.append(x[dy:dy + H, dx:dx + W, :].reshape(HW, C))
        patch = jnp.concatenate(taps, axis=1)     # (H*W, 9C) bf16

        acc = jnp.dot(patch, w_ref[...],
                      preferred_element_type=jnp.float32)   # (H*W, C) f32

        # bf16 intermediate (halves y HBM traffic); stats from the f32 acc.
        y_ref[0] = acc.astype(y_ref.dtype)
        # NOTE: single-pass sum / sum-of-squares in f32; var = E[y^2] - mean^2
        # can cancel catastrophically if |mean| >> std.  Fine for conv outputs
        # (near-zero mean); switch to Welford merging if that assumption breaks.
        s1_ref[...] += jnp.sum(acc, axis=0, keepdims=True)[None]
        s2_ref[...] += jnp.sum(acc * acc, axis=0, keepdims=True)[None]

    return kernel


# ---------------------------------------------------------------------------
# Pass 2: lane-dense elementwise  out = relu(y * scale + shift + x)
# on a (rows, cols) slab with cols a multiple of 128 whenever possible.
# ---------------------------------------------------------------------------
def _bn_res_relu_kernel(y_ref, x_ref, scale_ref, shift_ref, out_ref):
    y = y_ref[...].astype(jnp.float32)
    out = y * scale_ref[...] + shift_ref[...] + x_ref[...]
    out_ref[...] = jnp.maximum(out, 0.0)


def _choose_slab(N, H, W, C):
    """(rows, cols, channel-repeat) with cols a multiple of 128 if possible."""
    if (W * C) % 128 == 0:
        return N * H, W * C, W
    if (H * W * C) % 128 == 0:
        return N, H * W * C, H * W
    return N * H, W * C, W          # fallback: masked stores, still correct


def _pick_row_tile(rows, cols, vmem_limit):
    """Byte-budgeted row tile: (y bf16 + x f32 + out f32) double-buffered."""
    bytes_per_row = (2 + 4 + 4) * cols
    budget = max(vmem_limit // 2, 4 * 1024 * 1024)
    max_tr = max(1, budget // (2 * bytes_per_row))
    if rows <= max_tr:
        return rows                                  # full-extent block
    for cand in (2048, 1024, 512, 256, 128, 64, 32, 16, 8):
        if cand <= max_tr and rows % cand == 0:
            return cand
    start = max_tr - (max_tr % 8)
    for cand in range(start, 7, -8):                 # any multiple-of-8 divisor
        if rows % cand == 0:
            return cand
    return rows                                      # correctness over fit


@jax.jit
def small_block_forward(x, w, gamma, beta):
    """x: (N, C, H, W) f32 NCHW; w: (C, C, 3, 3); gamma/beta: (C,)."""
    N, C, H, W = x.shape
    assert w.shape == (C, C, 3, 3)
    Hp, Wp, HW = H + 2, W + 2, H * W
    M = N * H * W                                  # BN reduction size

    # glue: pad + NCHW->NHWC + bf16 cast as one fused copy for the conv input;
    # the f32 NHWC residual needs its own transpose (used unrounded in pass 2).
    x_pad = jnp.transpose(
        jnp.pad(x, ((0, 0), (0, 0), (1, 1), (1, 1))), (0, 2, 3, 1)
    ).astype(jnp.bfloat16)                                          # (N,Hp,Wp,C)
    x_nhwc = jnp.transpose(x, (0, 2, 3, 1))                         # (N,H,W,C) f32
    # weights (Cout,Cin,ky,kx) -> (9*Cin, Cout) bf16, tap-major (matches patch)
    w_mat = jnp.transpose(w, (2, 3, 1, 0)).reshape(9 * C, C).astype(jnp.bfloat16)

    # batch split so v7x's 2nd TensorCore gets half of pass 1 (no-op on 1-TC chips)
    NSPLIT = 2 if (N % 2 == 0 and N >= 2) else 1
    NCHUNK = N // NSPLIT

    # ---- pass 1: conv (single 9C-K matmul) + per-chunk sum / sumsq ----
    y, s1, s2 = pl.pallas_call(
        _make_conv_stats_kernel(H, W, C),
        grid=(NSPLIT, NCHUNK),
        in_specs=[
            pl.BlockSpec((1, Hp, Wp, C), lambda p, n: (p * NCHUNK + n, 0, 0, 0)),
            pl.BlockSpec((9 * C, C), lambda p, n: (0, 0)),
        ],
        out_specs=(
            pl.BlockSpec((1, HW, C), lambda p, n: (p * NCHUNK + n, 0, 0)),
            pl.BlockSpec((1, 1, C), lambda p, n: (p, 0, 0)),
            pl.BlockSpec((1, 1, C), lambda p, n: (p, 0, 0)),
        ),
        out_shape=(
            jax.ShapeDtypeStruct((N, HW, C), jnp.bfloat16),
            jax.ShapeDtypeStruct((NSPLIT, 1, C), jnp.float32),
            jax.ShapeDtypeStruct((NSPLIT, 1, C), jnp.float32),
        ),
        compiler_params=pltpu.CompilerParams(
            dimension_semantics=("parallel", "arbitrary"),
            vmem_limit_bytes=_VMEM_LIMIT,
        ),
    )(x_pad, w_mat)

    # glue: reduce per-chunk partials, fold BN (training mode, biased variance)
    s1_tot = jnp.sum(s1, axis=(0, 1))
    s2_tot = jnp.sum(s2, axis=(0, 1))
    mean = s1_tot / M
    var = jnp.maximum(s2_tot / M - mean * mean, 0.0)
    scale = gamma.astype(jnp.float32) * jax.lax.rsqrt(var + EPS)
    shift = beta.astype(jnp.float32) - mean * scale

    # lane-dense slab (free reshapes of contiguous NHWC-ordered buffers)
    rows, cols, rep = _choose_slab(N, H, W, C)
    y_flat = y.reshape(rows, cols)                 # bf16
    x_res = x_nhwc.reshape(rows, cols)             # f32 residual
    scale_t = jnp.tile(scale, rep).reshape(1, cols)
    shift_t = jnp.tile(shift, rep).reshape(1, cols)

    # ---- pass 2: scale/shift + residual + ReLU ----
    TR = _pick_row_tile(rows, cols, _VMEM_LIMIT)
    out_flat = pl.pallas_call(
        _bn_res_relu_kernel,
        grid=(rows // TR,),
        in_specs=[
            pl.BlockSpec((TR, cols), lambda i: (i, 0)),
            pl.BlockSpec((TR, cols), lambda i: (i, 0)),
            pl.BlockSpec((1, cols), lambda i: (0, 0)),
            pl.BlockSpec((1, cols), lambda i: (0, 0)),
        ],
        out_specs=pl.BlockSpec((TR, cols), lambda i: (i, 0)),
        out_shape=jax.ShapeDtypeStruct((rows, cols), jnp.float32),
        input_output_aliases={1: 0},               # overwrite the residual buffer
        compiler_params=pltpu.CompilerParams(
            dimension_semantics=("parallel",),     # megacore-shardable
            vmem_limit_bytes=_VMEM_LIMIT,
        ),
    )(y_flat, x_res, scale_t, shift_t)

    # glue: back to NCHW
    return jnp.transpose(out_flat.reshape(N, H, W, C), (0, 3, 1, 2))


def small_block_reference(x, w, gamma, beta):
    """Pure-JAX reference of relu(bn2(conv(x)) + x).

    Matches the kernel's intentional TPU numerics: conv inputs rounded to bf16
    (f32 MXU accumulation), BN statistics taken from the f32 conv output, but
    the normalized tensor is the bf16-stored intermediate y; BN math and the
    residual add stay in f32.
    """
    xb = x.astype(jnp.bfloat16).astype(jnp.float32)
    wb = w.astype(jnp.bfloat16).astype(jnp.float32)
    y = jax.lax.conv_general_dilated(
        xb, wb, window_strides=(1, 1), padding="SAME",
        dimension_numbers=("NCHW", "OIHW", "NCHW"),
        precision=jax.lax.Precision.HIGHEST,
    )
    mean = jnp.mean(y, axis=(0, 2, 3), keepdims=True)
    var = jnp.mean((y - mean) ** 2, axis=(0, 2, 3), keepdims=True)
    y_q = y.astype(jnp.bfloat16).astype(jnp.float32)   # kernel stores y in bf16
    y_hat = (y_q - mean) * jax.lax.rsqrt(var + EPS)
    out = gamma[None, :, None, None] * y_hat + beta[None, :, None, None] + x
    return jnp.maximum(out, 0.0)


if __name__ == "__main__":
    N, C, H, W = 2, 4, 16, 16
    key = jax.random.PRNGKey(0)
    kx, kw, kg, kb = jax.random.split(key, 4)

    x = jax.random.normal(kx, (N, C, H, W), dtype=jnp.float32)
    w = jax.random.normal(kw, (C, C, 3, 3), dtype=jnp.float32) * 0.1
    gamma = 1.0 + 0.1 * jax.random.normal(kg, (C,), dtype=jnp.float32)
    beta = 0.1 * jax.random.normal(kb, (C,), dtype=jnp.float32)

    out = jax.block_until_ready(small_block_forward(x, w, gamma, beta))
    ref = small_block_reference(x, w, gamma, beta)

    assert out.shape == (N, C, H, W)
    max_err = float(jnp.max(jnp.abs(out - ref)))
    # atol covers the rare 1-ulp bf16 disagreement on the y intermediate between
    # the kernel's MXU accumulation order and the reference conv (amplified by
    # 1/sigma); everything else agrees to ~1e-5.
    assert jnp.allclose(out, ref, rtol=1e-3, atol=2e-2), f"max abs err {max_err}"
    print("KERNEL_OK")
</pallas_src>

<mosaic_0001>
module attributes {stable_mosaic.version = 11 : i64} {
  func.func @kernel(%arg0: i32, %arg1: i32, %arg2: memref<1x18x18x4xbf16, #tpu.memory_space<vmem>>, %arg3: memref<36x4xbf16, #tpu.memory_space<vmem>>, %arg4: memref<1x256x4xbf16, #tpu.memory_space<vmem>>, %arg5: memref<1x1x4xf32, #tpu.memory_space<vmem>>, %arg6: memref<1x1x4xf32, #tpu.memory_space<vmem>>) attributes {dimension_semantics = [#tpu.dimension_semantics<parallel>, #tpu.dimension_semantics<arbitrary>], iteration_bounds = array<i64: 2, 1>, scalar_prefetch = 0 : i64, scratch_operands = 0 : i64, tpu.core_type = #tpu.core_type<tc>, window_params = [{transform_indices = @transform_0, window_bounds = array<i64: 1, 18, 18, 4>}, {pipeline_mode = #tpu.pipeline_mode<synchronous>, transform_indices = @transform_1, window_bounds = array<i64: 36, 4>}, {transform_indices = @transform_2, window_bounds = array<i64: 1, 256, 4>}, {transform_indices = @transform_3, window_bounds = array<i64: 1, 1, 4>}, {transform_indices = @transform_4, window_bounds = array<i64: 1, 1, 4>}]} {
    %c0_i32 = arith.constant 0 : i32
    %0 = arith.cmpi eq, %arg1, %c0_i32 : i32
    %1 = arith.extui %0 : i1 to i32
    %c0_i32_0 = arith.constant 0 : i32
    %2 = arith.cmpi ne, %1, %c0_i32_0 : i32
    scf.if %2 {
      %cst_23 = arith.constant 0.000000e+00 : f32
      %43 = vector.broadcast %cst_23 : f32 to vector<1x1x4xf32>
      %c0_24 = arith.constant 0 : index
      %c0_25 = arith.constant 0 : index
      %c0_26 = arith.constant 0 : index
      %44 = vector.load %arg5[%c0_24, %c0_25, %c0_26] : memref<1x1x4xf32, #tpu.memory_space<vmem>>, vector<1x1x4xf32>
      tpu.vector_store %arg5[%c0_24, %c0_25, %c0_26], %43 {strides = array<i32>} : memref<1x1x4xf32, #tpu.memory_space<vmem>>, vector<1x1x4xf32>,
      %cst_27 = arith.constant 0.000000e+00 : f32
      %45 = vector.broadcast %cst_27 : f32 to vector<1x1x4xf32>
      %c0_28 = arith.constant 0 : index
      %c0_29 = arith.constant 0 : index
      %c0_30 = arith.constant 0 : index
      %46 = vector.load %arg6[%c0_28, %c0_29, %c0_30] : memref<1x1x4xf32, #tpu.memory_space<vmem>>, vector<1x1x4xf32>
      tpu.vector_store %arg6[%c0_28, %c0_29, %c0_30], %45 {strides = array<i32>} : memref<1x1x4xf32, #tpu.memory_space<vmem>>, vector<1x1x4xf32>,
    } else {
    }
    %c0 = arith.constant 0 : index
    %c0_1 = arith.constant 0 : index
    %c0_2 = arith.constant 0 : index
    %c0_3 = arith.constant 0 : index
    %3 = vector.load %arg2[%c0, %c0_1, %c0_2, %c0_3] : memref<1x18x18x4xbf16, #tpu.memory_space<vmem>>, vector<1x18x18x4xbf16>
    %4 = vector.shape_cast %3 : vector<1x18x18x4xbf16> to vector<18x18x4xbf16>
    %5 = vector.extract_strided_slice %4 {offsets = [0, 0, 0], sizes = [16, 16, 4], strides = [1, 1, 1]} : vector<18x18x4xbf16> to vector<16x16x4xbf16>
    %6 = vector.shape_cast %5 : vector<16x16x4xbf16> to vector<256x4xbf16>
    %7 = vector.extract_strided_slice %4 {offsets = [0, 1, 0], sizes = [16, 16, 4], strides = [1, 1, 1]} : vector<18x18x4xbf16> to vector<16x16x4xbf16>
    %8 = vector.shape_cast %7 : vector<16x16x4xbf16> to vector<256x4xbf16>
    %9 = vector.extract_strided_slice %4 {offsets = [0, 2, 0], sizes = [16, 16, 4], strides = [1, 1, 1]} : vector<18x18x4xbf16> to vector<16x16x4xbf16>
    %10 = vector.shape_cast %9 : vector<16x16x4xbf16> to vector<256x4xbf16>
    %11 = vector.extract_strided_slice %4 {offsets = [1, 0, 0], sizes = [16, 16, 4], strides = [1, 1, 1]} : vector<18x18x4xbf16> to vector<16x16x4xbf16>
    %12 = vector.shape_cast %11 : vector<16x16x4xbf16> to vector<256x4xbf16>
    %13 = vector.extract_strided_slice %4 {offsets = [1, 1, 0], sizes = [16, 16, 4], strides = [1, 1, 1]} : vector<18x18x4xbf16> to vector<16x16x4xbf16>
    %14 = vector.shape_cast %13 : vector<16x16x4xbf16> to vector<256x4xbf16>
    %15 = vector.extract_strided_slice %4 {offsets = [1, 2, 0], sizes = [16, 16, 4], strides = [1, 1, 1]} : vector<18x18x4xbf16> to vector<16x16x4xbf16>
    %16 = vector.shape_cast %15 : vector<16x16x4xbf16> to vector<256x4xbf16>
    %17 = vector.extract_strided_slice %4 {offsets = [2, 0, 0], sizes = [16, 16, 4], strides = [1, 1, 1]} : vector<18x18x4xbf16> to vector<16x16x4xbf16>
    %18 = vector.shape_cast %17 : vector<16x16x4xbf16> to vector<256x4xbf16>
    %19 = vector.extract_strided_slice %4 {offsets = [2, 1, 0], sizes = [16, 16, 4], strides = [1, 1, 1]} : vector<18x18x4xbf16> to vector<16x16x4xbf16>
    %20 = vector.shape_cast %19 : vector<16x16x4xbf16> to vector<256x4xbf16>
    %21 = vector.extract_strided_slice %4 {offsets = [2, 2, 0], sizes = [16, 16, 4], strides = [1, 1, 1]} : vector<18x18x4xbf16> to vector<16x16x4xbf16>
    %22 = vector.shape_cast %21 : vector<16x16x4xbf16> to vector<256x4xbf16>
    %23 = tpu.concatenate %6, %8, %10, %12, %14, %16, %18, %20, %22 in 1 : vector<256x4xbf16>, vector<256x4xbf16>, vector<256x4xbf16>, vector<256x4xbf16>, vector<256x4xbf16>, vector<256x4xbf16>, vector<256x4xbf16>, vector<256x4xbf16>, vector<256x4xbf16> -> vector<256x36xbf16>
    %c0_4 = arith.constant 0 : index
    %c0_5 = arith.constant 0 : index
    %24 = vector.load %arg3[%c0_4, %c0_5] : memref<36x4xbf16, #tpu.memory_space<vmem>>, vector<36x4xbf16>
    %cst = arith.constant dense<0.000000e+00> : vector<256x4xf32>
    %25 = tpu.matmul %23, %24, %cst {dimension_numbers = #tpu.dot_dimension_numbers<[1], [0], [0], [1], [0, 0, 1, 1], [], []>} : vector<256x36xbf16>, vector<36x4xbf16>, vector<256x4xf32> -> vector<256x4xf32>
    %26 = arith.truncf %25 : vector<256x4xf32> to vector<256x4xbf16>
    %c0_6 = arith.constant 0 : index
    %c0_7 = arith.constant 0 : index
    %c0_8 = arith.constant 0 : index
    %27 = vector.load %arg4[%c0_6, %c0_7, %c0_8] : memref<1x256x4xbf16, #tpu.memory_space<vmem>>, vector<1x256x4xbf16>
    %28 = vector.shape_cast %27 : vector<1x256x4xbf16> to vector<256x4xbf16>
    %29 = vector.shape_cast %26 : vector<256x4xbf16> to vector<1x256x4xbf16>
    tpu.vector_store %arg4[%c0_6, %c0_7, %c0_8], %29 {strides = array<i32>} : memref<1x256x4xbf16, #tpu.memory_space<vmem>>, vector<1x256x4xbf16>,
    %c0_9 = arith.constant 0 : index
    %c0_10 = arith.constant 0 : index
    %c0_11 = arith.constant 0 : index
    %30 = vector.load %arg5[%c0_9, %c0_10, %c0_11] : memref<1x1x4xf32, #tpu.memory_space<vmem>>, vector<1x1x4xf32>
    %cst_12 = arith.constant dense<0.000000e+00> : vector<4xf32>
    %31 = vector.multi_reduction <add>, %25, %cst_12 [0] : vector<256x4xf32> to vector<4xf32>
    %32 = vector.shape_cast %31 : vector<4xf32> to vector<1x4xf32>
    %33 = vector.shape_cast %32 : vector<1x4xf32> to vector<1x1x4xf32>
    %34 = arith.addf %30, %33 : vector<1x1x4xf32>
    %c0_13 = arith.constant 0 : index
    %c0_14 = arith.constant 0 : index
    %c0_15 = arith.constant 0 : index
    %35 = vector.load %arg5[%c0_13, %c0_14, %c0_15] : memref<1x1x4xf32, #tpu.memory_space<vmem>>, vector<1x1x4xf32>
    tpu.vector_store %arg5[%c0_13, %c0_14, %c0_15], %34 {strides = array<i32>} : memref<1x1x4xf32, #tpu.memory_space<vmem>>, vector<1x1x4xf32>,
    %c0_16 = arith.constant 0 : index
    %c0_17 = arith.constant 0 : index
    %c0_18 = arith.constant 0 : index
    %36 = vector.load %arg6[%c0_16, %c0_17, %c0_18] : memref<1x1x4xf32, #tpu.memory_space<vmem>>, vector<1x1x4xf32>
    %37 = arith.mulf %25, %25 : vector<256x4xf32>
    %cst_19 = arith.constant dense<0.000000e+00> : vector<4xf32>
    %38 = vector.multi_reduction <add>, %37, %cst_19 [0] : vector<256x4xf32> to vector<4xf32>
    %39 = vector.shape_cast %38 : vector<4xf32> to vector<1x4xf32>
    %40 = vector.shape_cast %39 : vector<1x4xf32> to vector<1x1x4xf32>
    %41 = arith.addf %36, %40 : vector<1x1x4xf32>
    %c0_20 = arith.constant 0 : index
    %c0_21 = arith.constant 0 : index
    %c0_22 = arith.constant 0 : index
    %42 = vector.load %arg6[%c0_20, %c0_21, %c0_22] : memref<1x1x4xf32, #tpu.memory_space<vmem>>, vector<1x1x4xf32>
    tpu.vector_store %arg6[%c0_20, %c0_21, %c0_22], %41 {strides = array<i32>} : memref<1x1x4xf32, #tpu.memory_space<vmem>>, vector<1x1x4xf32>,
    return
  }
  func.func @transform_0(%arg0: i32, %arg1: i32) -> (i32, i32, i32, i32) {
    %c1_i32 = arith.constant 1 : i32
    %0 = arith.muli %arg0, %c1_i32 : i32
    %1 = arith.addi %0, %arg1 : i32
    %c0_i32 = arith.constant 0 : i32
    %c0_i32_0 = arith.constant 0 : i32
    %c0_i32_1 = arith.constant 0 : i32
    %c0_i32_2 = arith.constant 0 : i32
    return %1, %c0_i32, %c0_i32_0, %c0_i32_1 : i32, i32, i32, i32
  }
  func.func @transform_1(%arg0: i32, %arg1: i32) -> (i32, i32) {
    %c0_i32 = arith.constant 0 : i32
    %c0_i32_0 = arith.constant 0 : i32
    %c0_i32_1 = arith.constant 0 : i32
    return %c0_i32, %c0_i32_0 : i32, i32
  }
  func.func @transform_2(%arg0: i32, %arg1: i32) -> (i32, i32, i32) {
    %c1_i32 = arith.constant 1 : i32
    %0 = arith.muli %arg0, %c1_i32 : i32
    %1 = arith.addi %0, %arg1 : i32
    %c0_i32 = arith.constant 0 : i32
    %c0_i32_0 = arith.constant 0 : i32
    %c0_i32_1 = arith.constant 0 : i32
    return %1, %c0_i32, %c0_i32_0 : i32, i32, i32
  }
  func.func @transform_3(%arg0: i32, %arg1: i32) -> (i32, i32, i32) {
    %c0_i32 = arith.constant 0 : i32
    %c0_i32_0 = arith.constant 0 : i32
    %c0_i32_1 = arith.constant 0 : i32
    return %arg0, %c0_i32, %c0_i32_0 : i32, i32, i32
  }
  func.func @transform_4(%arg0: i32, %arg1: i32) -> (i32, i32, i32) {
    %c0_i32 = arith.constant 0 : i32
    %c0_i32_0 = arith.constant 0 : i32
    %c0_i32_1 = arith.constant 0 : i32
    return %arg0, %c0_i32, %c0_i32_0 : i32, i32, i32
  }
}

module attributes {stable_mosaic.version = 11 : i64} {
  func.func @_bn_res_relu_kernel(%arg0: i32, %arg1: memref<2x1024xbf16, #tpu.memory_space<vmem>>, %arg2: memref<2x1024xf32, #tpu.memory_space<vmem>>, %arg3: memref<1x1024xf32, #tpu.memory_space<vmem>>, %arg4: memref<1x1024xf32, #tpu.memory_space<vmem>>, %arg5: memref<2x1024xf32, #tpu.memory_space<vmem>>) attributes {dimension_semantics = [#tpu.dimension_semantics<parallel>], iteration_bounds = array<i64: 1>, scalar_prefetch = 0 : i64, scratch_operands = 0 : i64, tpu.core_type = #tpu.core_type<tc>, window_params = [{transform_indices = @transform_0, window_bounds = array<i64: 2, 1024>}, {transform_indices = @transform_1, window_bounds = array<i64: 2, 1024>}, {pipeline_mode = #tpu.pipeline_mode<synchronous>, transform_indices = @transform_2, window_bounds = array<i64: 1, 1024>}, {pipeline_mode = #tpu.pipeline_mode<synchronous>, transform_indices = @transform_3, window_bounds = array<i64: 1, 1024>}, {transform_indices = @transform_4, window_bounds = array<i64: 2, 1024>}]} {
    %c0 = arith.constant 0 : index
    %c0_0 = arith.constant 0 : index
    %0 = vector.load %arg1[%c0, %c0_0] : memref<2x1024xbf16, #tpu.memory_space<vmem>>, vector<2x1024xbf16>
    %1 = arith.extf %0 : vector<2x1024xbf16> to vector<2x1024xf32>
    %c0_1 = arith.constant 0 : index
    %c0_2 = arith.constant 0 : index
    %2 = vector.load %arg3[%c0_1, %c0_2] : memref<1x1024xf32, #tpu.memory_space<vmem>>, vector<1x1024xf32>
    %3 = vector.broadcast %2 : vector<1x1024xf32> to vector<2x1024xf32>
    %4 = arith.mulf %1, %3 : vector<2x1024xf32>
    %c0_3 = arith.constant 0 : index
    %c0_4 = arith.constant 0 : index
    %5 = vector.load %arg4[%c0_3, %c0_4] : memref<1x1024xf32, #tpu.memory_space<vmem>>, vector<1x1024xf32>
    %6 = vector.broadcast %5 : vector<1x1024xf32> to vector<2x1024xf32>
    %7 = arith.addf %4, %6 : vector<2x1024xf32>
    %c0_5 = arith.constant 0 : index
    %c0_6 = arith.constant 0 : index
    %8 = vector.load %arg2[%c0_5, %c0_6] : memref<2x1024xf32, #tpu.memory_space<vmem>>, vector<2x1024xf32>
    %9 = arith.addf %7, %8 : vector<2x1024xf32>
    %cst = arith.constant 0.000000e+00 : f32
    %10 = vector.broadcast %cst : f32 to vector<2x1024xf32>
    %11 = arith.maximumf %9, %10 : vector<2x1024xf32>
    %c0_7 = arith.constant 0 : index
    %c0_8 = arith.constant 0 : index
    %12 = vector.load %arg5[%c0_7, %c0_8] : memref<2x1024xf32, #tpu.memory_space<vmem>>, vector<2x1024xf32>
    tpu.vector_store %arg5[%c0_7, %c0_8], %11 {strides = array<i32>} : memref<2x1024xf32, #tpu.memory_space<vmem>>, vector<2x1024xf32>,
    return
  }
  func.func @transform_0(%arg0: i32) -> (i32, i32) {
    %c0_i32 = arith.constant 0 : i32
    %c0_i32_0 = arith.constant 0 : i32
    return %arg0, %c0_i32 : i32, i32
  }
  func.func @transform_1(%arg0: i32) -> (i32, i32) {
    %c0_i32 = arith.constant 0 : i32
    %c0_i32_0 = arith.constant 0 : i32
    return %arg0, %c0_i32 : i32, i32
  }
  func.func @transform_2(%arg0: i32) -> (i32, i32) {
    %c0_i32 = arith.constant 0 : i32
    %c0_i32_0 = arith.constant 0 : i32
    %c0_i32_1 = arith.constant 0 : i32
    return %c0_i32, %c0_i32_0 : i32, i32
  }
  func.func @transform_3(%arg0: i32) -> (i32, i32) {
    %c0_i32 = arith.constant 0 : i32
    %c0_i32_0 = arith.constant 0 : i32
    %c0_i32_1 = arith.constant 0 : i32
    return %c0_i32, %c0_i32_0 : i32, i32
  }
  func.func @transform_4(%arg0: i32) -> (i32, i32) {
    %c0_i32 = arith.constant 0 : i32
    %c0_i32_0 = arith.constant 0 : i32
    return %arg0, %c0_i32 : i32, i32
  }
}

</mosaic_0001>

<llo_original>
// kernel: tile.18
$region0: #{tile.18}
  #allocation0 [shape = 's32[1]{0}', space=sflag, size = 0x4, scoped, tag = 'scoped memory for tile.18']
  %s0 = inlined_call_operand.vmem [shape: f32[4], index: 0, kind: input, shape index: {}]
  %s1 = inlined_call_operand.vmem [shape: f32[256,4], index: 1, kind: output, shape index: {}]
  // Predicated region
  $region2: #{tile.18} parent=0 // pred_check
    _
  $region3: #{tile.18} parent=0 // pred_check_branch
    %3 = sbr.rel (0) target = $region5
  $region4: #{tile.18} parent=0 // pred_region
    _
  $region5: #{tile.18} parent=0 // pred_fallthru
    _
  %v4 = vld [vmem:[%s0] ss:$0 sm:$0xff]
  %5 = vst [vmem:[%s1] sm:$0xff] %v4
  %s6 = scalar_lea.vmem %s1, 8
  %7 = vst [vmem:[%s6] sm:$0xff] %v4
  %s8 = scalar_lea.vmem %s1, 16
  %9 = vst [vmem:[%s8] sm:$0xff] %v4
  %s10 = scalar_lea.vmem %s1, 24
  %11 = vst [vmem:[%s10] sm:$0xff] %v4
  %s12 = scalar_lea.vmem %s1, 32
  %13 = vst [vmem:[%s12] sm:$0xff] %v4
  %s14 = scalar_lea.vmem %s1, 40
  %15 = vst [vmem:[%s14] sm:$0xff] %v4
  %s16 = scalar_lea.vmem %s1, 48
  %17 = vst [vmem:[%s16] sm:$0xff] %v4
  %s18 = scalar_lea.vmem %s1, 56
  %19 = vst [vmem:[%s18] sm:$0xff] %v4
  %s20 = scalar_lea.vmem %s1, 64
  %21 = vst [vmem:[%s20] sm:$0xff] %v4
  %s22 = scalar_lea.vmem %s1, 72
  %23 = vst [vmem:[%s22] sm:$0xff] %v4
  %s24 = scalar_lea.vmem %s1, 80
  %25 = vst [vmem:[%s24] sm:$0xff] %v4
  %s26 = scalar_lea.vmem %s1, 88
  %27 = vst [vmem:[%s26] sm:$0xff] %v4
  %s28 = scalar_lea.vmem %s1, 96
  %29 = vst [vmem:[%s28] sm:$0xff] %v4
  %s30 = scalar_lea.vmem %s1, 104
  %31 = vst [vmem:[%s30] sm:$0xff] %v4
  %s32 = scalar_lea.vmem %s1, 112
  %33 = vst [vmem:[%s32] sm:$0xff] %v4
  %s34 = scalar_lea.vmem %s1, 120
  %35 = vst [vmem:[%s34] sm:$0xff] %v4
  %s36 = scalar_lea.vmem %s1, 128
  %37 = vst [vmem:[%s36] sm:$0xff] %v4
  %s38 = scalar_lea.vmem %s1, 136
  %39 = vst [vmem:[%s38] sm:$0xff] %v4
  %s40 = scalar_lea.vmem %s1, 144
  %41 = vst [vmem:[%s40] sm:$0xff] %v4
  %s42 = scalar_lea.vmem %s1, 152
  %43 = vst [vmem:[%s42] sm:$0xff] %v4
  %s44 = scalar_lea.vmem %s1, 160
  %45 = vst [vmem:[%s44] sm:$0xff] %v4
  %s46 = scalar_lea.vmem %s1, 168
  %47 = vst [vmem:[%s46] sm:$0xff] %v4
  %s48 = scalar_lea.vmem %s1, 176
  %49 = vst [vmem:[%s48] sm:$0xff] %v4
  %s50 = scalar_lea.vmem %s1, 184
  %51 = vst [vmem:[%s50] sm:$0xff] %v4
  %s52 = scalar_lea.vmem %s1, 192
  %53 = vst [vmem:[%s52] sm:$0xff] %v4
  %s54 = scalar_lea.vmem %s1, 200
  %55 = vst [vmem:[%s54] sm:$0xff] %v4
  %s56 = scalar_lea.vmem %s1, 208
  %57 = vst [vmem:[%s56] sm:$0xff] %v4
  %s58 = scalar_lea.vmem %s1, 216
  %59 = vst [vmem:[%s58] sm:$0xff] %v4
  %s60 = scalar_lea.vmem %s1, 224
  %61 = vst [vmem:[%s60] sm:$0xff] %v4
  %s62 = scalar_lea.vmem %s1, 232
  %63 = vst [vmem:[%s62] sm:$0xff] %v4
  %s64 = scalar_lea.vmem %s1, 240
  %65 = vst [vmem:[%s64] sm:$0xff] %v4
  %s66 = scalar_lea.vmem %s1, 248
  %67 = vst [vmem:[%s66] sm:$0xff] %v4

// kernel: tile.19
$region0: #{tile.19}
  %s0 = inlined_call_operand.vmem [shape: f32[256,4], index: 0, kind: input, shape index: {}]
  %s1 = inlined_call_operand.vmem [shape: f32[1,1024], index: 1, kind: output, shape index: {}]
  $region1: #{tile.19} parent=0
    #allocation0 [shape = 'u8[32768]{0}', space=vmem, size = 0x8000, scoped, tag = 'scoped mem for output reshape']
    %v2 = vld [vmem:[%s0] sm:$0x1]
    %s3 = scalar_lea.vmem %s0, 31
    %v4 = vld [vmem:[%s3] sm:$0x2]
    %vm5 = vcmask 1041409
    %v6 = vsel %vm5, %v4, %v2
    %s7 = scalar_lea.vmem %s0, 62
    %v8 = vld [vmem:[%s7] sm:$0x4]
    %vm9 = vcmask 1042434
    %v10 = vsel %vm9, %v8, %v6
    %s11 = scalar_lea.vmem %s0, 93
    %v12 = vld [vmem:[%s11] sm:$0x8]
    %vm13 = vcmask 1043459
    %v14 = vsel %vm13, %v12, %v10
    %s15 = scalar_lea.vmem %s0, 124
    %v16 = vld [vmem:[%s15] sm:$0x10]
    %vm17 = vcmask 1044484
    %v18 = vsel %vm17, %v16, %v14
    %s19 = scalar_lea.vmem %s0, 155
    %v20 = vld [vmem:[%s19] sm:$0x20]
    %vm21 = vcmask 1045509
    %v22 = vsel %vm21, %v20, %v18
    %s23 = scalar_lea.vmem %s0, 186
    %v24 = vld [vmem:[%s23] sm:$0x40]
    %vm25 = vcmask 1046534
    %v26 = vsel %vm25, %v24, %v22
    %s27 = scalar_lea.vmem %s0, 217
    %v28 = vld [vmem:[%s27] sm:$0x80]
    %vm29 = vcmask 1047559
    %v30 = vsel %vm29, %v28, %v26
    %vm31 = vcmask 31744
    %32 = vst.msk [vmem:[#allocation0] ss:$8 sm:$0xf] %vm31, %v30
    %33 = vst.msk [vmem:[#allocation0] ss:$8 sm:$0xf0] %vm31, %v30
    %s34 = scalar_lea.vmem %s0, 31
    %v35 = vld [vmem:[%s34] sm:$0x1]
    %s36 = scalar_lea.vmem %s0, 62
    %v37 = vld [vmem:[%s36] sm:$0x2]
    %vm38 = vcmask 1041409
    %v39 = vsel %vm38, %v37, %v35
    %s40 = scalar_lea.vmem %s0, 93
    %v41 = vld [vmem:[%s40] sm:$0x4]
    %vm42 = vcmask 1042434
    %v43 = vsel %vm42, %v41, %v39
    %s44 = scalar_lea.vmem %s0, 124
    %v45 = vld [vmem:[%s44] sm:$0x8]
    %vm46 = vcmask 1043459
    %v47 = vsel %vm46, %v45, %v43
    %s48 = scalar_lea.vmem %s0, 155
    %v49 = vld [vmem:[%s48] sm:$0x10]
    %vm50 = vcmask 1044484
    %v51 = vsel %vm50, %v49, %v47
    %s52 = scalar_lea.vmem %s0, 186
    %v53 = vld [vmem:[%s52] sm:$0x20]
    %vm54 = vcmask 1045509
    %v55 = vsel %vm54, %v53, %v51
    %s56 = scalar_lea.vmem %s0, 217
    %v57 = vld [vmem:[%s56] sm:$0x40]
    %vm58 = vcmask 1046534
    %v59 = vsel %vm58, %v57, %v55
    %s60 = scalar_lea.vmem %s0, 248
    %v61 = vld [vmem:[%s60] sm:$0x80]
    %vm62 = vcmask 1047559
    %v63 = vsel %vm62, %v61, %v59
    %64 = vrot.lane.b32.xlu0 %v63, 124
    %v65 = vpop.permute.xlu0 %64
    %vm66 = vcmask 1048544
    %67 = vst.msk [vmem:[#allocation0] ss:$8 sm:$0xf] %vm66, %v65
    %68 = vst.msk [vmem:[#allocation0] ss:$8 sm:$0xf0] %vm66, %v65
    %s69 = scalar_lea.vmem %s0, 30
    %v70 = vld [vmem:[%s69] sm:$0x1]
    %s71 = scalar_lea.vmem %s0, 61
    %v72 = vld [vmem:[%s71] sm:$0x2]
    %vm73 = vcmask 1041409
    %v74 = vsel %vm73, %v72, %v70
    %s75 = scalar_lea.vmem %s0, 92
    %v76 = vld [vmem:[%s75] sm:$0x4]
    %vm77 = vcmask 1042434
    %v78 = vsel %vm77, %v76, %v74
    %s79 = scalar_lea.vmem %s0, 123
    %v80 = vld [vmem:[%s79] sm:$0x8]
    %vm81 = vcmask 1043459
    %v82 = vsel %vm81, %v80, %v78
    %s83 = scalar_lea.vmem %s0, 154
    %v84 = vld [vmem:[%s83] sm:$0x10]
    %vm85 = vcmask 1044484
    %v86 = vsel %vm85, %v84, %v82
    %s87 = scalar_lea.vmem %s0, 185
    %v88 = vld [vmem:[%s87] sm:$0x20]
    %vm89 = vcmask 1045509
    %v90 = vsel %vm89, %v88, %v86
    %s91 = scalar_lea.vmem %s0, 216
    %v92 = vld [vmem:[%s91] sm:$0x40]
    %vm93 = vcmask 1046534
    %v94 = vsel %vm93, %v92, %v90
    %s95 = scalar_lea.vmem %s0, 247
    %v96 = vld [vmem:[%s95] sm:$0x80]
    %vm97 = vcmask 1047559
    %v98 = vsel %vm97, %v96, %v94
    %99 = vrot.lane.b32.xlu0 %v98, 120
    %v100 = vpop.permute.xlu0 %99
    %vm101 = vcmask 1015744
    %102 = vst.msk [vmem:[#allocation0] ss:$8 sm:$0xf] %vm101, %v100
    %103 = vst.msk [vmem:[#allocation0] ss:$8 sm:$0xf0] %vm101, %v100
    %s104 = scalar_lea.vmem %s0, 29
    %v105 = vld [vmem:[%s104] sm:$0x1]
    %s106 = scalar_lea.vmem %s0, 60
    %v107 = vld [vmem:[%s106] sm:$0x2]
    %vm108 = vcmask 1041409
    %v109 = vsel %vm108, %v107, %v105
    %s110 = scalar_lea.vmem %s0, 91
    %v111 = vld [vmem:[%s110] sm:$0x4]
    %vm112 = vcmask 1042434
    %v113 = vsel %vm112, %v111, %v109
    %s114 = scalar_lea.vmem %s0, 122
    %v115 = vld [vmem:[%s114] sm:$0x8]
    %vm116 = vcmask 1043459
    %v117 = vsel %vm116, %v115, %v113
    %s118 = scalar_lea.vmem %s0, 153
    %v119 = vld [vmem:[%s118] sm:$0x10]
    %vm120 = vcmask 1044484
    %v121 = vsel %vm120, %v119, %v117
    %s122 = scalar_lea.vmem %s0, 184
    %v123 = vld [vmem:[%s122] sm:$0x20]
    %vm124 = vcmask 1045509
    %v125 = vsel %vm124, %v123, %v121
    %s126 = scalar_lea.vmem %s0, 215
    %v127 = vld [vmem:[%s126] sm:$0x40]
    %vm128 = vcmask 1046534
    %v129 = vsel %vm128, %v127, %v125
    %s130 = scalar_lea.vmem %s0, 246
    %v131 = vld [vmem:[%s130] sm:$0x80]
    %vm132 = vcmask 1047559
    %v133 = vsel %vm132, %v131, %v129
    %134 = vrot.lane.b32.xlu0 %v133, 116
    %v135 = vpop.permute.xlu0 %134
    %vm136 = vcmask 982944
    %137 = vst.msk [vmem:[#allocation0] ss:$8 sm:$0xf] %vm136, %v135
    %138 = vst.msk [vmem:[#allocation0] ss:$8 sm:$0xf0] %vm136, %v135
    %s139 = scalar_lea.vmem %s0, 28
    %v140 = vld [vmem:[%s139] sm:$0x1]
    %s141 = scalar_lea.vmem %s0, 59
    %v142 = vld [vmem:[%s141] sm:$0x2]
    %vm143 = vcmask 1041409
    %v144 = vsel %vm143, %v142, %v140
    %s145 = scalar_lea.vmem %s0, 90
    %v146 = vld [vmem:[%s145] sm:$0x4]
    %vm147 = vcmask 1042434
    %v148 = vsel %vm147, %v146, %v144
    %s149 = scalar_lea.vmem %s0, 121
    %v150 = vld [vmem:[%s149] sm:$0x8]
    %vm151 = vcmask 1043459
    %v152 = vsel %vm151, %v150, %v148
    %s153 = scalar_lea.vmem %s0, 152
    %v154 = vld [vmem:[%s153] sm:$0x10]
    %vm155 = vcmask 1044484
    %v156 = vsel %vm155, %v154, %v152
    %s157 = scalar_lea.vmem %s0, 183
    %v158 = vld [vmem:[%s157] sm:$0x20]
    %vm159 = vcmask 1045509
    %v160 = vsel %vm159, %v158, %v156
    %s161 = scalar_lea.vmem %s0, 214
    %v162 = vld [vmem:[%s161] sm:$0x40]
    %vm163 = vcmask 1046534
    %v164 = vsel %vm163, %v162, %v160
    %s165 = scalar_lea.vmem %s0, 245
    %v166 = vld [vmem:[%s165] sm:$0x80]
    %vm167 = vcmask 1047559
    %v168 = vsel %vm167, %v166, %v164
    %169 = vrot.lane.b32.xlu0 %v168, 112
    %v170 = vpop.permute.xlu0 %169
    %vm171 = vcmask 950144
    %172 = vst.msk [vmem:[#allocation0] ss:$8 sm:$0xf] %vm171, %v170
    %173 = vst.msk [vmem:[#allocation0] ss:$8 sm:$0xf0] %vm171, %v170
    %s174 = scalar_lea.vmem %s0, 27
    %v175 = vld [vmem:[%s174] sm:$0x1]
    %s176 = scalar_lea.vmem %s0, 58
    %v177 = vld [vmem:[%s176] sm:$0x2]
    %vm178 = vcmask 1041409
    %v179 = vsel %vm178, %v177, %v175
    %s180 = scalar_lea.vmem %s0, 89
    %v181 = vld [vmem:[%s180] sm:$0x4]
    %vm182 = vcmask 1042434
    %v183 = vsel %vm182, %v181, %v179
    %s184 = scalar_lea.vmem %s0, 120
    %v185 = vld [vmem:[%s184] sm:$0x8]
    %vm186 = vcmask 1043459
    %v187 = vsel %vm186, %v185, %v183
    %s188 = scalar_lea.vmem %s0, 151
    %v189 = vld [vmem:[%s188] sm:$0x10]
    %vm190 = vcmask 1044484
    %v191 = vsel %vm190, %v189, %v187
    %s192 = scalar_lea.vmem %s0, 182
    %v193 = vld [vmem:[%s192] sm:$0x20]
    %vm194 = vcmask 1045509
    %v195 = vsel %vm194, %v193, %v191
    %s196 = scalar_lea.vmem %s0, 213
    %v197 = vld [vmem:[%s196] sm:$0x40]
    %vm198 = vcmask 1046534
    %v199 = vsel %vm198, %v197, %v195
    %s200 = scalar_lea.vmem %s0, 244
    %v201 = vld [vmem:[%s200] sm:$0x80]
    %vm202 = vcmask 1047559
    %v203 = vsel %vm202, %v201, %v199
    %204 = vrot.lane.b32.xlu0 %v203, 108
    %v205 = vpop.permute.xlu0 %204
    %vm206 = vcmask 917344
    %207 = vst.msk [vmem:[#allocation0] ss:$8 sm:$0xf] %vm206, %v205
    %208 = vst.msk [vmem:[#allocation0] ss:$8 sm:$0xf0] %vm206, %v205
    %s209 = scalar_lea.vmem %s0, 26
    %v210 = vld [vmem:[%s209] sm:$0x1]
    %s211 = scalar_lea.vmem %s0, 57
    %v212 = vld [vmem:[%s211] sm:$0x2]
    %vm213 = vcmask 1041409
    %v214 = vsel %vm213, %v212, %v210
    %s215 = scalar_lea.vmem %s0, 88
    %v216 = vld [vmem:[%s215] sm:$0x4]
    %vm217 = vcmask 1042434
    %v218 = vsel %vm217, %v216, %v214
    %s219 = scalar_lea.vmem %s0, 119
    %v220 = vld [vmem:[%s219] sm:$0x8]
    %vm221 = vcmask 1043459
    %v222 = vsel %vm221, %v220, %v218
    %s223 = scalar_lea.vmem %s0, 150
    %v224 = vld [vmem:[%s223] sm:$0x10]
    %vm225 = vcmask 1044484
    %v226 = vsel %vm225, %v224, %v222
    %s227 = scalar_lea.vmem %s0, 181
    %v228 = vld [vmem:[%s227] sm:$0x20]
    %vm229 = vcmask 1045509
    %v230 = vsel %vm229, %v228, %v226
    %s231 = scalar_lea.vmem %s0, 212
    %v232 = vld [vmem:[%s231] sm:$0x40]
    %vm233 = vcmask 1046534
    %v234 = vsel %vm233, %v232, %v230
    %s235 = scalar_lea.vmem %s0, 243
    %v236 = vld [vmem:[%s235] sm:$0x80]
    %vm237 = vcmask 1047559
    %v238 = vsel %vm237, %v236, %v234
    %239 = vrot.lane.b32.xlu0 %v238, 104
    %v240 = vpop.permute.xlu0 %239
    %vm241 = vcmask 884544
    %242 = vst.msk [vmem:[#allocation0] ss:$8 sm:$0xf] %vm241, %v240
    %243 = vst.msk [vmem:[#allocation0] ss:$8 sm:$0xf0] %vm241, %v240
    %s244 = scalar_lea.vmem %s0, 25
    %v245 = vld [vmem:[%s244] sm:$0x1]
    %s246 = scalar_lea.vmem %s0, 56
    %v247 = vld [vmem:[%s246] sm:$0x2]
    %vm248 = vcmask 1041409
    %v249 = vsel %vm248, %v247, %v245
    %s250 = scalar_lea.vmem %s0, 87
    %v251 = vld [vmem:[%s250] sm:$0x4]
    %vm252 = vcmask 1042434
    %v253 = vsel %vm252, %v251, %v249
    %s254 = scalar_lea.vmem %s0, 118
    %v255 = vld [vmem:[%s254] sm:$0x8]
    %vm256 = vcmask 1043459
    %v257 = vsel %vm256, %v255, %v253
    %s258 = scalar_lea.vmem %s0, 149
    %v259 = vld [vmem:[%s258] sm:$0x10]
    %vm260 = vcmask 1044484
    %v261 = vsel %vm260, %v259, %v257
    %s262 = scalar_lea.vmem %s0, 180
    %v263 = vld [vmem:[%s262] sm:$0x20]
    %vm264 = vcmask 1045509
    %v265 = vsel %vm264, %v263, %v261
    %s266 = scalar_lea.vmem %s0, 211
    %v267 = vld [vmem:[%s266] sm:$0x40]
    %vm268 = vcmask 1046534
    %v269 = vsel %vm268, %v267, %v265
    %s270 = scalar_lea.vmem %s0, 242
    %v271 = vld [vmem:[%s270] sm:$0x80]
    %vm272 = vcmask 1047559
    %v273 = vsel %vm272, %v271, %v269
    %274 = vrot.lane.b32.xlu0 %v273, 100
    %v275 = vpop.permute.xlu0 %274
    %vm276 = vcmask 851744
    %277 = vst.msk [vmem:[#allocation0] ss:$8 sm:$0xf] %vm276, %v275
    %278 = vst.msk [vmem:[#allocation0] ss:$8 sm:$0xf0] %vm276, %v275
    %s279 = scalar_lea.vmem %s0, 24
    %v280 = vld [vmem:[%s279] sm:$0x1]
    %s281 = scalar_lea.vmem %s0, 55
    %v282 = vld [vmem:[%s281] sm:$0x2]
    %vm283 = vcmask 1041409
    %v284 = vsel %vm283, %v282, %v280
    %s285 = scalar_lea.vmem %s0, 86
    %v286 = vld [vmem:[%s285] sm:$0x4]
    %vm287 = vcmask 1042434
    %v288 = vsel %vm287, %v286, %v284
    %s289 = scalar_lea.vmem %s0, 117
    %v290 = vld [vmem:[%s289] sm:$0x8]
    %vm291 = vcmask 1043459
    %v292 = vsel %vm291, %v290, %v288
    %s293 = scalar_lea.vmem %s0, 148
    %v294 = vld [vmem:[%s293] sm:$0x10]
    %vm295 = vcmask 1044484
    %v296 = vsel %vm295, %v294, %v292
    %s297 = scalar_lea.vmem %s0, 179
    %v298 = vld [vmem:[%s297] sm:$0x20]
    %vm299 = vcmask 1045509
    %v300 = vsel %vm299, %v298, %v296
    %s301 = scalar_lea.vmem %s0, 210
    %v302 = vld [vmem:[%s301] sm:$0x40]
    %vm303 = vcmask 1046534
    %v304 = vsel %vm303, %v302, %v300
    %s305 = scalar_lea.vmem %s0, 241
    %v306 = vld [vmem:[%s305] sm:$0x80]
    %vm307 = vcmask 1047559
    %v308 = vsel %vm307, %v306, %v304
    %309 = vrot.lane.b32.xlu0 %v308, 96
    %v310 = vpop.permute.xlu0 %309
    %vm311 = vcmask 818944
    %312 = vst.msk [vmem:[#allocation0] ss:$8 sm:$0xf] %vm311, %v310
    %313 = vst.msk [vmem:[#allocation0] ss:$8 sm:$0xf0] %vm311, %v310
    %s314 = scalar_lea.vmem %s0, 23
    %v315 = vld [vmem:[%s314] sm:$0x1]
    %s316 = scalar_lea.vmem %s0, 54
    %v317 = vld [vmem:[%s316] sm:$0x2]
    %vm318 = vcmask 1041409
    %v319 = vsel %vm318, %v317, %v315
    %s320 = scalar_lea.vmem %s0, 85
    %v321 = vld [vmem:[%s320] sm:$0x4]
    %vm322 = vcmask 1042434
    %v323 = vsel %vm322, %v321, %v319
    %s324 = scalar_lea.vmem %s0, 116
    %v325 = vld [vmem:[%s324] sm:$0x8]
    %vm326 = vcmask 1043459
    %v327 = vsel %vm326, %v325, %v323
    %s328 = scalar_lea.vmem %s0, 147
    %v329 = vld [vmem:[%s328] sm:$0x10]
    %vm330 = vcmask 1044484
    %v331 = vsel %vm330, %v329, %v327
    %s332 = scalar_lea.vmem %s0, 178
    %v333 = vld [vmem:[%s332] sm:$0x20]
    %vm334 = vcmask 1045509
    %v335 = vsel %vm334, %v333, %v331
    %s336 = scalar_lea.vmem %s0, 209
    %v337 = vld [vmem:[%s336] sm:$0x40]
    %vm338 = vcmask 1046534
    %v339 = vsel %vm338, %v337, %v335
    %s340 = scalar_lea.vmem %s0, 240
    %v341 = vld [vmem:[%s340] sm:$0x80]
    %vm342 = vcmask 1047559
    %v343 = vsel %vm342, %v341, %v339
    %344 = vrot.lane.b32.xlu0 %v343, 92
    %v345 = vpop.permute.xlu0 %344
    %vm346 = vcmask 786144
    %347 = vst.msk [vmem:[#allocation0] ss:$8 sm:$0xf] %vm346, %v345
    %348 = vst.msk [vmem:[#allocation0] ss:$8 sm:$0xf0] %vm346, %v345
    %s349 = scalar_lea.vmem %s0, 22
    %v350 = vld [vmem:[%s349] sm:$0x1]
    %s351 = scalar_lea.vmem %s0, 53
    %v352 = vld [vmem:[%s351] sm:$0x2]
    %vm353 = vcmask 1041409
    %v354 = vsel %vm353, %v352, %v350
    %s355 = scalar_lea.vmem %s0, 84
    %v356 = vld [vmem:[%s355] sm:$0x4]
    %vm357 = vcmask 1042434
    %v358 = vsel %vm357, %v356, %v354
    %s359 = scalar_lea.vmem %s0, 115
    %v360 = vld [vmem:[%s359] sm:$0x8]
    %vm361 = vcmask 1043459
    %v362 = vsel %vm361, %v360, %v358
    %s363 = scalar_lea.vmem %s0, 146
    %v364 = vld [vmem:[%s363] sm:$0x10]
    %vm365 = vcmask 1044484
    %v366 = vsel %vm365, %v364, %v362
    %s367 = scalar_lea.vmem %s0, 177
    %v368 = vld [vmem:[%s367] sm:$0x20]
    %vm369 = vcmask 1045509
    %v370 = vsel %vm369, %v368, %v366
    %s371 = scalar_lea.vmem %s0, 208
    %v372 = vld [vmem:[%s371] sm:$0x40]
    %vm373 = vcmask 1046534
    %v374 = vsel %vm373, %v372, %v370
    %s375 = scalar_lea.vmem %s0, 239
    %v376 = vld [vmem:[%s375] sm:$0x80]
    %vm377 = vcmask 1047559
    %v378 = vsel %vm377, %v376, %v374
    %379 = vrot.lane.b32.xlu0 %v378, 88
    %v380 = vpop.permute.xlu0 %379
    %vm381 = vcmask 753344
    %382 = vst.msk [vmem:[#allocation0] ss:$8 sm:$0xf] %vm381, %v380
    %383 = vst.msk [vmem:[#allocation0] ss:$8 sm:$0xf0] %vm381, %v380
    %s384 = scalar_lea.vmem %s0, 21
    %v385 = vld [vmem:[%s384] sm:$0x1]
    %s386 = scalar_lea.vmem %s0, 52
    %v387 = vld [vmem:[%s386] sm:$0x2]
    %vm388 = vcmask 1041409
    %v389 = vsel %vm388, %v387, %v385
    %s390 = scalar_lea.vmem %s0, 83
    %v391 = vld [vmem:[%s390] sm:$0x4]
    %vm392 = vcmask 1042434
    %v393 = vsel %vm392, %v391, %v389
    %s394 = scalar_lea.vmem %s0, 114
    %v395 = vld [vmem:[%s394] sm:$0x8]
    %vm396 = vcmask 1043459
    %v397 = vsel %vm396, %v395, %v393
    %s398 = scalar_lea.vmem %s0, 145
    %v399 = vld [vmem:[%s398] sm:$0x10]
    %vm400 = vcmask 1044484
    %v401 = vsel %vm400, %v399, %v397
    %s402 = scalar_lea.vmem %s0, 176
    %v403 = vld [vmem:[%s402] sm:$0x20]
    %vm404 = vcmask 1045509
    %v405 = vsel %vm404, %v403, %v401
    %s406 = scalar_lea.vmem %s0, 207
    %v407 = vld [vmem:[%s406] sm:$0x40]
    %vm408 = vcmask 1046534
    %v409 = vsel %vm408, %v407, %v405
    %s410 = scalar_lea.vmem %s0, 238
    %v411 = vld [vmem:[%s410] sm:$0x80]
    %vm412 = vcmask 1047559
    %v413 = vsel %vm412, %v411, %v409
    %414 = vrot.lane.b32.xlu0 %v413, 84
    %v415 = vpop.permute.xlu0 %414
    %vm416 = vcmask 720544
    %417 = vst.msk [vmem:[#allocation0] ss:$8 sm:$0xf] %vm416, %v415
    %418 = vst.msk [vmem:[#allocation0] ss:$8 sm:$0xf0] %vm416, %v415
    %s419 = scalar_lea.vmem %s0, 20
    %v420 = vld [vmem:[%s419] sm:$0x1]
    %s421 = scalar_lea.vmem %s0, 51
    %v422 = vld [vmem:[%s421] sm:$0x2]
    %vm423 = vcmask 1041409
    %v424 = vsel %vm423, %v422, %v420
    %s425 = scalar_lea.vmem %s0, 82
    %v426 = vld [vmem:[%s425] sm:$0x4]
    %vm427 = vcmask 1042434
    %v428 = vsel %vm427, %v426, %v424
    %s429 = scalar_lea.vmem %s0, 113
    %v430 = vld [vmem:[%s429] sm:$0x8]
    %vm431 = vcmask 1043459
    %v432 = vsel %vm431, %v430, %v428
    %s433 = scalar_lea.vmem %s0, 144
    %v434 = vld [vmem:[%s433] sm:$0x10]
    %vm435 = vcmask 1044484
    %v436 = vsel %vm435, %v434, %v432
    %s437 = scalar_lea.vmem %s0, 175
    %v438 = vld [vmem:[%s437] sm:$0x20]
    %vm439 = vcmask 1045509
    %v440 = vsel %vm439, %v438, %v436
    %s441 = scalar_lea.vmem %s0, 206
    %v442 = vld [vmem:[%s441] sm:$0x40]
    %vm443 = vcmask 1046534
    %v444 = vsel %vm443, %v442, %v440
    %s445 = scalar_lea.vmem %s0, 237
    %v446 = vld [vmem:[%s445] sm:$0x80]
    %vm447 = vcmask 1047559
    %v448 = vsel %vm447, %v446, %v444
    %449 = vrot.lane.b32.xlu0 %v448, 80
    %v450 = vpop.permute.xlu0 %449
    %vm451 = vcmask 687744
    %452 = vst.msk [vmem:[#allocation0] ss:$8 sm:$0xf] %vm451, %v450
    %453 = vst.msk [vmem:[#allocation0] ss:$8 sm:$0xf0] %vm451, %v450
    %s454 = scalar_lea.vmem %s0, 19
    %v455 = vld [vmem:[%s454] sm:$0x1]
    %s456 = scalar_lea.vmem %s0, 50
    %v457 = vld [vmem:[%s456] sm:$0x2]
    %vm458 = vcmask 1041409
    %v459 = vsel %vm458, %v457, %v455
    %s460 = scalar_lea.vmem %s0, 81
    %v461 = vld [vmem:[%s460] sm:$0x4]
    %vm462 = vcmask 1042434
    %v463 = vsel %vm462, %v461, %v459
    %s464 = scalar_lea.vmem %s0, 112
    %v465 = vld [vmem:[%s464] sm:$0x8]
    %vm466 = vcmask 1043459
    %v467 = vsel %vm466, %v465, %v463
    %s468 = scalar_lea.vmem %s0, 143
    %v469 = vld [vmem:[%s468] sm:$0x10]
    %vm470 = vcmask 1044484
    %v471 = vsel %vm470, %v469, %v467
    %s472 = scalar_lea.vmem %s0, 174
    %v473 = vld [vmem:[%s472] sm:$0x20]
    %vm474 = vcmask 1045509
    %v475 = vsel %vm474, %v473, %v471
    %s476 = scalar_lea.vmem %s0, 205
    %v477 = vld [vmem:[%s476] sm:$0x40]
    %vm478 = vcmask 1046534
    %v479 = vsel %vm478, %v477, %v475
    %s480 = scalar_lea.vmem %s0, 236
    %v481 = vld [vmem:[%s480] sm:$0x80]
    %vm482 = vcmask 1047559
    %v483 = vsel %vm482, %v481, %v479
    %484 = vrot.lane.b32.xlu0 %v483, 76
    %v485 = vpop.permute.xlu0 %484
    %vm486 = vcmask 654944
    %487 = vst.msk [vmem:[#allocation0] ss:$8 sm:$0xf] %vm486, %v485
    %488 = vst.msk [vmem:[#allocation0] ss:$8 sm:$0xf0] %vm486, %v485
    %s489 = scalar_lea.vmem %s0, 18
    %v490 = vld [vmem:[%s489] sm:$0x1]
    %s491 = scalar_lea.vmem %s0, 49
    %v492 = vld [vmem:[%s491] sm:$0x2]
    %vm493 = vcmask 1041409
    %v494 = vsel %vm493, %v492, %v490
    %s495 = scalar_lea.vmem %s0, 80
    %v496 = vld [vmem:[%s495] sm:$0x4]
    %vm497 = vcmask 1042434
    %v498 = vsel %vm497, %v496, %v494
    %s499 = scalar_lea.vmem %s0, 111
    %v500 = vld [vmem:[%s499] sm:$0x8]
    %vm501 = vcmask 1043459
    %v502 = vsel %vm501, %v500, %v498
    %s503 = scalar_lea.vmem %s0, 142
    %v504 = vld [vmem:[%s503] sm:$0x10]
    %vm505 = vcmask 1044484
    %v506 = vsel %vm505, %v504, %v502
    %s507 = scalar_lea.vmem %s0, 173
    %v508 = vld [vmem:[%s507] sm:$0x20]
    %vm509 = vcmask 1045509
    %v510 = vsel %vm509, %v508, %v506
    %s511 = scalar_lea.vmem %s0, 204
    %v512 = vld [vmem:[%s511] sm:$0x40]
    %vm513 = vcmask 1046534
    %v514 = vsel %vm513, %v512, %v510
    %s515 = scalar_lea.vmem %s0, 235
    %v516 = vld [vmem:[%s515] sm:$0x80]
    %vm517 = vcmask 1047559
    %v518 = vsel %vm517, %v516, %v514
    %519 = vrot.lane.b32.xlu0 %v518, 72
    %v520 = vpop.permute.xlu0 %519
    %vm521 = vcmask 622144
    %522 = vst.msk [vmem:[#allocation0] ss:$8 sm:$0xf] %vm521, %v520
    %523 = vst.msk [vmem:[#allocation0] ss:$8 sm:$0xf0] %vm521, %v520
    %s524 = scalar_lea.vmem %s0, 17
    %v525 = vld [vmem:[%s524] sm:$0x1]
    %s526 = scalar_lea.vmem %s0, 48
    %v527 = vld [vmem:[%s526] sm:$0x2]
    %vm528 = vcmask 1041409
    %v529 = vsel %vm528, %v527, %v525
    %s530 = scalar_lea.vmem %s0, 79
    %v531 = vld [vmem:[%s530] sm:$0x4]
    %vm532 = vcmask 1042434
    %v533 = vsel %vm532, %v531, %v529
    %s534 = scalar_lea.vmem %s0, 110
    %v535 = vld [vmem:[%s534] sm:$0x8]
    %vm536 = vcmask 1043459
    %v537 = vsel %vm536, %v535, %v533
    %s538 = scalar_lea.vmem %s0, 141
    %v539 = vld [vmem:[%s538] sm:$0x10]
    %vm540 = vcmask 1044484
    %v541 = vsel %vm540, %v539, %v537
    %s542 = scalar_lea.vmem %s0, 172
    %v543 = vld [vmem:[%s542] sm:$0x20]
    %vm544 = vcmask 1045509
    %v545 = vsel %vm544, %v543, %v541
    %s546 = scalar_lea.vmem %s0, 203
    %v547 = vld [vmem:[%s546] sm:$0x40]
    %vm548 = vcmask 1046534
    %v549 = vsel %vm548, %v547, %v545
    %s550 = scalar_lea.vmem %s0, 234
    %v551 = vld [vmem:[%s550] sm:$0x80]
    %vm552 = vcmask 1047559
    %v553 = vsel %vm552, %v551, %v549
    %554 = vrot.lane.b32.xlu0 %v553, 68
    %v555 = vpop.permute.xlu0 %554
    %vm556 = vcmask 589344
    %557 = vst.msk [vmem:[#allocation0] ss:$8 sm:$0xf] %vm556, %v555
    %558 = vst.msk [vmem:[#allocation0] ss:$8 sm:$0xf0] %vm556, %v555
    %s559 = scalar_lea.vmem %s0, 16
    %v560 = vld [vmem:[%s559] sm:$0x1]
    %s561 = scalar_lea.vmem %s0, 47
    %v562 = vld [vmem:[%s561] sm:$0x2]
    %vm563 = vcmask 1041409
    %v564 = vsel %vm563, %v562, %v560
    %s565 = scalar_lea.vmem %s0, 78
    %v566 = vld [vmem:[%s565] sm:$0x4]
    %vm567 = vcmask 1042434
    %v568 = vsel %vm567, %v566, %v564
    %s569 = scalar_lea.vmem %s0, 109
    %v570 = vld [vmem:[%s569] sm:$0x8]
    %vm571 = vcmask 1043459
    %v572 = vsel %vm571, %v570, %v568
    %s573 = scalar_lea.vmem %s0, 140
    %v574 = vld [vmem:[%s573] sm:$0x10]
    %vm575 = vcmask 1044484
    %v576 = vsel %vm575, %v574, %v572
    %s577 = scalar_lea.vmem %s0, 171
    %v578 = vld [vmem:[%s577] sm:$0x20]
    %vm579 = vcmask 1045509
    %v580 = vsel %vm579, %v578, %v576
    %s581 = scalar_lea.vmem %s0, 202
    %v582 = vld [vmem:[%s581] sm:$0x40]
    %vm583 = vcmask 1046534
    %v584 = vsel %vm583, %v582, %v580
    %s585 = scalar_lea.vmem %s0, 233
    %v586 = vld [vmem:[%s585] sm:$0x80]
    %vm587 = vcmask 1047559
    %v588 = vsel %vm587, %v586, %v584
    %589 = vrot.lane.b32.xlu0 %v588, 64
    %v590 = vpop.permute.xlu0 %589
    %vm591 = vcmask 556544
    %592 = vst.msk [vmem:[#allocation0] ss:$8 sm:$0xf] %vm591, %v590
    %593 = vst.msk [vmem:[#allocation0] ss:$8 sm:$0xf0] %vm591, %v590
    %s594 = scalar_lea.vmem %s0, 15
    %v595 = vld [vmem:[%s594] sm:$0x1]
    %s596 = scalar_lea.vmem %s0, 46
    %v597 = vld [vmem:[%s596] sm:$0x2]
    %vm598 = vcmask 1041409
    %v599 = vsel %vm598, %v597, %v595
    %s600 = scalar_lea.vmem %s0, 77
    %v601 = vld [vmem:[%s600] sm:$0x4]
    %vm602 = vcmask 1042434
    %v603 = vsel %vm602, %v601, %v599
    %s604 = scalar_lea.vmem %s0, 108
    %v605 = vld [vmem:[%s604] sm:$0x8]
    %vm606 = vcmask 1043459
    %v607 = vsel %vm606, %v605, %v603
    %s608 = scalar_lea.vmem %s0, 139
    %v609 = vld [vmem:[%s608] sm:$0x10]
    %vm610 = vcmask 1044484
    %v611 = vsel %vm610, %v609, %v607
    %s612 = scalar_lea.vmem %s0, 170
    %v613 = vld [vmem:[%s612] sm:$0x20]
    %vm614 = vcmask 1045509
    %v615 = vsel %vm614, %v613, %v611
    %s616 = scalar_lea.vmem %s0, 201
    %v617 = vld [vmem:[%s616] sm:$0x40]
    %vm618 = vcmask 1046534
    %v619 = vsel %vm618, %v617, %v615
    %s620 = scalar_lea.vmem %s0, 232
    %v621 = vld [vmem:[%s620] sm:$0x80]
    %vm622 = vcmask 1047559
    %v623 = vsel %vm622, %v621, %v619
    %624 = vrot.lane.b32.xlu0 %v623, 60
    %v625 = vpop.permute.xlu0 %624
    %vm626 = vcmask 523744
    %627 = vst.msk [vmem:[#allocation0] ss:$8 sm:$0xf] %vm626, %v625
    %628 = vst.msk [vmem:[#allocation0] ss:$8 sm:$0xf0] %vm626, %v625
    %s629 = scalar_lea.vmem %s0, 14
    %v630 = vld [vmem:[%s629] sm:$0x1]
    %s631 = scalar_lea.vmem %s0, 45
    %v632 = vld [vmem:[%s631] sm:$0x2]
    %vm633 = vcmask 1041409
    %v634 = vsel %vm633, %v632, %v630
    %s635 = scalar_lea.vmem %s0, 76
    %v636 = vld [vmem:[%s635] sm:$0x4]
    %vm637 = vcmask 1042434
    %v638 = vsel %vm637, %v636, %v634
    %s639 = scalar_lea.vmem %s0, 107
    %v640 = vld [vmem:[%s639] sm:$0x8]
    %vm641 = vcmask 1043459
    %v642 = vsel %vm641, %v640, %v638
    %s643 = scalar_lea.vmem %s0, 138
    %v644 = vld [vmem:[%s643] sm:$0x10]
    %vm645 = vcmask 1044484
    %v646 = vsel %vm645, %v644, %v642
    %s647 = scalar_lea.vmem %s0, 169
    %v648 = vld [vmem:[%s647] sm:$0x20]
    %vm649 = vcmask 1045509
    %v650 = vsel %vm649, %v648, %v646
    %s651 = scalar_lea.vmem %s0, 200
    %v652 = vld [vmem:[%s651] sm:$0x40]
    %vm653 = vcmask 1046534
    %v654 = vsel %vm653, %v652, %v650
    %s655 = scalar_lea.vmem %s0, 231
    %v656 = vld [vmem:[%s655] sm:$0x80]
    %vm657 = vcmask 1047559
    %v658 = vsel %vm657, %v656, %v654
    %659 = vrot.lane.b32.xlu0 %v658, 56
    %v660 = vpop.permute.xlu0 %659
    %vm661 = vcmask 490944
    %662 = vst.msk [vmem:[#allocation0] ss:$8 sm:$0xf] %vm661, %v660
    %663 = vst.msk [vmem:[#allocation0] ss:$8 sm:$0xf0] %vm661, %v660
    %s664 = scalar_lea.vmem %s0, 13
    %v665 = vld [vmem:[%s664] sm:$0x1]
    %s666 = scalar_lea.vmem %s0, 44
    %v667 = vld [vmem:[%s666] sm:$0x2]
    %vm668 = vcmask 1041409
    %v669 = vsel %vm668, %v667, %v665
    %s670 = scalar_lea.vmem %s0, 75
    %v671 = vld [vmem:[%s670] sm:$0x4]
    %vm672 = vcmask 1042434
    %v673 = vsel %vm672, %v671, %v669
    %s674 = scalar_lea.vmem %s0, 106
    %v675 = vld [vmem:[%s674] sm:$0x8]
    %vm676 = vcmask 1043459
    %v677 = vsel %vm676, %v675, %v673
    %s678 = scalar_lea.vmem %s0, 137
    %v679 = vld [vmem:[%s678] sm:$0x10]
    %vm680 = vcmask 1044484
    %v681 = vsel %vm680, %v679, %v677
    %s682 = scalar_lea.vmem %s0, 168
    %v683 = vld [vmem:[%s682] sm:$0x20]
    %vm684 = vcmask 1045509
    %v685 = vsel %vm684, %v683, %v681
    %s686 = scalar_lea.vmem %s0, 199
    %v687 = vld [vmem:[%s686] sm:$0x40]
    %vm688 = vcmask 1046534
    %v689 = vsel %vm688, %v687, %v685
    %s690 = scalar_lea.vmem %s0, 230
    %v691 = vld [vmem:[%s690] sm:$0x80]
    %vm692 = vcmask 1047559
    %v693 = vsel %vm692, %v691, %v689
    %694 = vrot.lane.b32.xlu0 %v693, 52
    %v695 = vpop.permute.xlu0 %694
    %vm696 = vcmask 458144
    %697 = vst.msk [vmem:[#allocation0] ss:$8 sm:$0xf] %vm696, %v695
    %698 = vst.msk [vmem:[#allocation0] ss:$8 sm:$0xf0] %vm696, %v695
    %s699 = scalar_lea.vmem %s0, 12
    %v700 = vld [vmem:[%s699] sm:$0x1]
    %s701 = scalar_lea.vmem %s0, 43
    %v702 = vld [vmem:[%s701] sm:$0x2]
    %vm703 = vcmask 1041409
    %v704 = vsel %vm703, %v702, %v700
    %s705 = scalar_lea.vmem %s0, 74
    %v706 = vld [vmem:[%s705] sm:$0x4]
    %vm707 = vcmask 1042434
    %v708 = vsel %vm707, %v706, %v704
    %s709 = scalar_lea.vmem %s0, 105
    %v710 = vld [vmem:[%s709] sm:$0x8]
    %vm711 = vcmask 1043459
    %v712 = vsel %vm711, %v710, %v708
    %s713 = scalar_lea.vmem %s0, 136
    %v714 = vld [vmem:[%s713] sm:$0x10]
    %vm715 = vcmask 1044484
    %v716 = vsel %vm715, %v714, %v712
    %s717 = scalar_lea.vmem %s0, 167
    %v718 = vld [vmem:[%s717] sm:$0x20]
    %vm719 = vcmask 1045509
    %v720 = vsel %vm719, %v718, %v716
    %s721 = scalar_lea.vmem %s0, 198
    %v722 = vld [vmem:[%s721] sm:$0x40]
    %vm723 = vcmask 1046534
    %v724 = vsel %vm723, %v722, %v720
    %s725 = scalar_lea.vmem %s0, 229
    %v726 = vld [vmem:[%s725] sm:$0x80]
    %vm727 = vcmask 1047559
    %v728 = vsel %vm727, %v726, %v724
    %729 = vrot.lane.b32.xlu0 %v728, 48
    %v730 = vpop.permute.xlu0 %729
    %vm731 = vcmask 425344
    %732 = vst.msk [vmem:[#allocation0] ss:$8 sm:$0xf] %vm731, %v730
    %733 = vst.msk [vmem:[#allocation0] ss:$8 sm:$0xf0] %vm731, %v730
    %s734 = scalar_lea.vmem %s0, 11
    %v735 = vld [vmem:[%s734] sm:$0x1]
    %s736 = scalar_lea.vmem %s0, 42
    %v737 = vld [vmem:[%s736] sm:$0x2]
    %vm738 = vcmask 1041409
    %v739 = vsel %vm738, %v737, %v735
    %s740 = scalar_lea.vmem %s0, 73
    %v741 = vld [vmem:[%s740] sm:$0x4]
    %vm742 = vcmask 1042434
    %v743 = vsel %vm742, %v741, %v739
    %s744 = scalar_lea.vmem %s0, 104
    %v745 = vld [vmem:[%s744] sm:$0x8]
    %vm746 = vcmask 1043459
    %v747 = vsel %vm746, %v745, %v743
    %s748 = scalar_lea.vmem %s0, 135
    %v749 = vld [vmem:[%s748] sm:$0x10]
    %vm750 = vcmask 1044484
    %v751 = vsel %vm750, %v749, %v747
    %s752 = scalar_lea.vmem %s0, 166
    %v753 = vld [vmem:[%s752] sm:$0x20]
    %vm754 = vcmask 1045509
    %v755 = vsel %vm754, %v753, %v751
    %s756 = scalar_lea.vmem %s0, 197
    %v757 = vld [vmem:[%s756] sm:$0x40]
    %vm758 = vcmask 1046534
    %v759 = vsel %vm758, %v757, %v755
    %s760 = scalar_lea.vmem %s0, 228
    %v761 = vld [vmem:[%s760] sm:$0x80]
    %vm762 = vcmask 1047559
    %v763 = vsel %vm762, %v761, %v759
    %764 = vrot.lane.b32.xlu0 %v763, 44
    %v765 = vpop.permute.xlu0 %764
    %vm766 = vcmask 392544
    %767 = vst.msk [vmem:[#allocation0] ss:$8 sm:$0xf] %vm766, %v765
    %768 = vst.msk [vmem:[#allocation0] ss:$8 sm:$0xf0] %vm766, %v765
    %s769 = scalar_lea.vmem %s0, 10
    %v770 = vld [vmem:[%s769] sm:$0x1]
    %s771 = scalar_lea.vmem %s0, 41
    %v772 = vld [vmem:[%s771] sm:$0x2]
    %vm773 = vcmask 1041409
    %v774 = vsel %vm773, %v772, %v770
    %s775 = scalar_lea.vmem %s0, 72
    %v776 = vld [vmem:[%s775] sm:$0x4]
    %vm777 = vcmask 1042434
    %v778 = vsel %vm777, %v776, %v774
    %s779 = scalar_lea.vmem %s0, 103
    %v780 = vld [vmem:[%s779] sm:$0x8]
    %vm781 = vcmask 1043459
    %v782 = vsel %vm781, %v780, %v778
    %s783 = scalar_lea.vmem %s0, 134
    %v784 = vld [vmem:[%s783] sm:$0x10]
    %vm785 = vcmask 1044484
    %v786 = vsel %vm785, %v784, %v782
    %s787 = scalar_lea.vmem %s0, 165
    %v788 = vld [vmem:[%s787] sm:$0x20]
    %vm789 = vcmask 1045509
    %v790 = vsel %vm789, %v788, %v786
    %s791 = scalar_lea.vmem %s0, 196
    %v792 = vld [vmem:[%s791] sm:$0x40]
    %vm793 = vcmask 1046534
    %v794 = vsel %vm793, %v792, %v790
    %s795 = scalar_lea.vmem %s0, 227
    %v796 = vld [vmem:[%s795] sm:$0x80]
    %vm797 = vcmask 1047559
    %v798 = vsel %vm797, %v796, %v794
    %799 = vrot.lane.b32.xlu0 %v798, 40
    %v800 = vpop.permute.xlu0 %799
    %vm801 = vcmask 359744
    %802 = vst.msk [vmem:[#allocation0] ss:$8 sm:$0xf] %vm801, %v800
    %803 = vst.msk [vmem:[#allocation0] ss:$8 sm:$0xf0] %vm801, %v800
    %s804 = scalar_lea.vmem %s0, 9
    %v805 = vld [vmem:[%s804] sm:$0x1]
    %s806 = scalar_lea.vmem %s0, 40
    %v807 = vld [vmem:[%s806] sm:$0x2]
    %vm808 = vcmask 1041409
    %v809 = vsel %vm808, %v807, %v805
    %s810 = scalar_lea.vmem %s0, 71
    %v811 = vld [vmem:[%s810] sm:$0x4]
    %vm812 = vcmask 1042434
    %v813 = vsel %vm812, %v811, %v809
    %s814 = scalar_lea.vmem %s0, 102
    %v815 = vld [vmem:[%s814] sm:$0x8]
    %vm816 = vcmask 1043459
    %v817 = vsel %vm816, %v815, %v813
    %s818 = scalar_lea.vmem %s0, 133
    %v819 = vld [vmem:[%s818] sm:$0x10]
    %vm820 = vcmask 1044484
    %v821 = vsel %vm820, %v819, %v817
    %s822 = scalar_lea.vmem %s0, 164
    %v823 = vld [vmem:[%s822] sm:$0x20]
    %vm824 = vcmask 1045509
    %v825 = vsel %vm824, %v823, %v821
    %s826 = scalar_lea.vmem %s0, 195
    %v827 = vld [vmem:[%s826] sm:$0x40]
    %vm828 = vcmask 1046534
    %v829 = vsel %vm828, %v827, %v825
    %s830 = scalar_lea.vmem %s0, 226
    %v831 = vld [vmem:[%s830] sm:$0x80]
    %vm832 = vcmask 1047559
    %v833 = vsel %vm832, %v831, %v829
    %834 = vrot.lane.b32.xlu0 %v833, 36
    %v835 = vpop.permute.xlu0 %834
    %vm836 = vcmask 326944
    %837 = vst.msk [vmem:[#allocation0] ss:$8 sm:$0xf] %vm836, %v835
    %838 = vst.msk [vmem:[#allocation0] ss:$8 sm:$0xf0] %vm836, %v835
    %s839 = scalar_lea.vmem %s0, 8
    %v840 = vld [vmem:[%s839] sm:$0x1]
    %s841 = scalar_lea.vmem %s0, 39
    %v842 = vld [vmem:[%s841] sm:$0x2]
    %vm843 = vcmask 1041409
    %v844 = vsel %vm843, %v842, %v840
    %s845 = scalar_lea.vmem %s0, 70
    %v846 = vld [vmem:[%s845] sm:$0x4]
    %vm847 = vcmask 1042434
    %v848 = vsel %vm847, %v846, %v844
    %s849 = scalar_lea.vmem %s0, 101
    %v850 = vld [vmem:[%s849] sm:$0x8]
    %vm851 = vcmask 1043459
    %v852 = vsel %vm851, %v850, %v848
    %s853 = scalar_lea.vmem %s0, 132
    %v854 = vld [vmem:[%s853] sm:$0x10]
    %vm855 = vcmask 1044484
    %v856 = vsel %vm855, %v854, %v852
    %s857 = scalar_lea.vmem %s0, 163
    %v858 = vld [vmem:[%s857] sm:$0x20]
    %vm859 = vcmask 1045509
    %v860 = vsel %vm859, %v858, %v856
    %s861 = scalar_lea.vmem %s0, 194
    %v862 = vld [vmem:[%s861] sm:$0x40]
    %vm863 = vcmask 1046534
    %v864 = vsel %vm863, %v862, %v860
    %s865 = scalar_lea.vmem %s0, 225
    %v866 = vld [vmem:[%s865] sm:$0x80]
    %vm867 = vcmask 1047559
    %v868 = vsel %vm867, %v866, %v864
    %869 = vrot.lane.b32.xlu0 %v868, 32
    %v870 = vpop.permute.xlu0 %869
    %vm871 = vcmask 294144
    %872 = vst.msk [vmem:[#allocation0] ss:$8 sm:$0xf] %vm871, %v870
    %873 = vst.msk [vmem:[#allocation0] ss:$8 sm:$0xf0] %vm871, %v870
    %s874 = scalar_lea.vmem %s0, 7
    %v875 = vld [vmem:[%s874] sm:$0x1]
    %s876 = scalar_lea.vmem %s0, 38
    %v877 = vld [vmem:[%s876] sm:$0x2]
    %vm878 = vcmask 1041409
    %v879 = vsel %vm878, %v877, %v875
    %s880 = scalar_lea.vmem %s0, 69
    %v881 = vld [vmem:[%s880] sm:$0x4]
    %vm882 = vcmask 1042434
    %v883 = vsel %vm882, %v881, %v879
    %s884 = scalar_lea.vmem %s0, 100
    %v885 = vld [vmem:[%s884] sm:$0x8]
    %vm886 = vcmask 1043459
    %v887 = vsel %vm886, %v885, %v883
    %s888 = scalar_lea.vmem %s0, 131
    %v889 = vld [vmem:[%s888] sm:$0x10]
    %vm890 = vcmask 1044484
    %v891 = vsel %vm890, %v889, %v887
    %s892 = scalar_lea.vmem %s0, 162
    %v893 = vld [vmem:[%s892] sm:$0x20]
    %vm894 = vcmask 1045509
    %v895 = vsel %vm894, %v893, %v891
    %s896 = scalar_lea.vmem %s0, 193
    %v897 = vld [vmem:[%s896] sm:$0x40]
    %vm898 = vcmask 1046534
    %v899 = vsel %vm898, %v897, %v895
    %s900 = scalar_lea.vmem %s0, 224
    %v901 = vld [vmem:[%s900] sm:$0x80]
    %vm902 = vcmask 1047559
    %v903 = vsel %vm902, %v901, %v899
    %904 = vrot.lane.b32.xlu0 %v903, 28
    %v905 = vpop.permute.xlu0 %904
    %vm906 = vcmask 261344
    %907 = vst.msk [vmem:[#allocation0] ss:$8 sm:$0xf] %vm906, %v905
    %908 = vst.msk [vmem:[#allocation0] ss:$8 sm:$0xf0] %vm906, %v905
    %s909 = scalar_lea.vmem %s0, 6
    %v910 = vld [vmem:[%s909] sm:$0x1]
    %s911 = scalar_lea.vmem %s0, 37
    %v912 = vld [vmem:[%s911] sm:$0x2]
    %vm913 = vcmask 1041409
    %v914 = vsel %vm913, %v912, %v910
    %s915 = scalar_lea.vmem %s0, 68
    %v916 = vld [vmem:[%s915] sm:$0x4]
    %vm917 = vcmask 1042434
    %v918 = vsel %vm917, %v916, %v914
    %s919 = scalar_lea.vmem %s0, 99
    %v920 = vld [vmem:[%s919] sm:$0x8]
    %vm921 = vcmask 1043459
    %v922 = vsel %vm921, %v920, %v918
    %s923 = scalar_lea.vmem %s0, 130
    %v924 = vld [vmem:[%s923] sm:$0x10]
    %vm925 = vcmask 1044484
    %v926 = vsel %vm925, %v924, %v922
    %s927 = scalar_lea.vmem %s0, 161
    %v928 = vld [vmem:[%s927] sm:$0x20]
    %vm929 = vcmask 1045509
    %v930 = vsel %vm929, %v928, %v926
    %s931 = scalar_lea.vmem %s0, 192
    %v932 = vld [vmem:[%s931] sm:$0x40]
    %vm933 = vcmask 1046534
    %v934 = vsel %vm933, %v932, %v930
    %s935 = scalar_lea.vmem %s0, 223
    %v936 = vld [vmem:[%s935] sm:$0x80]
    %vm937 = vcmask 1047559
    %v938 = vsel %vm937, %v936, %v934
    %939 = vrot.lane.b32.xlu0 %v938, 24
    %v940 = vpop.permute.xlu0 %939
    %vm941 = vcmask 228544
    %942 = vst.msk [vmem:[#allocation0] ss:$8 sm:$0xf] %vm941, %v940
    %943 = vst.msk [vmem:[#allocation0] ss:$8 sm:$0xf0] %vm941, %v940
    %s944 = scalar_lea.vmem %s0, 5
    %v945 = vld [vmem:[%s944] sm:$0x1]
    %s946 = scalar_lea.vmem %s0, 36
    %v947 = vld [vmem:[%s946] sm:$0x2]
    %vm948 = vcmask 1041409
    %v949 = vsel %vm948, %v947, %v945
    %s950 = scalar_lea.vmem %s0, 67
    %v951 = vld [vmem:[%s950] sm:$0x4]
    %vm952 = vcmask 1042434
    %v953 = vsel %vm952, %v951, %v949
    %s954 = scalar_lea.vmem %s0, 98
    %v955 = vld [vmem:[%s954] sm:$0x8]
    %vm956 = vcmask 1043459
    %v957 = vsel %vm956, %v955, %v953
    %s958 = scalar_lea.vmem %s0, 129
    %v959 = vld [vmem:[%s958] sm:$0x10]
    %vm960 = vcmask 1044484
    %v961 = vsel %vm960, %v959, %v957
    %s962 = scalar_lea.vmem %s0, 160
    %v963 = vld [vmem:[%s962] sm:$0x20]
    %vm964 = vcmask 1045509
    %v965 = vsel %vm964, %v963, %v961
    %s966 = scalar_lea.vmem %s0, 191
    %v967 = vld [vmem:[%s966] sm:$0x40]
    %vm968 = vcmask 1046534
    %v969 = vsel %vm968, %v967, %v965
    %s970 = scalar_lea.vmem %s0, 222
    %v971 = vld [vmem:[%s970] sm:$0x80]
    %vm972 = vcmask 1047559
    %v973 = vsel %vm972, %v971, %v969
    %974 = vrot.lane.b32.xlu0 %v973, 20
    %v975 = vpop.permute.xlu0 %974
    %vm976 = vcmask 195744
    %977 = vst.msk [vmem:[#allocation0] ss:$8 sm:$0xf] %vm976, %v975
    %978 = vst.msk [vmem:[#allocation0] ss:$8 sm:$0xf0] %vm976, %v975
    %s979 = scalar_lea.vmem %s0, 4
    %v980 = vld [vmem:[%s979] sm:$0x1]
    %s981 = scalar_lea.vmem %s0, 35
    %v982 = vld [vmem:[%s981] sm:$0x2]
    %vm983 = vcmask 1041409
    %v984 = vsel %vm983, %v982, %v980
    %s985 = scalar_lea.vmem %s0, 66
    %v986 = vld [vmem:[%s985] sm:$0x4]
    %vm987 = vcmask 1042434
    %v988 = vsel %vm987, %v986, %v984
    %s989 = scalar_lea.vmem %s0, 97
    %v990 = vld [vmem:[%s989] sm:$0x8]
    %vm991 = vcmask 1043459
    %v992 = vsel %vm991, %v990, %v988
    %s993 = scalar_lea.vmem %s0, 128
    %v994 = vld [vmem:[%s993] sm:$0x10]
    %vm995 = vcmask 1044484
    %v996 = vsel %vm995, %v994, %v992
    %s997 = scalar_lea.vmem %s0, 159
    %v998 = vld [vmem:[%s997] sm:$0x20]
    %vm999 = vcmask 1045509
    %v1000 = vsel %vm999, %v998, %v996
    %s1001 = scalar_lea.vmem %s0, 190
    %v1002 = vld [vmem:[%s1001] sm:$0x40]
    %vm1003 = vcmask 1046534
    %v1004 = vsel %vm1003, %v1002, %v1000
    %s1005 = scalar_lea.vmem %s0, 221
    %v1006 = vld [vmem:[%s1005] sm:$0x80]
    %vm1007 = vcmask 1047559
    %v1008 = vsel %vm1007, %v1006, %v1004
    %1009 = vrot.lane.b32.xlu0 %v1008, 16
    %v1010 = vpop.permute.xlu0 %1009
    %vm1011 = vcmask 162944
    %1012 = vst.msk [vmem:[#allocation0] ss:$8 sm:$0xf] %vm1011, %v1010
    %1013 = vst.msk [vmem:[#allocation0] ss:$8 sm:$0xf0] %vm1011, %v1010
    %s1014 = scalar_lea.vmem %s0, 3
    %v1015 = vld [vmem:[%s1014] sm:$0x1]
    %s1016 = scalar_lea.vmem %s0, 34
    %v1017 = vld [vmem:[%s1016] sm:$0x2]
    %vm1018 = vcmask 1041409
    %v1019 = vsel %vm1018, %v1017, %v1015
    %s1020 = scalar_lea.vmem %s0, 65
    %v1021 = vld [vmem:[%s1020] sm:$0x4]
    %vm1022 = vcmask 1042434
    %v1023 = vsel %vm1022, %v1021, %v1019
    %s1024 = scalar_lea.vmem %s0, 96
    %v1025 = vld [vmem:[%s1024] sm:$0x8]
    %vm1026 = vcmask 1043459
    %v1027 = vsel %vm1026, %v1025, %v1023
    %s1028 = scalar_lea.vmem %s0, 127
    %v1029 = vld [vmem:[%s1028] sm:$0x10]
    %vm1030 = vcmask 1044484
    %v1031 = vsel %vm1030, %v1029, %v1027
    %s1032 = scalar_lea.vmem %s0, 158
    %v1033 = vld [vmem:[%s1032] sm:$0x20]
    %vm1034 = vcmask 1045509
    %v1035 = vsel %vm1034, %v1033, %v1031
    %s1036 = scalar_lea.vmem %s0, 189
    %v1037 = vld [vmem:[%s1036] sm:$0x40]
    %vm1038 = vcmask 1046534
    %v1039 = vsel %vm1038, %v1037, %v1035
    %s1040 = scalar_lea.vmem %s0, 220
    %v1041 = vld [vmem:[%s1040] sm:$0x80]
    %vm1042 = vcmask 1047559
    %v1043 = vsel %vm1042, %v1041, %v1039
    %1044 = vrot.lane.b32.xlu0 %v1043, 12
    %v1045 = vpop.permute.xlu0 %1044
    %vm1046 = vcmask 130144
    %1047 = vst.msk [vmem:[#allocation0] ss:$8 sm:$0xf] %vm1046, %v1045
    %1048 = vst.msk [vmem:[#allocation0] ss:$8 sm:$0xf0] %vm1046, %v1045
    %s1049 = scalar_lea.vmem %s0, 2
    %v1050 = vld [vmem:[%s1049] sm:$0x1]
    %s1051 = scalar_lea.vmem %s0, 33
    %v1052 = vld [vmem:[%s1051] sm:$0x2]
    %vm1053 = vcmask 1041409
    %v1054 = vsel %vm1053, %v1052, %v1050
    %s1055 = scalar_lea.vmem %s0, 64
    %v1056 = vld [vmem:[%s1055] sm:$0x4]
    %vm1057 = vcmask 1042434
    %v1058 = vsel %vm1057, %v1056, %v1054
    %s1059 = scalar_lea.vmem %s0, 95
    %v1060 = vld [vmem:[%s1059] sm:$0x8]
    %vm1061 = vcmask 1043459
    %v1062 = vsel %vm1061, %v1060, %v1058
    %s1063 = scalar_lea.vmem %s0, 126
    %v1064 = vld [vmem:[%s1063] sm:$0x10]
    %vm1065 = vcmask 1044484
    %v1066 = vsel %vm1065, %v1064, %v1062
    %s1067 = scalar_lea.vmem %s0, 157
    %v1068 = vld [vmem:[%s1067] sm:$0x20]
    %vm1069 = vcmask 1045509
    %v1070 = vsel %vm1069, %v1068, %v1066
    %s1071 = scalar_lea.vmem %s0, 188
    %v1072 = vld [vmem:[%s1071] sm:$0x40]
    %vm1073 = vcmask 1046534
    %v1074 = vsel %vm1073, %v1072, %v1070
    %s1075 = scalar_lea.vmem %s0, 219
    %v1076 = vld [vmem:[%s1075] sm:$0x80]
    %vm1077 = vcmask 1047559
    %v1078 = vsel %vm1077, %v1076, %v1074
    %1079 = vrot.lane.b32.xlu0 %v1078, 8
    %v1080 = vpop.permute.xlu0 %1079
    %vm1081 = vcmask 97344
    %1082 = vst.msk [vmem:[#allocation0] ss:$8 sm:$0xf] %vm1081, %v1080
    %1083 = vst.msk [vmem:[#allocation0] ss:$8 sm:$0xf0] %vm1081, %v1080
    %s1084 = scalar_lea.vmem %s0, 1
    %v1085 = vld [vmem:[%s1084] sm:$0x1]
    %s1086 = scalar_lea.vmem %s0, 32
    %v1087 = vld [vmem:[%s1086] sm:$0x2]
    %vm1088 = vcmask 1041409
    %v1089 = vsel %vm1088, %v1087, %v1085
    %s1090 = scalar_lea.vmem %s0, 63
    %v1091 = vld [vmem:[%s1090] sm:$0x4]
    %vm1092 = vcmask 1042434
    %v1093 = vsel %vm1092, %v1091, %v1089
    %s1094 = scalar_lea.vmem %s0, 94
    %v1095 = vld [vmem:[%s1094] sm:$0x8]
    %vm1096 = vcmask 1043459
    %v1097 = vsel %vm1096, %v1095, %v1093
    %s1098 = scalar_lea.vmem %s0, 125
    %v1099 = vld [vmem:[%s1098] sm:$0x10]
    %vm1100 = vcmask 1044484
    %v1101 = vsel %vm1100, %v1099, %v1097
    %s1102 = scalar_lea.vmem %s0, 156
    %v1103 = vld [vmem:[%s1102] sm:$0x20]
    %vm1104 = vcmask 1045509
    %v1105 = vsel %vm1104, %v1103, %v1101
    %s1106 = scalar_lea.vmem %s0, 187
    %v1107 = vld [vmem:[%s1106] sm:$0x40]
    %vm1108 = vcmask 1046534
    %v1109 = vsel %vm1108, %v1107, %v1105
    %s1110 = scalar_lea.vmem %s0, 218
    %v1111 = vld [vmem:[%s1110] sm:$0x80]
    %vm1112 = vcmask 1047559
    %v1113 = vsel %vm1112, %v1111, %v1109
    %1114 = vrot.lane.b32.xlu0 %v1113, 4
    %v1115 = vpop.permute.xlu0 %1114
    %vm1116 = vcmask 64544
    %1117 = vst.msk [vmem:[#allocation0] ss:$8 sm:$0xf] %vm1116, %v1115
    %1118 = vst.msk [vmem:[#allocation0] ss:$8 sm:$0xf0] %vm1116, %v1115
    %s1120 = sshllo.u32 0, 1
    %v1122 = vld [vmem:[#allocation0] sm:%s1120]
    %s1123 = sshllo.u32 0, 1
    %1124 = vst [vmem:[%s1] sm:%s1123] %v1122
    %s1125 = scalar_lea.vmem [#allocation0], 8
    %v1126 = vld [vmem:[%s1125] sm:%s1120]
    %s1127 = sshllo.u32 0, 1
    %s1128 = scalar_lea.vmem %s1, 1
    %1129 = vst [vmem:[%s1128] sm:%s1127] %v1126
    %s1130 = scalar_lea.vmem [#allocation0], 16
    %v1131 = vld [vmem:[%s1130] sm:%s1120]
    %s1132 = sshllo.u32 0, 1
    %s1133 = smul.addr 1, 2
    %s1134 = scalar_lea.vmem %s1, %s1133
    %1135 = vst [vmem:[%s1134] sm:%s1132] %v1131
    %s1136 = scalar_lea.vmem [#allocation0], 24
    %v1137 = vld [vmem:[%s1136] sm:%s1120]
    %s1138 = sshllo.u32 0, 1
    %s1139 = smul.addr 1, 3
    %s1140 = scalar_lea.vmem %s1, %s1139
    %1141 = vst [vmem:[%s1140] sm:%s1138] %v1137
    %s1142 = scalar_lea.vmem [#allocation0], 32
    %v1143 = vld [vmem:[%s1142] sm:%s1120]
    %s1144 = sshllo.u32 0, 1
    %s1145 = smul.addr 1, 4
    %s1146 = scalar_lea.vmem %s1, %s1145
    %1147 = vst [vmem:[%s1146] sm:%s1144] %v1143
    %s1148 = scalar_lea.vmem [#allocation0], 40
    %v1149 = vld [vmem:[%s1148] sm:%s1120]
    %s1150 = sshllo.u32 0, 1
    %s1151 = smul.addr 1, 5
    %s1152 = scalar_lea.vmem %s1, %s1151
    %1153 = vst [vmem:[%s1152] sm:%s1150] %v1149
    %s1154 = scalar_lea.vmem [#allocation0], 48
    %v1155 = vld [vmem:[%s1154] sm:%s1120]
    %s1156 = sshllo.u32 0, 1
    %s1157 = smul.addr 1, 6
    %s1158 = scalar_lea.vmem %s1, %s1157
    %1159 = vst [vmem:[%s1158] sm:%s1156] %v1155
    %s1160 = scalar_lea.vmem [#allocation0], 56
    %v1161 = vld [vmem:[%s1160] sm:%s1120]
    %s1162 = sshllo.u32 0, 1
    %s1163 = smul.addr 1, 7
    %s1164 = scalar_lea.vmem %s1, %s1163
    %1165 = vst [vmem:[%s1164] sm:%s1162] %v1161

// kernel: small_block_forward.3
$region0: #{small_block_forward.3}
  #allocation0 [shape = 'u32[]', space=smem, size = 0x4, offset = 0x4, fixed_abs, tag = 'smem constant byte address 0x4 - core index']
  #allocation1 [shape = 'u32[144,128]{1,0:T(1,128)}', space=vmem, size = 0x12000, scoped, tag = 'internal scratch']
  %s0 = inlined_call_operand.vmem [shape: bf16[2,1024], index: 0, kind: input, shape index: {}]
  %s1 = inlined_call_operand.vmem [shape: f32[2,1024], index: 1, kind: input, shape index: {}, may-alias: {1,4}]
  %s2 = inlined_call_operand.vmem [shape: f32[1,1024], index: 2, kind: input, shape index: {}]
  %s3 = inlined_call_operand.vmem [shape: f32[1,1024], index: 3, kind: input, shape index: {}]
  %s4 = inlined_call_operand.vmem [shape: f32[2,1024], index: 4, kind: output, shape index: {}, may-alias: {1,4}]
  %s5 = sld [smem:[#allocation0]]
  $region26: #{small_block_forward.3} parent=0
    _
  %s7 = ssub.s32 1, %s5
  %s8 = scalar_select 0, %s7, %s5
  // Predicated region
  $region2: #{small_block_forward.3} parent=0 // pred_check
    _
  $region3: #{small_block_forward.3} parent=0 // pred_check_branch
    %10 = sbr.rel (0) target = $region5
  $region4: #{small_block_forward.3} parent=0 // pred_region
    _
  $region5: #{small_block_forward.3} parent=0 // pred_fallthru
    _
  // Predicated region
  $region6: #{small_block_forward.3} parent=0 // pred_check
    _
  $region7: #{small_block_forward.3} parent=0 // pred_check_branch
    %12 = sbr.rel (0) target = $region9
  $region8: #{small_block_forward.3} parent=0 // pred_region
    _
  $region9: #{small_block_forward.3} parent=0 // pred_fallthru
    _
  // Predicated region
  $region10: #{small_block_forward.3} parent=0 // pred_check
    _
  $region11: #{small_block_forward.3} parent=0 // pred_check_branch
    %14 = sbr.rel (0) target = $region13
  $region12: #{small_block_forward.3} parent=0 // pred_region
    _
  $region13: #{small_block_forward.3} parent=0 // pred_fallthru
    _
  // Predicated region
  $region14: #{small_block_forward.3} parent=0 // pred_check
    _
  $region15: #{small_block_forward.3} parent=0 // pred_check_branch
    %16 = sbr.rel (0) target = $region17
  $region16: #{small_block_forward.3} parent=0 // pred_region
    _
  $region17: #{small_block_forward.3} parent=0 // pred_fallthru
    _
  %v17 = vld [vmem:[%s0] sm:$0xff]
  %v18 = vunpack.c.l.bf16 %v17
  %v19 = vunpack.c.h.bf16 %v17
  %v20 = vld [vmem:[%s2] sm:$0xff]
  %v22 = vlaneseq
  %v23 = vshrl.u32 %v22, 7
  %v24 = vsub.s32 0, %v23
  %v25 = vrot.slane %v20, %v24
  %v26 = vlaneseq
  %v27 = vshrl.u32 %v26, 7
  %v28 = vsub.s32 1, %v27
  %v29 = vrot.slane %v20, %v28
  %v30 = vlaneseq
  %v31 = vshrl.u32 %v30, 7
  %v32 = vsub.s32 2, %v31
  %v33 = vrot.slane %v20, %v32
  %v34 = vlaneseq
  %v35 = vshrl.u32 %v34, 7
  %v36 = vsub.s32 3, %v35
  %v37 = vrot.slane %v20, %v36
  %v38 = vlaneseq
  %v39 = vshrl.u32 %v38, 7
  %v40 = vsub.s32 4, %v39
  %v41 = vrot.slane %v20, %v40
  %v42 = vlaneseq
  %v43 = vshrl.u32 %v42, 7
  %v44 = vsub.s32 5, %v43
  %v45 = vrot.slane %v20, %v44
  %v46 = vlaneseq
  %v47 = vshrl.u32 %v46, 7
  %v48 = vsub.s32 6, %v47
  %v49 = vrot.slane %v20, %v48
  %v50 = vlaneseq
  %v51 = vshrl.u32 %v50, 7
  %v52 = vsub.s32 7, %v51
  %v53 = vrot.slane %v20, %v52
  %v54 = vcombine.low %v25, %v29
  %v55 = vcombine.low %v33, %v37
  %v57 = vunpack.c.l.s4 1983009808
  %v58 = vunpack.c.0.s8 %v57
  %v59 = vlaneseq
  %v60 = vshrl.u32 %v59, 7
  %v61 = vsub.s32 %v58, %v60
  %v62 = vrot.slane %v54, %v61
  %v64 = vunpack.c.l.s4 1983009808
  %v65 = vunpack.c.0.s8 %v64
  %v66 = vlaneseq
  %v67 = vshrl.u32 %v66, 7
  %v68 = vsub.s32 %v65, %v67
  %v69 = vrot.slane %v55, %v68
  %v70 = vcombine.low %v62, %v69
  %v71 = vcombine.low %v41, %v45
  %v72 = vcombine.low %v49, %v53
  %v74 = vunpack.c.l.s4 1983009808
  %v75 = vunpack.c.0.s8 %v74
  %v76 = vlaneseq
  %v77 = vshrl.u32 %v76, 7
  %v78 = vsub.s32 %v75, %v77
  %v79 = vrot.slane %v71, %v78
  %v81 = vunpack.c.l.s4 1983009808
  %v82 = vunpack.c.0.s8 %v81
  %v83 = vlaneseq
  %v84 = vshrl.u32 %v83, 7
  %v85 = vsub.s32 %v82, %v84
  %v86 = vrot.slane %v72, %v85
  %v87 = vcombine.low %v79, %v86
  %v90 = vmul.f32 %v18, %v70
  %v91 = vmul.f32 %v19, %v87
  %v92 = vld [vmem:[%s3] sm:$0xff]
  %v94 = vlaneseq
  %v95 = vshrl.u32 %v94, 7
  %v96 = vsub.s32 0, %v95
  %v97 = vrot.slane %v92, %v96
  %v98 = vlaneseq
  %v99 = vshrl.u32 %v98, 7
  %v100 = vsub.s32 1, %v99
  %v101 = vrot.slane %v92, %v100
  %v102 = vlaneseq
  %v103 = vshrl.u32 %v102, 7
  %v104 = vsub.s32 2, %v103
  %v105 = vrot.slane %v92, %v104
  %v106 = vlaneseq
  %v107 = vshrl.u32 %v106, 7
  %v108 = vsub.s32 3, %v107
  %v109 = vrot.slane %v92, %v108
  %v110 = vlaneseq
  %v111 = vshrl.u32 %v110, 7
  %v112 = vsub.s32 4, %v111
  %v113 = vrot.slane %v92, %v112
  %v114 = vlaneseq
  %v115 = vshrl.u32 %v114, 7
  %v116 = vsub.s32 5, %v115
  %v117 = vrot.slane %v92, %v116
  %v118 = vlaneseq
  %v119 = vshrl.u32 %v118, 7
  %v120 = vsub.s32 6, %v119
  %v121 = vrot.slane %v92, %v120
  %v122 = vlaneseq
  %v123 = vshrl.u32 %v122, 7
  %v124 = vsub.s32 7, %v123
  %v125 = vrot.slane %v92, %v124
  %v126 = vcombine.low %v97, %v101
  %v127 = vcombine.low %v105, %v109
  %v129 = vunpack.c.l.s4 1983009808
  %v130 = vunpack.c.0.s8 %v129
  %v131 = vlaneseq
  %v132 = vshrl.u32 %v131, 7
  %v133 = vsub.s32 %v130, %v132
  %v134 = vrot.slane %v126, %v133
  %v136 = vunpack.c.l.s4 1983009808
  %v137 = vunpack.c.0.s8 %v136
  %v138 = vlaneseq
  %v139 = vshrl.u32 %v138, 7
  %v140 = vsub.s32 %v137, %v139
  %v141 = vrot.slane %v127, %v140
  %v142 = vcombine.low %v134, %v141
  %v143 = vcombine.low %v113, %v117
  %v144 = vcombine.low %v121, %v125
  %v146 = vunpack.c.l.s4 1983009808
  %v147 = vunpack.c.0.s8 %v146
  %v148 = vlaneseq
  %v149 = vshrl.u32 %v148, 7
  %v150 = vsub.s32 %v147, %v149
  %v151 = vrot.slane %v143, %v150
  %v153 = vunpack.c.l.s4 1983009808
  %v154 = vunpack.c.0.s8 %v153
  %v155 = vlaneseq
  %v156 = vshrl.u32 %v155, 7
  %v157 = vsub.s32 %v154, %v156
  %v158 = vrot.slane %v144, %v157
  %v159 = vcombine.low %v151, %v158
  %v162 = vadd.f32 %v90, %v142
  %v163 = vadd.f32 %v91, %v159
  %v164 = vld [vmem:[%s1] sm:$0xff]
  %v165 = vld [vmem:[%s1 + $0x8] sm:$0xff]
  %v166 = vadd.f32 %v162, %v164
  %v167 = vadd.f32 %v163, %v165
  %v168 = vmax.f32 %v166, 0.0
  %v169 = vmax.f32 %v167, 0.0
  %170 = vst [vmem:[%s4] sm:$0xff] %v168
  %171 = vst [vmem:[%s4 + $0x8] sm:$0xff] %v169
  // Predicated region
  $region18: #{small_block_forward.3} parent=0 // pred_check
    _
  $region19: #{small_block_forward.3} parent=0 // pred_check_branch
    %173 = sbr.rel (0) target = $region21
  $region20: #{small_block_forward.3} parent=0 // pred_region
    _
  $region21: #{small_block_forward.3} parent=0 // pred_fallthru
    _
  // Predicated region
  $region22: #{small_block_forward.3} parent=0 // pred_check
    _
  $region23: #{small_block_forward.3} parent=0 // pred_check_branch
    %175 = sbr.rel (0) target = $region25
  $region24: #{small_block_forward.3} parent=0 // pred_region
    _
  $region25: #{small_block_forward.3} parent=0 // pred_fallthru
    _

// kernel: small_block_forward.2
$region0: #{small_block_forward.2}
  #allocation0 [shape = 'u32[]', space=smem, size = 0x4, offset = 0x4, fixed_abs, tag = 'smem constant byte address 0x4 - core index']
  #allocation1 [shape = 'u32[144,128]{1,0:T(1,128)}', space=vmem, size = 0x12000, scoped, tag = 'internal scratch']
  %s0 = inlined_call_operand.vmem [shape: bf16[2,18,18,4], index: 0, kind: input, shape index: {}]
  %s1 = inlined_call_operand.vmem [shape: bf16[36,4], index: 1, kind: input, shape index: {}]
  %s2 = inlined_call_operand.vmem [shape: bf16[2,256,4], index: 2, kind: output, shape index: {0}]
  %s3 = inlined_call_operand.vmem [shape: f32[2,1,4], index: 3, kind: output, shape index: {1}]
  %s4 = inlined_call_operand.vmem [shape: f32[2,1,4], index: 4, kind: output, shape index: {2}]
  %5 = xla_tuple %s2, %s3, %s4
  %s6 = sld [smem:[#allocation0]]
  $region61: #{small_block_forward.2} parent=0
    _
  %s8 = ssub.s32 1, %s6
  %s9 = scalar_select 0, %s8, %s6
  loop: start=0, step=1, limit=4
  $region2: #{small_block_forward.2} parent=0 // loop_pre_header
    _
  $region3: #{small_block_forward.2} parent=0 // loop_header
    %s11 = sphi 0, %s15
    %p12 = scmp.ge.s32.totalorder %s11, 4
    %s18 = sphi 0, %s30
    %s19 = sphi 0, %s26
    %s20 = sphi 0, %s18
    %s21 = sphi 0, %s19
    %s22 = sphi 0, %s20
    %s23 = sphi 0, %s21
    %s35 = sphi 0, %s37
    %s38 = sphi 0, %s35
    %s39 = sphi 0, %s38
    %s55 = sphi 0, %s39
    %s59 = sphi 0, %s59
    %s61 = sphi 0, %s59
    %s62 = sphi 0, %s61
    %s76 = sphi 0, %s62
    %s84 = sphi 0, %s86
    %s87 = sphi 0, %s84
    %s88 = sphi 0, %s87
    %s104 = sphi 0, %s88
    %s110 = sphi 0, %s112
    %s113 = sphi 0, %s110
    %s114 = sphi 0, %s113
    %s130 = sphi 0, %s114
    %s136 = sphi 0, %s138
    %s139 = sphi 0, %s136
    %s140 = sphi 0, %s139
    %s156 = sphi 0, %s140
  $region4: #{small_block_forward.2} parent=0 // loop_header_branch
    %14 = sbr.rel (%p12) target = $region8
  $region5: #{small_block_forward.2} parent=0 // loop_body
    %s16 = ssub.s32 %s11, 1
    %s17 = ssub.s32 %s11, 2
    %s24 = sadd.s32 1, %s19
    %p25 = scmp.ge.s32.totalorder %s24, 1
    %s26 = scalar_select %p25, 0, %s24
    %s27 = sadd.s32 1, %s18
    %s28 = scalar_select %p25, %s27, %s18
    %p29 = scmp.ge.s32.totalorder %s28, 2
    %s30 = scalar_select %p29, 0, %s28
    %s31 = sadd.s32 %s18, %s19
    %s32 = sadd.s32 %s30, %s26
    %s33 = ssub.s32 %s31, %s32
    %p34 = scmp.eq.s32.totalorder %s33, 0
    %s36 = sadd.s32 %s35, 1
    %s37 = scalar_select %p34, %s35, %s36
    %p40 = pneg %p34
    %p41 = scmp.eq.s32.totalorder %s11, 1
    %p42 = por %p40, %p41
    %p43 = scmp.ne.s32.totalorder %s35, %s38
    %p44 = scmp.eq.s32.totalorder %s11, 0
    %p45 = por %p43, %p44
    %p46 = scmp.ne.s32.totalorder %s35, %s38
    %p47 = scmp.eq.s32.totalorder %s16, 1
    %p48 = por %p46, %p47
    %p49 = scmp.ne.s32.totalorder %s38, %s39
    %p50 = scmp.eq.s32.totalorder %s16, 0
    %p51 = por %p49, %p50
    %p52 = scmp.ne.s32.totalorder %s38, %s39
    %p53 = scmp.eq.s32.totalorder %s17, 1
    %p54 = por %p52, %p53
    %p56 = scmp.ne.s32.totalorder %s39, %s55
    %p57 = scmp.eq.s32.totalorder %s17, 0
    %p58 = por %p56, %p57
    %s60 = sadd.s32 %s59, 1
    %p63 = scmp.eq.s32.totalorder %s11, 1
    %p64 = scmp.ne.s32.totalorder %s59, %s61
    %p65 = scmp.eq.s32.totalorder %s11, 0
    %p66 = por %p64, %p65
    %p67 = scmp.ne.s32.totalorder %s59, %s61
    %p68 = scmp.eq.s32.totalorder %s16, 1
    %p69 = por %p67, %p68
    %p70 = scmp.ne.s32.totalorder %s61, %s62
    %p71 = scmp.eq.s32.totalorder %s16, 0
    %p72 = por %p70, %p71
    %p73 = scmp.ne.s32.totalorder %s61, %s62
    %p74 = scmp.eq.s32.totalorder %s17, 1
    %p75 = por %p73, %p74
    %p77 = scmp.ne.s32.totalorder %s62, %s76
    %p78 = scmp.eq.s32.totalorder %s17, 0
    %p79 = por %p77, %p78
    %s80 = sadd.s32 %s18, %s19
    %s81 = sadd.s32 %s30, %s26
    %s82 = ssub.s32 %s80, %s81
    %p83 = scmp.eq.s32.totalorder %s82, 0
    %s85 = sadd.s32 %s84, 1
    %s86 = scalar_select %p83, %s84, %s85
    %p89 = pneg %p83
    %p90 = scmp.eq.s32.totalorder %s11, 1
    %p91 = por %p89, %p90
    %p92 = scmp.ne.s32.totalorder %s84, %s87
    %p93 = scmp.eq.s32.totalorder %s11, 0
    %p94 = por %p92, %p93
    %p95 = scmp.ne.s32.totalorder %s84, %s87
    %p96 = scmp.eq.s32.totalorder %s16, 1
    %p97 = por %p95, %p96
    %p98 = scmp.ne.s32.totalorder %s87, %s88
    %p99 = scmp.eq.s32.totalorder %s16, 0
    %p100 = por %p98, %p99
    %p101 = scmp.ne.s32.totalorder %s87, %s88
    %p102 = scmp.eq.s32.totalorder %s17, 1
    %p103 = por %p101, %p102
    %p105 = scmp.ne.s32.totalorder %s88, %s104
    %p106 = scmp.eq.s32.totalorder %s17, 0
    %p107 = por %p105, %p106
    %s108 = ssub.s32 %s18, %s30
    %p109 = scmp.eq.s32.totalorder %s108, 0
    %s111 = sadd.s32 %s110, 1
    %s112 = scalar_select %p109, %s110, %s111
    %p115 = pneg %p109
    %p116 = scmp.eq.s32.totalorder %s11, 1
    %p117 = por %p115, %p116
    %p118 = scmp.ne.s32.totalorder %s110, %s113
    %p119 = scmp.eq.s32.totalorder %s11, 0
    %p120 = por %p118, %p119
    %p121 = scmp.ne.s32.totalorder %s110, %s113
    %p122 = scmp.eq.s32.totalorder %s16, 1
    %p123 = por %p121, %p122
    %p124 = scmp.ne.s32.totalorder %s113, %s114
    %p125 = scmp.eq.s32.totalorder %s16, 0
    %p126 = por %p124, %p125
    %p127 = scmp.ne.s32.totalorder %s113, %s114
    %p128 = scmp.eq.s32.totalorder %s17, 1
    %p129 = por %p127, %p128
    %p131 = scmp.ne.s32.totalorder %s114, %s130
    %p132 = scmp.eq.s32.totalorder %s17, 0
    %p133 = por %p131, %p132
    %s134 = ssub.s32 %s18, %s30
    %p135 = scmp.eq.s32.totalorder %s134, 0
    %s137 = sadd.s32 %s136, 1
    %s138 = scalar_select %p135, %s136, %s137
    %p141 = pneg %p135
    %p142 = scmp.eq.s32.totalorder %s11, 1
    %p143 = por %p141, %p142
    %p144 = scmp.ne.s32.totalorder %s136, %s139
    %p145 = scmp.eq.s32.totalorder %s11, 0
    %p146 = por %p144, %p145
    %p147 = scmp.ne.s32.totalorder %s136, %s139
    %p148 = scmp.eq.s32.totalorder %s16, 1
    %p149 = por %p147, %p148
    %p150 = scmp.ne.s32.totalorder %s139, %s140
    %p151 = scmp.eq.s32.totalorder %s16, 0
    %p152 = por %p150, %p151
    %p153 = scmp.ne.s32.totalorder %s139, %s140
    %p154 = scmp.eq.s32.totalorder %s17, 1
    %p155 = por %p153, %p154
    %p157 = scmp.ne.s32.totalorder %s140, %s156
    %p158 = scmp.eq.s32.totalorder %s17, 0
    %p159 = por %p157, %p158
    %p160 = scmp.le.s32.totalorder 1, %s11
    %p161 = scmp.lt.s32.totalorder %s11, 3
    %p162 = pnand %p160, %p161
    %p163 = pneg %p162
    // Predicated region
    $region9: #{small_block_forward.2} parent=5 // pred_check
      _
    $region10: #{small_block_forward.2} parent=5 // pred_check_branch
      %165 = sbr.rel (%p162) target = $region12
    $region11: #{small_block_forward.2} parent=5 // pred_region
      %s166 = ssub.s32 %s11, 1
      // Predicated region
      $region13: #{small_block_forward.2} parent=11 // pred_check
        %p167 = pneg %p72
      $region14: #{small_block_forward.2} parent=11 // pred_check_branch
        %169 = sbr.rel (%p167) target = $region16
      $region15: #{small_block_forward.2} parent=11 // pred_region
        _
      $region16: #{small_block_forward.2} parent=11 // pred_fallthru
        _
    $region12: #{small_block_forward.2} parent=5 // pred_fallthru
      _
    %p170 = scmp.lt.s32.totalorder %s11, 2
    // Predicated region
    $region17: #{small_block_forward.2} parent=5 // pred_check
      %p171 = pneg %p170
    $region18: #{small_block_forward.2} parent=5 // pred_check_branch
      %173 = sbr.rel (%p171) target = $region20
    $region19: #{small_block_forward.2} parent=5 // pred_region
      // Predicated region
      $region21: #{small_block_forward.2} parent=19 // pred_check
        %p174 = pneg %p45
      $region22: #{small_block_forward.2} parent=19 // pred_check_branch
        %176 = sbr.rel (%p174) target = $region24
      $region23: #{small_block_forward.2} parent=19 // pred_region
        %s177 = sadd.s32 %s18, %s19
        %p178 = scmp.lt.s32.totalorder %s177, 1
        %s179 = scalar_select %p178, %s177, 1
        %s180 = smul.addr %s179, 54
        %s181 = smul.addr %s180, 4
        %s182 = scalar_lea.vmem %s0, %s181
        %s183 = sadd.s32 %s18, %s19
      $region24: #{small_block_forward.2} parent=19 // pred_fallthru
        _
    $region20: #{small_block_forward.2} parent=5 // pred_fallthru
      _
    %p184 = scmp.le.s32.totalorder 1, %s11
    %p185 = scmp.lt.s32.totalorder %s11, 3
    %p186 = pnand %p184, %p185
    %p187 = pneg %p186
    // Predicated region
    $region25: #{small_block_forward.2} parent=5 // pred_check
      _
    $region26: #{small_block_forward.2} parent=5 // pred_check_branch
      %189 = sbr.rel (%p186) target = $region28
    $region27: #{small_block_forward.2} parent=5 // pred_region
      %s190 = ssub.s32 %s11, 1
      %s191 = sadd.s32 %s20, %s21
      %p192 = scmp.lt.s32.totalorder %s191, 1
      %s193 = scalar_select %p192, %s191, 1
      %s194 = smul.addr %s193, 54
      %s195 = smul.addr %s194, 4
      %s196 = scalar_lea.vmem %s0, %s195
      %p197 = pneg %p51
      %p198 = pneg %p48
      %p199 = pneg %p72
      %p200 = pneg %p69
      %p201 = pneg %p100
      %p202 = pneg %p97
      %s203 = sadd.s32 %s20, %s21
      %p204 = scmp.lt.s32.totalorder %s203, 1
      %s205 = scalar_select %p204, %s203, 1
      %s206 = smul.addr %s205, 32
      %s207 = smul.addr %s206, 4
      %s208 = scalar_lea.vmem %s2, %s207
      %p209 = pneg %p126
      %p210 = pneg %p123
      %p211 = scmp.lt.s32.totalorder %s20, 1
      %s212 = scalar_select %p211, %s20, 1
      %s213 = scalar_lea.vmem %s3, %s212
      %p214 = pneg %p152
      %p215 = pneg %p149
      %p216 = scmp.lt.s32.totalorder %s20, 1
      %s217 = scalar_select %p216, %s20, 1
      %s218 = scalar_lea.vmem %s4, %s217
      %s219 = sadd.s32 %s20, %s21
      %p220 = scmp.lt.s32.totalorder %s219, 1
      %s221 = scalar_select %p220, %s219, 1
      %s222 = smul.addr %s221, 54
      %s223 = smul.addr %s222, 4
      %s224 = scalar_lea.vmem %s0, %s223
      %s225 = sadd.s32 %s20, %s21
      %s226 = sadd.s32 %s20, %s21
      %p227 = scmp.lt.s32.totalorder %s226, 1
      %s228 = scalar_select %p227, %s226, 1
      %s229 = smul.addr %s228, 32
      %s230 = smul.addr %s229, 4
      %s231 = scalar_lea.vmem %s2, %s230
      %s232 = sadd.s32 %s20, %s21
      %p233 = scmp.lt.s32.totalorder %s20, 1
      %s234 = scalar_select %p233, %s20, 1
      %s235 = scalar_lea.vmem %s3, %s234
      %p236 = scmp.lt.s32.totalorder %s20, 1
      %s237 = scalar_select %p236, %s20, 1
      %s238 = scalar_lea.vmem %s4, %s237
      %p240 = scmp.eq.s32.totalorder %s21, 0
      // Predicated region
      $region29: #{small_block_forward.2} parent=27 // pred_check
        %p241 = pneg %p240
      $region30: #{small_block_forward.2} parent=27 // pred_check_branch
        %243 = sbr.rel (%p241) target = $region32
      $region31: #{small_block_forward.2} parent=27 // pred_region
        %vm244 = vcmask 24576
        %245 = vst.msk [vmem:[%s235] sm:$0x1] %vm244, 0.0
        %246 = vst.msk [vmem:[%s238] sm:$0x1] %vm244, 0.0
      $region32: #{small_block_forward.2} parent=27 // pred_fallthru
        _
      %v247 = vld [vmem:[%s224] sm:$0xf]
      %v248 = vld [vmem:[%s224 + $0x4] sm:$0xf]
      %v249 = vld [vmem:[%s224 + $0x8] sm:$0x1]
      %v250 = vld [vmem:[%s224 + $0xc] sm:$0xf]
      %v251 = vld [vmem:[%s224 + $0x10] sm:$0xf]
      %v252 = vld [vmem:[%s224 + $0x14] sm:$0x1]
      %v253 = vld [vmem:[%s224 + $0x18] sm:$0xf]
      %v254 = vld [vmem:[%s224 + $0x1c] sm:$0xf]
      %v255 = vld [vmem:[%s224 + $0x20] sm:$0x1]
      %v256 = vld [vmem:[%s224 + $0x24] sm:$0xf]
      %v257 = vld [vmem:[%s224 + $0x28] sm:$0xf]
      %v258 = vld [vmem:[%s224 + $0x2c] sm:$0x1]
      %v259 = vld [vmem:[%s224 + $0x30] sm:$0xf]
      %v260 = vld [vmem:[%s224 + $0x34] sm:$0xf]
      %v261 = vld [vmem:[%s224 + $0x38] sm:$0x1]
      %v262 = vld [vmem:[%s224 + $0x3c] sm:$0xf]
      %v263 = vld [vmem:[%s224 + $0x40] sm:$0xf]
      %v264 = vld [vmem:[%s224 + $0x44] sm:$0x1]
      %v265 = vld [vmem:[%s224 + $0x48] sm:$0xf]
      %v266 = vld [vmem:[%s224 + $0x4c] sm:$0xf]
      %v267 = vld [vmem:[%s224 + $0x50] sm:$0x1]
      %v268 = vld [vmem:[%s224 + $0x54] sm:$0xf]
      %v269 = vld [vmem:[%s224 + $0x58] sm:$0xf]
      %v270 = vld [vmem:[%s224 + $0x5c] sm:$0x1]
      %v271 = vld [vmem:[%s224 + $0x60] sm:$0xf]
      %v272 = vld [vmem:[%s224 + $0x64] sm:$0xf]
      %v273 = vld [vmem:[%s224 + $0x68] sm:$0x1]
      %v274 = vld [vmem:[%s224 + $0x6c] sm:$0xf]
      %v275 = vld [vmem:[%s224 + $0x70] sm:$0xf]
      %v276 = vld [vmem:[%s224 + $0x74] sm:$0x1]
      %v277 = vld [vmem:[%s224 + $0x78] sm:$0xf]
      %v278 = vld [vmem:[%s224 + $0x7c] sm:$0xf]
      %v279 = vld [vmem:[%s224 + $0x80] sm:$0x1]
      %v280 = vld [vmem:[%s224 + $0x84] sm:$0xf]
      %v281 = vld [vmem:[%s224 + $0x88] sm:$0xf]
      %v282 = vld [vmem:[%s224 + $0x8c] sm:$0x1]
      %v283 = vld [vmem:[%s224 + $0x90] sm:$0xf]
      %v284 = vld [vmem:[%s224 + $0x94] sm:$0xf]
      %v285 = vld [vmem:[%s224 + $0x98] sm:$0x1]
      %v286 = vld [vmem:[%s224 + $0x9c] sm:$0xf]
      %v287 = vld [vmem:[%s224 + $0xa0] sm:$0xf]
      %v288 = vld [vmem:[%s224 + $0xa4] sm:$0x1]
      %v289 = vld [vmem:[%s224 + $0xa8] sm:$0xf]
      %v290 = vld [vmem:[%s224 + $0xac] sm:$0xf]
      %v291 = vld [vmem:[%s224 + $0xb0] sm:$0x1]
      %v292 = vld [vmem:[%s224 + $0xb4] sm:$0xf]
      %v293 = vld [vmem:[%s224 + $0xb8] sm:$0xf]
      %v294 = vld [vmem:[%s224 + $0xbc] sm:$0x1]
      %v295 = vld [vmem:[%s224 + $0xc0] sm:$0xf]
      %v296 = vld [vmem:[%s224 + $0xc4] sm:$0xf]
      %v297 = vld [vmem:[%s224 + $0xc8] sm:$0x1]
      %v298 = vld [vmem:[%s224 + $0xcc] sm:$0xf]
      %v299 = vld [vmem:[%s224 + $0xd0] sm:$0xf]
      %v300 = vld [vmem:[%s224 + $0xd4] sm:$0x1]
      %vm301 = vsmask.f32 3328
      %vm302 = vsmask.f32 7440
      %vm303 = vmor %vm301, %vm302
      %v305 = vshrl.u32 %v247, 16
      %v307 = vrot.slane %v305, 4
      %v308 = vshll.u32 %v247, 16
      %v310 = vrot.slane %v308, 5
      %v311 = vor.u32 %v307, %v310
      %v312 = vrot.slane %v311, 4
      %v314 = vshll.u32 %v248, 16
      %v316 = vrot.slane %v314, 5
      %v317 = vsel %vm303, %v312, %v316
      %v318 = vshrl.u32 %v248, 16
      %v320 = vrot.slane %v318, 4
      %v321 = vor.u32 %v320, %v316
      %v322 = vrot.slane %v321, 4
      %v324 = vshll.u32 %v249, 16
      %v326 = vrot.slane %v324, 5
      %v327 = vsel %vm303, %v322, %v326
      %v329 = vshrl.u32 %v250, 16
      %v331 = vrot.slane %v329, 4
      %v332 = vshll.u32 %v250, 16
      %v334 = vrot.slane %v332, 5
      %v335 = vor.u32 %v331, %v334
      %v336 = vrot.slane %v335, 4
      %v338 = vshll.u32 %v251, 16
      %v340 = vrot.slane %v338, 5
      %v341 = vsel %vm303, %v336, %v340
      %v342 = vshrl.u32 %v251, 16
      %v344 = vrot.slane %v342, 4
      %v345 = vor.u32 %v344, %v340
      %v346 = vrot.slane %v345, 4
      %v348 = vshll.u32 %v252, 16
      %v350 = vrot.slane %v348, 5
      %v351 = vsel %vm303, %v346, %v350
      %v353 = vshrl.u32 %v253, 16
      %v355 = vrot.slane %v353, 4
      %v356 = vshll.u32 %v253, 16
      %v358 = vrot.slane %v356, 5
      %v359 = vor.u32 %v355, %v358
      %v360 = vrot.slane %v359, 4
      %v362 = vshll.u32 %v254, 16
      %v364 = vrot.slane %v362, 5
      %v365 = vsel %vm303, %v360, %v364
      %v366 = vshrl.u32 %v254, 16
      %v368 = vrot.slane %v366, 4
      %v369 = vor.u32 %v368, %v364
      %v370 = vrot.slane %v369, 4
      %v372 = vshll.u32 %v255, 16
      %v374 = vrot.slane %v372, 5
      %v375 = vsel %vm303, %v370, %v374
      %v377 = vshrl.u32 %v256, 16
      %v379 = vrot.slane %v377, 4
      %v380 = vshll.u32 %v256, 16
      %v382 = vrot.slane %v380, 5
      %v383 = vor.u32 %v379, %v382
      %v384 = vrot.slane %v383, 4
      %v386 = vshll.u32 %v257, 16
      %v388 = vrot.slane %v386, 5
      %v389 = vsel %vm303, %v384, %v388
      %v390 = vshrl.u32 %v257, 16
      %v392 = vrot.slane %v390, 4
      %v393 = vor.u32 %v392, %v388
      %v394 = vrot.slane %v393, 4
      %v396 = vshll.u32 %v258, 16
      %v398 = vrot.slane %v396, 5
      %v399 = vsel %vm303, %v394, %v398
      %v401 = vshrl.u32 %v259, 16
      %v403 = vrot.slane %v401, 4
      %v404 = vshll.u32 %v259, 16
      %v406 = vrot.slane %v404, 5
      %v407 = vor.u32 %v403, %v406
      %v408 = vrot.slane %v407, 4
      %v410 = vshll.u32 %v260, 16
      %v412 = vrot.slane %v410, 5
      %v413 = vsel %vm303, %v408, %v412
      %v414 = vshrl.u32 %v260, 16
      %v416 = vrot.slane %v414, 4
      %v417 = vor.u32 %v416, %v412
      %v418 = vrot.slane %v417, 4
      %v420 = vshll.u32 %v261, 16
      %v422 = vrot.slane %v420, 5
      %v423 = vsel %vm303, %v418, %v422
      %v425 = vshrl.u32 %v262, 16
      %v427 = vrot.slane %v425, 4
      %v428 = vshll.u32 %v262, 16
      %v430 = vrot.slane %v428, 5
      %v431 = vor.u32 %v427, %v430
      %v432 = vrot.slane %v431, 4
      %v434 = vshll.u32 %v263, 16
      %v436 = vrot.slane %v434, 5
      %v437 = vsel %vm303, %v432, %v436
      %v438 = vshrl.u32 %v263, 16
      %v440 = vrot.slane %v438, 4
      %v441 = vor.u32 %v440, %v436
      %v442 = vrot.slane %v441, 4
      %v444 = vshll.u32 %v264, 16
      %v446 = vrot.slane %v444, 5
      %v447 = vsel %vm303, %v442, %v446
      %v449 = vshrl.u32 %v265, 16
      %v451 = vrot.slane %v449, 4
      %v452 = vshll.u32 %v265, 16
      %v454 = vrot.slane %v452, 5
      %v455 = vor.u32 %v451, %v454
      %v456 = vrot.slane %v455, 4
      %v458 = vshll.u32 %v266, 16
      %v460 = vrot.slane %v458, 5
      %v461 = vsel %vm303, %v456, %v460
      %v462 = vshrl.u32 %v266, 16
      %v464 = vrot.slane %v462, 4
      %v465 = vor.u32 %v464, %v460
      %v466 = vrot.slane %v465, 4
      %v468 = vshll.u32 %v267, 16
      %v470 = vrot.slane %v468, 5
      %v471 = vsel %vm303, %v466, %v470
      %v473 = vshrl.u32 %v268, 16
      %v475 = vrot.slane %v473, 4
      %v476 = vshll.u32 %v268, 16
      %v478 = vrot.slane %v476, 5
      %v479 = vor.u32 %v475, %v478
      %v480 = vrot.slane %v479, 4
      %v482 = vshll.u32 %v269, 16
      %v484 = vrot.slane %v482, 5
      %v485 = vsel %vm303, %v480, %v484
      %v486 = vshrl.u32 %v269, 16
      %v488 = vrot.slane %v486, 4
      %v489 = vor.u32 %v488, %v484
      %v490 = vrot.slane %v489, 4
      %v492 = vshll.u32 %v270, 16
      %v494 = vrot.slane %v492, 5
      %v495 = vsel %vm303, %v490, %v494
      %v497 = vshrl.u32 %v271, 16
      %v499 = vrot.slane %v497, 4
      %v500 = vshll.u32 %v271, 16
      %v502 = vrot.slane %v500, 5
      %v503 = vor.u32 %v499, %v502
      %v504 = vrot.slane %v503, 4
      %v506 = vshll.u32 %v272, 16
      %v508 = vrot.slane %v506, 5
      %v509 = vsel %vm303, %v504, %v508
      %v510 = vshrl.u32 %v272, 16
      %v512 = vrot.slane %v510, 4
      %v513 = vor.u32 %v512, %v508
      %v514 = vrot.slane %v513, 4
      %v516 = vshll.u32 %v273, 16
      %v518 = vrot.slane %v516, 5
      %v519 = vsel %vm303, %v514, %v518
      %v521 = vshrl.u32 %v274, 16
      %v523 = vrot.slane %v521, 4
      %v524 = vshll.u32 %v274, 16
      %v526 = vrot.slane %v524, 5
      %v527 = vor.u32 %v523, %v526
      %v528 = vrot.slane %v527, 4
      %v530 = vshll.u32 %v275, 16
      %v532 = vrot.slane %v530, 5
      %v533 = vsel %vm303, %v528, %v532
      %v534 = vshrl.u32 %v275, 16
      %v536 = vrot.slane %v534, 4
      %v537 = vor.u32 %v536, %v532
      %v538 = vrot.slane %v537, 4
      %v540 = vshll.u32 %v276, 16
      %v542 = vrot.slane %v540, 5
      %v543 = vsel %vm303, %v538, %v542
      %v545 = vshrl.u32 %v277, 16
      %v547 = vrot.slane %v545, 4
      %v548 = vshll.u32 %v277, 16
      %v550 = vrot.slane %v548, 5
      %v551 = vor.u32 %v547, %v550
      %v552 = vrot.slane %v551, 4
      %v554 = vshll.u32 %v278, 16
      %v556 = vrot.slane %v554, 5
      %v557 = vsel %vm303, %v552, %v556
      %v558 = vshrl.u32 %v278, 16
      %v560 = vrot.slane %v558, 4
      %v561 = vor.u32 %v560, %v556
      %v562 = vrot.slane %v561, 4
      %v564 = vshll.u32 %v279, 16
      %v566 = vrot.slane %v564, 5
      %v567 = vsel %vm303, %v562, %v566
      %v569 = vshrl.u32 %v280, 16
      %v571 = vrot.slane %v569, 4
      %v572 = vshll.u32 %v280, 16
      %v574 = vrot.slane %v572, 5
      %v575 = vor.u32 %v571, %v574
      %v576 = vrot.slane %v575, 4
      %v578 = vshll.u32 %v281, 16
      %v580 = vrot.slane %v578, 5
      %v581 = vsel %vm303, %v576, %v580
      %v582 = vshrl.u32 %v281, 16
      %v584 = vrot.slane %v582, 4
      %v585 = vor.u32 %v584, %v580
      %v586 = vrot.slane %v585, 4
      %v588 = vshll.u32 %v282, 16
      %v590 = vrot.slane %v588, 5
      %v591 = vsel %vm303, %v586, %v590
      %v593 = vshrl.u32 %v283, 16
      %v595 = vrot.slane %v593, 4
      %v596 = vshll.u32 %v283, 16
      %v598 = vrot.slane %v596, 5
      %v599 = vor.u32 %v595, %v598
      %v600 = vrot.slane %v599, 4
      %v602 = vshll.u32 %v284, 16
      %v604 = vrot.slane %v602, 5
      %v605 = vsel %vm303, %v600, %v604
      %v606 = vshrl.u32 %v284, 16
      %v608 = vrot.slane %v606, 4
      %v609 = vor.u32 %v608, %v604
      %v610 = vrot.slane %v609, 4
      %v612 = vshll.u32 %v285, 16
      %v614 = vrot.slane %v612, 5
      %v615 = vsel %vm303, %v610, %v614
      %v617 = vshrl.u32 %v286, 16
      %v619 = vrot.slane %v617, 4
      %v620 = vshll.u32 %v286, 16
      %v622 = vrot.slane %v620, 5
      %v623 = vor.u32 %v619, %v622
      %v624 = vrot.slane %v623, 4
      %v626 = vshll.u32 %v287, 16
      %v628 = vrot.slane %v626, 5
      %v629 = vsel %vm303, %v624, %v628
      %v630 = vshrl.u32 %v287, 16
      %v632 = vrot.slane %v630, 4
      %v633 = vor.u32 %v632, %v628
      %v634 = vrot.slane %v633, 4
      %v636 = vshll.u32 %v288, 16
      %v638 = vrot.slane %v636, 5
      %v639 = vsel %vm303, %v634, %v638
      %v641 = vshrl.u32 %v289, 16
      %v643 = vrot.slane %v641, 4
      %v644 = vshll.u32 %v289, 16
      %v646 = vrot.slane %v644, 5
      %v647 = vor.u32 %v643, %v646
      %v648 = vrot.slane %v647, 4
      %v650 = vshll.u32 %v290, 16
      %v652 = vrot.slane %v650, 5
      %v653 = vsel %vm303, %v648, %v652
      %v654 = vshrl.u32 %v290, 16
      %v656 = vrot.slane %v654, 4
      %v657 = vor.u32 %v656, %v652
      %v658 = vrot.slane %v657, 4
      %v660 = vshll.u32 %v291, 16
      %v662 = vrot.slane %v660, 5
      %v663 = vsel %vm303, %v658, %v662
      %v665 = vshrl.u32 %v292, 16
      %v667 = vrot.slane %v665, 4
      %v668 = vshll.u32 %v292, 16
      %v670 = vrot.slane %v668, 5
      %v671 = vor.u32 %v667, %v670
      %v672 = vrot.slane %v671, 4
      %v674 = vshll.u32 %v293, 16
      %v676 = vrot.slane %v674, 5
      %v677 = vsel %vm303, %v672, %v676
      %v678 = vshrl.u32 %v293, 16
      %v680 = vrot.slane %v678, 4
      %v681 = vor.u32 %v680, %v676
      %v682 = vrot.slane %v681, 4
      %v684 = vshll.u32 %v294, 16
      %v686 = vrot.slane %v684, 5
      %v687 = vsel %vm303, %v682, %v686
      %vm736 = vcmask 1042432
      %vm737 = vcmask 1046532
      %vm738 = vmor %vm736, %vm737
      %v739 = vrot.slane %v247, 5
      %v740 = vrot.slane %v739, 4
      %v741 = vrot.slane %v248, 5
      %v742 = vsel %vm738, %v740, %v741
      %v743 = vrot.slane %v741, 4
      %v744 = vrot.slane %v249, 5
      %v745 = vsel %vm738, %v743, %v744
      %v746 = vrot.slane %v250, 5
      %v747 = vrot.slane %v746, 4
      %v748 = vrot.slane %v251, 5
      %v749 = vsel %vm738, %v747, %v748
      %v750 = vrot.slane %v748, 4
      %v751 = vrot.slane %v252, 5
      %v752 = vsel %vm738, %v750, %v751
      %v753 = vrot.slane %v253, 5
      %v754 = vrot.slane %v753, 4
      %v755 = vrot.slane %v254, 5
      %v756 = vsel %vm738, %v754, %v755
      %v757 = vrot.slane %v755, 4
      %v758 = vrot.slane %v255, 5
      %v759 = vsel %vm738, %v757, %v758
      %v760 = vrot.slane %v256, 5
      %v761 = vrot.slane %v760, 4
      %v762 = vrot.slane %v257, 5
      %v763 = vsel %vm738, %v761, %v762
      %v764 = vrot.slane %v762, 4
      %v765 = vrot.slane %v258, 5
      %v766 = vsel %vm738, %v764, %v765
      %v767 = vrot.slane %v259, 5
      %v768 = vrot.slane %v767, 4
      %v769 = vrot.slane %v260, 5
      %v770 = vsel %vm738, %v768, %v769
      %v771 = vrot.slane %v769, 4
      %v772 = vrot.slane %v261, 5
      %v773 = vsel %vm738, %v771, %v772
      %v774 = vrot.slane %v262, 5
      %v775 = vrot.slane %v774, 4
      %v776 = vrot.slane %v263, 5
      %v777 = vsel %vm738, %v775, %v776
      %v778 = vrot.slane %v776, 4
      %v779 = vrot.slane %v264, 5
      %v780 = vsel %vm738, %v778, %v779
      %v781 = vrot.slane %v265, 5
      %v782 = vrot.slane %v781, 4
      %v783 = vrot.slane %v266, 5
      %v784 = vsel %vm738, %v782, %v783
      %v785 = vrot.slane %v783, 4
      %v786 = vrot.slane %v267, 5
      %v787 = vsel %vm738, %v785, %v786
      %v788 = vrot.slane %v268, 5
      %v789 = vrot.slane %v788, 4
      %v790 = vrot.slane %v269, 5
      %v791 = vsel %vm738, %v789, %v790
      %v792 = vrot.slane %v790, 4
      %v793 = vrot.slane %v270, 5
      %v794 = vsel %vm738, %v792, %v793
      %v795 = vrot.slane %v271, 5
      %v796 = vrot.slane %v795, 4
      %v797 = vrot.slane %v272, 5
      %v798 = vsel %vm738, %v796, %v797
      %v799 = vrot.slane %v797, 4
      %v800 = vrot.slane %v273, 5
      %v801 = vsel %vm738, %v799, %v800
      %v802 = vrot.slane %v274, 5
      %v803 = vrot.slane %v802, 4
      %v804 = vrot.slane %v275, 5
      %v805 = vsel %vm738, %v803, %v804
      %v806 = vrot.slane %v804, 4
      %v807 = vrot.slane %v276, 5
      %v808 = vsel %vm738, %v806, %v807
      %v809 = vrot.slane %v277, 5
      %v810 = vrot.slane %v809, 4
      %v811 = vrot.slane %v278, 5
      %v812 = vsel %vm738, %v810, %v811
      %v813 = vrot.slane %v811, 4
      %v814 = vrot.slane %v279, 5
      %v815 = vsel %vm738, %v813, %v814
      %v816 = vrot.slane %v280, 5
      %v817 = vrot.slane %v816, 4
      %v818 = vrot.slane %v281, 5
      %v819 = vsel %vm738, %v817, %v818
      %v820 = vrot.slane %v818, 4
      %v821 = vrot.slane %v282, 5
      %v822 = vsel %vm738, %v820, %v821
      %v823 = vrot.slane %v283, 5
      %v824 = vrot.slane %v823, 4
      %v825 = vrot.slane %v284, 5
      %v826 = vsel %vm738, %v824, %v825
      %v827 = vrot.slane %v825, 4
      %v828 = vrot.slane %v285, 5
      %v829 = vsel %vm738, %v827, %v828
      %v830 = vrot.slane %v286, 5
      %v831 = vrot.slane %v830, 4
      %v832 = vrot.slane %v287, 5
      %v833 = vsel %vm738, %v831, %v832
      %v834 = vrot.slane %v832, 4
      %v835 = vrot.slane %v288, 5
      %v836 = vsel %vm738, %v834, %v835
      %v837 = vrot.slane %v289, 5
      %v838 = vrot.slane %v837, 4
      %v839 = vrot.slane %v290, 5
      %v840 = vsel %vm738, %v838, %v839
      %v841 = vrot.slane %v839, 4
      %v842 = vrot.slane %v291, 5
      %v843 = vsel %vm738, %v841, %v842
      %v844 = vrot.slane %v292, 5
      %v845 = vrot.slane %v844, 4
      %v846 = vrot.slane %v293, 5
      %v847 = vsel %vm738, %v845, %v846
      %v848 = vrot.slane %v846, 4
      %v849 = vrot.slane %v294, 5
      %v850 = vsel %vm738, %v848, %v849
      %v852 = vshrl.u32 %v295, 16
      %v854 = vrot.slane %v852, 4
      %v855 = vshll.u32 %v295, 16
      %v857 = vrot.slane %v855, 5
      %v858 = vor.u32 %v854, %v857
      %v859 = vrot.slane %v858, 4
      %v861 = vshll.u32 %v296, 16
      %v863 = vrot.slane %v861, 5
      %v864 = vsel %vm303, %v859, %v863
      %v865 = vshrl.u32 %v296, 16
      %v867 = vrot.slane %v865, 4
      %v868 = vor.u32 %v867, %v863
      %v869 = vrot.slane %v868, 4
      %v871 = vshll.u32 %v297, 16
      %v873 = vrot.slane %v871, 5
      %v874 = vsel %vm303, %v869, %v873
      %v878 = vrot.slane %v295, 5
      %v879 = vrot.slane %v878, 4
      %v880 = vrot.slane %v296, 5
      %v881 = vsel %vm738, %v879, %v880
      %v882 = vrot.slane %v880, 4
      %v883 = vrot.slane %v297, 5
      %v884 = vsel %vm738, %v882, %v883
      %v886 = vshrl.u32 %v298, 16
      %v888 = vrot.slane %v886, 4
      %v889 = vshll.u32 %v298, 16
      %v891 = vrot.slane %v889, 5
      %v892 = vor.u32 %v888, %v891
      %v893 = vrot.slane %v892, 4
      %v895 = vshll.u32 %v299, 16
      %v897 = vrot.slane %v895, 5
      %v898 = vsel %vm303, %v893, %v897
      %v899 = vshrl.u32 %v299, 16
      %v901 = vrot.slane %v899, 4
      %v902 = vor.u32 %v901, %v897
      %v903 = vrot.slane %v902, 4
      %v905 = vshll.u32 %v300, 16
      %v907 = vrot.slane %v905, 5
      %v908 = vsel %vm303, %v903, %v907
      %v912 = vrot.slane %v298, 5
      %v913 = vrot.slane %v912, 4
      %v914 = vrot.slane %v299, 5
      %v915 = vsel %vm738, %v913, %v914
      %v916 = vrot.slane %v914, 4
      %v917 = vrot.slane %v300, 5
      %v918 = vsel %vm738, %v916, %v917
      %v919 = vunpack.c.l.b16 %v247
      %v920 = vunpack.c.l.b16 %v248
      %v921 = vunpack.c.l.b16 %v250
      %v922 = vunpack.c.l.b16 %v251
      %v923 = vunpack.c.l.b16 %v253
      %v924 = vunpack.c.l.b16 %v254
      %v925 = vunpack.c.l.b16 %v256
      %v926 = vunpack.c.l.b16 %v257
      %v927 = vunpack.c.l.b16 %v259
      %v928 = vunpack.c.l.b16 %v260
      %v929 = vunpack.c.l.b16 %v262
      %v930 = vunpack.c.l.b16 %v263
      %v931 = vunpack.c.l.b16 %v265
      %v932 = vunpack.c.l.b16 %v266
      %v933 = vunpack.c.l.b16 %v268
      %v934 = vunpack.c.l.b16 %v269
      %v935 = vunpack.c.l.b16 %v271
      %v936 = vunpack.c.l.b16 %v272
      %v937 = vunpack.c.l.b16 %v274
      %v938 = vunpack.c.l.b16 %v275
      %v939 = vunpack.c.l.b16 %v277
      %v940 = vunpack.c.l.b16 %v278
      %v941 = vunpack.c.l.b16 %v280
      %v942 = vunpack.c.l.b16 %v281
      %v943 = vunpack.c.l.b16 %v283
      %v944 = vunpack.c.l.b16 %v284
      %v945 = vunpack.c.l.b16 %v286
      %v946 = vunpack.c.l.b16 %v287
      %v947 = vunpack.c.l.b16 %v289
      %v948 = vunpack.c.l.b16 %v290
      %v949 = vunpack.c.l.b16 %v292
      %v950 = vunpack.c.l.b16 %v293
      %v951 = vpack.c.b16 %v920, %v919
      %v952 = vpack.c.b16 %v922, %v921
      %v953 = vpack.c.b16 %v924, %v923
      %v954 = vpack.c.b16 %v926, %v925
      %v955 = vpack.c.b16 %v928, %v927
      %v956 = vpack.c.b16 %v930, %v929
      %v957 = vpack.c.b16 %v932, %v931
      %v958 = vpack.c.b16 %v934, %v933
      %v959 = vpack.c.b16 %v936, %v935
      %v960 = vpack.c.b16 %v938, %v937
      %v961 = vpack.c.b16 %v940, %v939
      %v962 = vpack.c.b16 %v942, %v941
      %v963 = vpack.c.b16 %v944, %v943
      %v964 = vpack.c.b16 %v946, %v945
      %v965 = vpack.c.b16 %v948, %v947
      %v966 = vpack.c.b16 %v950, %v949
      %v967 = vunpack.c.l.b16 %v317
      %v968 = vunpack.c.l.b16 %v327
      %v969 = vunpack.c.l.b16 %v341
      %v970 = vunpack.c.l.b16 %v351
      %v971 = vunpack.c.l.b16 %v365
      %v972 = vunpack.c.l.b16 %v375
      %v973 = vunpack.c.l.b16 %v389
      %v974 = vunpack.c.l.b16 %v399
      %v975 = vunpack.c.l.b16 %v413
      %v976 = vunpack.c.l.b16 %v423
      %v977 = vunpack.c.l.b16 %v437
      %v978 = vunpack.c.l.b16 %v447
      %v979 = vunpack.c.l.b16 %v461
      %v980 = vunpack.c.l.b16 %v471
      %v981 = vunpack.c.l.b16 %v485
      %v982 = vunpack.c.l.b16 %v495
      %v983 = vunpack.c.l.b16 %v509
      %v984 = vunpack.c.l.b16 %v519
      %v985 = vunpack.c.l.b16 %v533
      %v986 = vunpack.c.l.b16 %v543
      %v987 = vunpack.c.l.b16 %v557
      %v988 = vunpack.c.l.b16 %v567
      %v989 = vunpack.c.l.b16 %v581
      %v990 = vunpack.c.l.b16 %v591
      %v991 = vunpack.c.l.b16 %v605
      %v992 = vunpack.c.l.b16 %v615
      %v993 = vunpack.c.l.b16 %v629
      %v994 = vunpack.c.l.b16 %v639
      %v995 = vunpack.c.l.b16 %v653
      %v996 = vunpack.c.l.b16 %v663
      %v997 = vunpack.c.l.b16 %v677
      %v998 = vunpack.c.l.b16 %v687
      %v999 = vpack.c.b16 %v968, %v967
      %v1000 = vpack.c.b16 %v970, %v969
      %v1001 = vpack.c.b16 %v972, %v971
      %v1002 = vpack.c.b16 %v974, %v973
      %v1003 = vpack.c.b16 %v976, %v975
      %v1004 = vpack.c.b16 %v978, %v977
      %v1005 = vpack.c.b16 %v980, %v979
      %v1006 = vpack.c.b16 %v982, %v981
      %v1007 = vpack.c.b16 %v984, %v983
      %v1008 = vpack.c.b16 %v986, %v985
      %v1009 = vpack.c.b16 %v988, %v987
      %v1010 = vpack.c.b16 %v990, %v989
      %v1011 = vpack.c.b16 %v992, %v991
      %v1012 = vpack.c.b16 %v994, %v993
      %v1013 = vpack.c.b16 %v996, %v995
      %v1014 = vpack.c.b16 %v998, %v997
      %1015 = vrot.lane.b32.xlu0 %v999, 4
      %v1016 = vpop.permute.xlu0 %1015
      %1017 = vrot.lane.b32.xlu0 %v1000, 4
      %v1018 = vpop.permute.xlu0 %1017
      %1019 = vrot.lane.b32.xlu0 %v1001, 4
      %v1020 = vpop.permute.xlu0 %1019
      %1021 = vrot.lane.b32.xlu0 %v1002, 4
      %v1022 = vpop.permute.xlu0 %1021
      %1023 = vrot.lane.b32.xlu0 %v1003, 4
      %v1024 = vpop.permute.xlu0 %1023
      %1025 = vrot.lane.b32.xlu0 %v1004, 4
      %v1026 = vpop.permute.xlu0 %1025
      %1027 = vrot.lane.b32.xlu0 %v1005, 4
      %v1028 = vpop.permute.xlu0 %1027
      %1029 = vrot.lane.b32.xlu0 %v1006, 4
      %v1030 = vpop.permute.xlu0 %1029
      %1031 = vrot.lane.b32.xlu0 %v1007, 4
      %v1032 = vpop.permute.xlu0 %1031
      %1033 = vrot.lane.b32.xlu0 %v1008, 4
      %v1034 = vpop.permute.xlu0 %1033
      %1035 = vrot.lane.b32.xlu0 %v1009, 4
      %v1036 = vpop.permute.xlu0 %1035
      %1037 = vrot.lane.b32.xlu0 %v1010, 4
      %v1038 = vpop.permute.xlu0 %1037
      %1039 = vrot.lane.b32.xlu0 %v1011, 4
      %v1040 = vpop.permute.xlu0 %1039
      %1041 = vrot.lane.b32.xlu0 %v1012, 4
      %v1042 = vpop.permute.xlu0 %1041
      %1043 = vrot.lane.b32.xlu0 %v1013, 4
      %v1044 = vpop.permute.xlu0 %1043
      %1045 = vrot.lane.b32.xlu0 %v1014, 4
      %v1046 = vpop.permute.xlu0 %1045
      %v1047 = vunpack.c.l.b16 %v742
      %v1048 = vunpack.c.l.b16 %v745
      %v1049 = vunpack.c.l.b16 %v749
      %v1050 = vunpack.c.l.b16 %v752
      %v1051 = vunpack.c.l.b16 %v756
      %v1052 = vunpack.c.l.b16 %v759
      %v1053 = vunpack.c.l.b16 %v763
      %v1054 = vunpack.c.l.b16 %v766
      %v1055 = vunpack.c.l.b16 %v770
      %v1056 = vunpack.c.l.b16 %v773
      %v1057 = vunpack.c.l.b16 %v777
      %v1058 = vunpack.c.l.b16 %v780
      %v1059 = vunpack.c.l.b16 %v784
      %v1060 = vunpack.c.l.b16 %v787
      %v1061 = vunpack.c.l.b16 %v791
      %v1062 = vunpack.c.l.b16 %v794
      %v1063 = vunpack.c.l.b16 %v798
      %v1064 = vunpack.c.l.b16 %v801
      %v1065 = vunpack.c.l.b16 %v805
      %v1066 = vunpack.c.l.b16 %v808
      %v1067 = vunpack.c.l.b16 %v812
      %v1068 = vunpack.c.l.b16 %v815
      %v1069 = vunpack.c.l.b16 %v819
      %v1070 = vunpack.c.l.b16 %v822
      %v1071 = vunpack.c.l.b16 %v826
      %v1072 = vunpack.c.l.b16 %v829
      %v1073 = vunpack.c.l.b16 %v833
      %v1074 = vunpack.c.l.b16 %v836
      %v1075 = vunpack.c.l.b16 %v840
      %v1076 = vunpack.c.l.b16 %v843
      %v1077 = vunpack.c.l.b16 %v847
      %v1078 = vunpack.c.l.b16 %v850
      %v1079 = vpack.c.b16 %v1048, %v1047
      %v1080 = vpack.c.b16 %v1050, %v1049
      %v1081 = vpack.c.b16 %v1052, %v1051
      %v1082 = vpack.c.b16 %v1054, %v1053
      %v1083 = vpack.c.b16 %v1056, %v1055
      %v1084 = vpack.c.b16 %v1058, %v1057
      %v1085 = vpack.c.b16 %v1060, %v1059
      %v1086 = vpack.c.b16 %v1062, %v1061
      %v1087 = vpack.c.b16 %v1064, %v1063
      %v1088 = vpack.c.b16 %v1066, %v1065
      %v1089 = vpack.c.b16 %v1068, %v1067
      %v1090 = vpack.c.b16 %v1070, %v1069
      %v1091 = vpack.c.b16 %v1072, %v1071
      %v1092 = vpack.c.b16 %v1074, %v1073
      %v1093 = vpack.c.b16 %v1076, %v1075
      %v1094 = vpack.c.b16 %v1078, %v1077
      %1095 = vrot.lane.b32.xlu0 %v1079, 8
      %v1096 = vpop.permute.xlu0 %1095
      %1097 = vrot.lane.b32.xlu0 %v1080, 8
      %v1098 = vpop.permute.xlu0 %1097
      %1099 = vrot.lane.b32.xlu0 %v1081, 8
      %v1100 = vpop.permute.xlu0 %1099
      %1101 = vrot.lane.b32.xlu0 %v1082, 8
      %v1102 = vpop.permute.xlu0 %1101
      %1103 = vrot.lane.b32.xlu0 %v1083, 8
      %v1104 = vpop.permute.xlu0 %1103
      %1105 = vrot.lane.b32.xlu0 %v1084, 8
      %v1106 = vpop.permute.xlu0 %1105
      %1107 = vrot.lane.b32.xlu0 %v1085, 8
      %v1108 = vpop.permute.xlu0 %1107
      %1109 = vrot.lane.b32.xlu0 %v1086, 8
      %v1110 = vpop.permute.xlu0 %1109
      %1111 = vrot.lane.b32.xlu0 %v1087, 8
      %v1112 = vpop.permute.xlu0 %1111
      %1113 = vrot.lane.b32.xlu0 %v1088, 8
      %v1114 = vpop.permute.xlu0 %1113
      %1115 = vrot.lane.b32.xlu0 %v1089, 8
      %v1116 = vpop.permute.xlu0 %1115
      %1117 = vrot.lane.b32.xlu0 %v1090, 8
      %v1118 = vpop.permute.xlu0 %1117
      %1119 = vrot.lane.b32.xlu0 %v1091, 8
      %v1120 = vpop.permute.xlu0 %1119
      %1121 = vrot.lane.b32.xlu0 %v1092, 8
      %v1122 = vpop.permute.xlu0 %1121
      %1123 = vrot.lane.b32.xlu0 %v1093, 8
      %v1124 = vpop.permute.xlu0 %1123
      %1125 = vrot.lane.b32.xlu0 %v1094, 8
      %v1126 = vpop.permute.xlu0 %1125
      %v1127 = vunpack.c.l.b16 %v295
      %v1128 = vunpack.c.l.b16 %v296
      %v1129 = vpack.c.b16 %v1128, %v1127
      %1130 = vrot.lane.b32.xlu0 %v952, 12
      %v1131 = vpop.permute.xlu0 %1130
      %1132 = vrot.lane.b32.xlu0 %v953, 12
      %v1133 = vpop.permute.xlu0 %1132
      %1134 = vrot.lane.b32.xlu0 %v954, 12
      %v1135 = vpop.permute.xlu0 %1134
      %1136 = vrot.lane.b32.xlu0 %v955, 12
      %v1137 = vpop.permute.xlu0 %1136
      %1138 = vrot.lane.b32.xlu0 %v956, 12
      %v1139 = vpop.permute.xlu0 %1138
      %1140 = vrot.lane.b32.xlu0 %v957, 12
      %v1141 = vpop.permute.xlu0 %1140
      %1142 = vrot.lane.b32.xlu0 %v958, 12
      %v1143 = vpop.permute.xlu0 %1142
      %1144 = vrot.lane.b32.xlu0 %v959, 12
      %v1145 = vpop.permute.xlu0 %1144
      %1146 = vrot.lane.b32.xlu0 %v960, 12
      %v1147 = vpop.permute.xlu0 %1146
      %1148 = vrot.lane.b32.xlu0 %v961, 12
      %v1149 = vpop.permute.xlu0 %1148
      %1150 = vrot.lane.b32.xlu0 %v962, 12
      %v1151 = vpop.permute.xlu0 %1150
      %1152 = vrot.lane.b32.xlu0 %v963, 12
      %v1153 = vpop.permute.xlu0 %1152
      %1154 = vrot.lane.b32.xlu0 %v964, 12
      %v1155 = vpop.permute.xlu0 %1154
      %1156 = vrot.lane.b32.xlu0 %v965, 12
      %v1157 = vpop.permute.xlu0 %1156
      %1158 = vrot.lane.b32.xlu0 %v966, 12
      %v1159 = vpop.permute.xlu0 %1158
      %1160 = vrot.lane.b32.xlu0 %v1129, 12
      %v1161 = vpop.permute.xlu0 %1160
      %v1162 = vunpack.c.l.b16 %v864
      %v1163 = vunpack.c.l.b16 %v874
      %v1164 = vpack.c.b16 %v1163, %v1162
      %1165 = vrot.lane.b32.xlu0 %v1000, 16
      %v1166 = vpop.permute.xlu0 %1165
      %1167 = vrot.lane.b32.xlu0 %v1001, 16
      %v1168 = vpop.permute.xlu0 %1167
      %1169 = vrot.lane.b32.xlu0 %v1002, 16
      %v1170 = vpop.permute.xlu0 %1169
      %1171 = vrot.lane.b32.xlu0 %v1003, 16
      %v1172 = vpop.permute.xlu0 %1171
      %1173 = vrot.lane.b32.xlu0 %v1004, 16
      %v1174 = vpop.permute.xlu0 %1173
      %1175 = vrot.lane.b32.xlu0 %v1005, 16
      %v1176 = vpop.permute.xlu0 %1175
      %1177 = vrot.lane.b32.xlu0 %v1006, 16
      %v1178 = vpop.permute.xlu0 %1177
      %1179 = vrot.lane.b32.xlu0 %v1007, 16
      %v1180 = vpop.permute.xlu0 %1179
      %1181 = vrot.lane.b32.xlu0 %v1008, 16
      %v1182 = vpop.permute.xlu0 %1181
      %1183 = vrot.lane.b32.xlu0 %v1009, 16
      %v1184 = vpop.permute.xlu0 %1183
      %1185 = vrot.lane.b32.xlu0 %v1010, 16
      %v1186 = vpop.permute.xlu0 %1185
      %1187 = vrot.lane.b32.xlu0 %v1011, 16
      %v1188 = vpop.permute.xlu0 %1187
      %1189 = vrot.lane.b32.xlu0 %v1012, 16
      %v1190 = vpop.permute.xlu0 %1189
      %1191 = vrot.lane.b32.xlu0 %v1013, 16
      %v1192 = vpop.permute.xlu0 %1191
      %1193 = vrot.lane.b32.xlu0 %v1014, 16
      %v1194 = vpop.permute.xlu0 %1193
      %1195 = vrot.lane.b32.xlu0 %v1164, 16
      %v1196 = vpop.permute.xlu0 %1195
      %v1197 = vunpack.c.l.b16 %v881
      %v1198 = vunpack.c.l.b16 %v884
      %v1199 = vpack.c.b16 %v1198, %v1197
      %1200 = vrot.lane.b32.xlu0 %v1080, 20
      %v1201 = vpop.permute.xlu0 %1200
      %1202 = vrot.lane.b32.xlu0 %v1081, 20
      %v1203 = vpop.permute.xlu0 %1202
      %1204 = vrot.lane.b32.xlu0 %v1082, 20
      %v1205 = vpop.permute.xlu0 %1204
      %1206 = vrot.lane.b32.xlu0 %v1083, 20
      %v1207 = vpop.permute.xlu0 %1206
      %1208 = vrot.lane.b32.xlu0 %v1084, 20
      %v1209 = vpop.permute.xlu0 %1208
      %1210 = vrot.lane.b32.xlu0 %v1085, 20
      %v1211 = vpop.permute.xlu0 %1210
      %1212 = vrot.lane.b32.xlu0 %v1086, 20
      %v1213 = vpop.permute.xlu0 %1212
      %1214 = vrot.lane.b32.xlu0 %v1087, 20
      %v1215 = vpop.permute.xlu0 %1214
      %1216 = vrot.lane.b32.xlu0 %v1088, 20
      %v1217 = vpop.permute.xlu0 %1216
      %1218 = vrot.lane.b32.xlu0 %v1089, 20
      %v1219 = vpop.permute.xlu0 %1218
      %1220 = vrot.lane.b32.xlu0 %v1090, 20
      %v1221 = vpop.permute.xlu0 %1220
      %1222 = vrot.lane.b32.xlu0 %v1091, 20
      %v1223 = vpop.permute.xlu0 %1222
      %1224 = vrot.lane.b32.xlu0 %v1092, 20
      %v1225 = vpop.permute.xlu0 %1224
      %1226 = vrot.lane.b32.xlu0 %v1093, 20
      %v1227 = vpop.permute.xlu0 %1226
      %1228 = vrot.lane.b32.xlu0 %v1094, 20
      %v1229 = vpop.permute.xlu0 %1228
      %1230 = vrot.lane.b32.xlu0 %v1199, 20
      %v1231 = vpop.permute.xlu0 %1230
      %v1232 = vunpack.c.l.b16 %v298
      %v1233 = vunpack.c.l.b16 %v299
      %v1234 = vpack.c.b16 %v1233, %v1232
      %1235 = vrot.lane.b32.xlu0 %v953, 24
      %v1236 = vpop.permute.xlu0 %1235
      %1237 = vrot.lane.b32.xlu0 %v954, 24
      %v1238 = vpop.permute.xlu0 %1237
      %1239 = vrot.lane.b32.xlu0 %v955, 24
      %v1240 = vpop.permute.xlu0 %1239
      %1241 = vrot.lane.b32.xlu0 %v956, 24
      %v1242 = vpop.permute.xlu0 %1241
      %1243 = vrot.lane.b32.xlu0 %v957, 24
      %v1244 = vpop.permute.xlu0 %1243
      %1245 = vrot.lane.b32.xlu0 %v958, 24
      %v1246 = vpop.permute.xlu0 %1245
      %1247 = vrot.lane.b32.xlu0 %v959, 24
      %v1248 = vpop.permute.xlu0 %1247
      %1249 = vrot.lane.b32.xlu0 %v960, 24
      %v1250 = vpop.permute.xlu0 %1249
      %1251 = vrot.lane.b32.xlu0 %v961, 24
      %v1252 = vpop.permute.xlu0 %1251
      %1253 = vrot.lane.b32.xlu0 %v962, 24
      %v1254 = vpop.permute.xlu0 %1253
      %1255 = vrot.lane.b32.xlu0 %v963, 24
      %v1256 = vpop.permute.xlu0 %1255
      %1257 = vrot.lane.b32.xlu0 %v964, 24
      %v1258 = vpop.permute.xlu0 %1257
      %1259 = vrot.lane.b32.xlu0 %v965, 24
      %v1260 = vpop.permute.xlu0 %1259
      %1261 = vrot.lane.b32.xlu0 %v966, 24
      %v1262 = vpop.permute.xlu0 %1261
      %1263 = vrot.lane.b32.xlu0 %v1129, 24
      %v1264 = vpop.permute.xlu0 %1263
      %1265 = vrot.lane.b32.xlu0 %v1234, 24
      %v1266 = vpop.permute.xlu0 %1265
      %v1267 = vunpack.c.l.b16 %v898
      %v1268 = vunpack.c.l.b16 %v908
      %v1269 = vpack.c.b16 %v1268, %v1267
      %1270 = vrot.lane.b32.xlu0 %v1001, 28
      %v1271 = vpop.permute.xlu0 %1270
      %1272 = vrot.lane.b32.xlu0 %v1002, 28
      %v1273 = vpop.permute.xlu0 %1272
      %1274 = vrot.lane.b32.xlu0 %v1003, 28
      %v1275 = vpop.permute.xlu0 %1274
      %1276 = vrot.lane.b32.xlu0 %v1004, 28
      %v1277 = vpop.permute.xlu0 %1276
      %1278 = vrot.lane.b32.xlu0 %v1005, 28
      %v1279 = vpop.permute.xlu0 %1278
      %1280 = vrot.lane.b32.xlu0 %v1006, 28
      %v1281 = vpop.permute.xlu0 %1280
      %1282 = vrot.lane.b32.xlu0 %v1007, 28
      %v1283 = vpop.permute.xlu0 %1282
      %1284 = vrot.lane.b32.xlu0 %v1008, 28
      %v1285 = vpop.permute.xlu0 %1284
      %1286 = vrot.lane.b32.xlu0 %v1009, 28
      %v1287 = vpop.permute.xlu0 %1286
      %1288 = vrot.lane.b32.xlu0 %v1010, 28
      %v1289 = vpop.permute.xlu0 %1288
      %1290 = vrot.lane.b32.xlu0 %v1011, 28
      %v1291 = vpop.permute.xlu0 %1290
      %1292 = vrot.lane.b32.xlu0 %v1012, 28
      %v1293 = vpop.permute.xlu0 %1292
      %1294 = vrot.lane.b32.xlu0 %v1013, 28
      %v1295 = vpop.permute.xlu0 %1294
      %1296 = vrot.lane.b32.xlu0 %v1014, 28
      %v1297 = vpop.permute.xlu0 %1296
      %1298 = vrot.lane.b32.xlu0 %v1164, 28
      %v1299 = vpop.permute.xlu0 %1298
      %1300 = vrot.lane.b32.xlu0 %v1269, 28
      %v1301 = vpop.permute.xlu0 %1300
      %v1302 = vunpack.c.l.b16 %v915
      %v1303 = vunpack.c.l.b16 %v918
      %v1304 = vpack.c.b16 %v1303, %v1302
      %1305 = vrot.lane.b32.xlu0 %v1081, 32
      %v1306 = vpop.permute.xlu0 %1305
      %1307 = vrot.lane.b32.xlu0 %v1082, 32
      %v1308 = vpop.permute.xlu0 %1307
      %1309 = vrot.lane.b32.xlu0 %v1083, 32
      %v1310 = vpop.permute.xlu0 %1309
      %1311 = vrot.lane.b32.xlu0 %v1084, 32
      %v1312 = vpop.permute.xlu0 %1311
      %1313 = vrot.lane.b32.xlu0 %v1085, 32
      %v1314 = vpop.permute.xlu0 %1313
      %1315 = vrot.lane.b32.xlu0 %v1086, 32
      %v1316 = vpop.permute.xlu0 %1315
      %1317 = vrot.lane.b32.xlu0 %v1087, 32
      %v1318 = vpop.permute.xlu0 %1317
      %1319 = vrot.lane.b32.xlu0 %v1088, 32
      %v1320 = vpop.permute.xlu0 %1319
      %1321 = vrot.lane.b32.xlu0 %v1089, 32
      %v1322 = vpop.permute.xlu0 %1321
      %1323 = vrot.lane.b32.xlu0 %v1090, 32
      %v1324 = vpop.permute.xlu0 %1323
      %1325 = vrot.lane.b32.xlu0 %v1091, 32
      %v1326 = vpop.permute.xlu0 %1325
      %1327 = vrot.lane.b32.xlu0 %v1092, 32
      %v1328 = vpop.permute.xlu0 %1327
      %1329 = vrot.lane.b32.xlu0 %v1093, 32
      %v1330 = vpop.permute.xlu0 %1329
      %1331 = vrot.lane.b32.xlu0 %v1094, 32
      %v1332 = vpop.permute.xlu0 %1331
      %1333 = vrot.lane.b32.xlu0 %v1199, 32
      %v1334 = vpop.permute.xlu0 %1333
      %1335 = vrot.lane.b32.xlu0 %v1304, 32
      %v1336 = vpop.permute.xlu0 %1335
      %vm1337 = vcmask 31744
      %v1340 = vsel %vm1337, %v951, %v1016
      %v1343 = vsel %vm1337, %v952, %v1018
      %v1346 = vsel %vm1337, %v953, %v1020
      %v1349 = vsel %vm1337, %v954, %v1022
      %v1352 = vsel %vm1337, %v955, %v1024
      %v1355 = vsel %vm1337, %v956, %v1026
      %v1358 = vsel %vm1337, %v957, %v1028
      %v1361 = vsel %vm1337, %v958, %v1030
      %v1364 = vsel %vm1337, %v959, %v1032
      %v1367 = vsel %vm1337, %v960, %v1034
      %v1370 = vsel %vm1337, %v961, %v1036
      %v1373 = vsel %vm1337, %v962, %v1038
      %v1376 = vsel %vm1337, %v963, %v1040
      %v1379 = vsel %vm1337, %v964, %v1042
      %v1382 = vsel %vm1337, %v965, %v1044
      %v1385 = vsel %vm1337, %v966, %v1046
      %vm1386 = vcmask 64512
      %v1388 = vsel %vm1386, %v1340, %v1096
      %v1390 = vsel %vm1386, %v1343, %v1098
      %v1392 = vsel %vm1386, %v1346, %v1100
      %v1394 = vsel %vm1386, %v1349, %v1102
      %v1396 = vsel %vm1386, %v1352, %v1104
      %v1398 = vsel %vm1386, %v1355, %v1106
      %v1400 = vsel %vm1386, %v1358, %v1108
      %v1402 = vsel %vm1386, %v1361, %v1110
      %v1404 = vsel %vm1386, %v1364, %v1112
      %v1406 = vsel %vm1386, %v1367, %v1114
      %v1408 = vsel %vm1386, %v1370, %v1116
      %v1410 = vsel %vm1386, %v1373, %v1118
      %v1412 = vsel %vm1386, %v1376, %v1120
      %v1414 = vsel %vm1386, %v1379, %v1122
      %v1416 = vsel %vm1386, %v1382, %v1124
      %v1418 = vsel %vm1386, %v1385, %v1126
      %vm1419 = vcmask 97280
      %v1421 = vsel %vm1419, %v1388, %v1131
      %v1423 = vsel %vm1419, %v1390, %v1133
      %v1425 = vsel %vm1419, %v1392, %v1135
      %v1427 = vsel %vm1419, %v1394, %v1137
      %v1429 = vsel %vm1419, %v1396, %v1139
      %v1431 = vsel %vm1419, %v1398, %v1141
      %v1433 = vsel %vm1419, %v1400, %v1143
      %v1435 = vsel %vm1419, %v1402, %v1145
      %v1437 = vsel %vm1419, %v1404, %v1147
      %v1439 = vsel %vm1419, %v1406, %v1149
      %v1441 = vsel %vm1419, %v1408, %v1151
      %v1443 = vsel %vm1419, %v1410, %v1153
      %v1445 = vsel %vm1419, %v1412, %v1155
      %v1447 = vsel %vm1419, %v1414, %v1157
      %v1449 = vsel %vm1419, %v1416, %v1159
      %v1451 = vsel %vm1419, %v1418, %v1161
      %vm1452 = vcmask 130048
      %v1454 = vsel %vm1452, %v1421, %v1166
      %v1456 = vsel %vm1452, %v1423, %v1168
      %v1458 = vsel %vm1452, %v1425, %v1170
      %v1460 = vsel %vm1452, %v1427, %v1172
      %v1462 = vsel %vm1452, %v1429, %v1174
      %v1464 = vsel %vm1452, %v1431, %v1176
      %v1466 = vsel %vm1452, %v1433, %v1178
      %v1468 = vsel %vm1452, %v1435, %v1180
      %v1470 = vsel %vm1452, %v1437, %v1182
      %v1472 = vsel %vm1452, %v1439, %v1184
      %v1474 = vsel %vm1452, %v1441, %v1186
      %v1476 = vsel %vm1452, %v1443, %v1188
      %v1478 = vsel %vm1452, %v1445, %v1190
      %v1480 = vsel %vm1452, %v1447, %v1192
      %v1482 = vsel %vm1452, %v1449, %v1194
      %v1484 = vsel %vm1452, %v1451, %v1196
      %vm1485 = vcmask 162816
      %v1487 = vsel %vm1485, %v1454, %v1201
      %v1489 = vsel %vm1485, %v1456, %v1203
      %v1491 = vsel %vm1485, %v1458, %v1205
      %v1493 = vsel %vm1485, %v1460, %v1207
      %v1495 = vsel %vm1485, %v1462, %v1209
      %v1497 = vsel %vm1485, %v1464, %v1211
      %v1499 = vsel %vm1485, %v1466, %v1213
      %v1501 = vsel %vm1485, %v1468, %v1215
      %v1503 = vsel %vm1485, %v1470, %v1217
      %v1505 = vsel %vm1485, %v1472, %v1219
      %v1507 = vsel %vm1485, %v1474, %v1221
      %v1509 = vsel %vm1485, %v1476, %v1223
      %v1511 = vsel %vm1485, %v1478, %v1225
      %v1513 = vsel %vm1485, %v1480, %v1227
      %v1515 = vsel %vm1485, %v1482, %v1229
      %v1517 = vsel %vm1485, %v1484, %v1231
      %vm1518 = vcmask 195584
      %v1520 = vsel %vm1518, %v1487, %v1236
      %v1522 = vsel %vm1518, %v1489, %v1238
      %v1524 = vsel %vm1518, %v1491, %v1240
      %v1526 = vsel %vm1518, %v1493, %v1242
      %v1528 = vsel %vm1518, %v1495, %v1244
      %v1530 = vsel %vm1518, %v1497, %v1246
      %v1532 = vsel %vm1518, %v1499, %v1248
      %v1534 = vsel %vm1518, %v1501, %v1250
      %v1536 = vsel %vm1518, %v1503, %v1252
      %v1538 = vsel %vm1518, %v1505, %v1254
      %v1540 = vsel %vm1518, %v1507, %v1256
      %v1542 = vsel %vm1518, %v1509, %v1258
      %v1544 = vsel %vm1518, %v1511, %v1260
      %v1546 = vsel %vm1518, %v1513, %v1262
      %v1548 = vsel %vm1518, %v1515, %v1264
      %v1550 = vsel %vm1518, %v1517, %v1266
      %vm1551 = vcmask 228352
      %v1553 = vsel %vm1551, %v1520, %v1271
      %v1555 = vsel %vm1551, %v1522, %v1273
      %v1557 = vsel %vm1551, %v1524, %v1275
      %v1559 = vsel %vm1551, %v1526, %v1277
      %v1561 = vsel %vm1551, %v1528, %v1279
      %v1563 = vsel %vm1551, %v1530, %v1281
      %v1565 = vsel %vm1551, %v1532, %v1283
      %v1567 = vsel %vm1551, %v1534, %v1285
      %v1569 = vsel %vm1551, %v1536, %v1287
      %v1571 = vsel %vm1551, %v1538, %v1289
      %v1573 = vsel %vm1551, %v1540, %v1291
      %v1575 = vsel %vm1551, %v1542, %v1293
      %v1577 = vsel %vm1551, %v1544, %v1295
      %v1579 = vsel %vm1551, %v1546, %v1297
      %v1581 = vsel %vm1551, %v1548, %v1299
      %v1583 = vsel %vm1551, %v1550, %v1301
      %vm1584 = vcmask 261120
      %v1586 = vsel %vm1584, %v1553, %v1306
      %v1588 = vsel %vm1584, %v1555, %v1308
      %v1590 = vsel %vm1584, %v1557, %v1310
      %v1592 = vsel %vm1584, %v1559, %v1312
      %v1594 = vsel %vm1584, %v1561, %v1314
      %v1596 = vsel %vm1584, %v1563, %v1316
      %v1598 = vsel %vm1584, %v1565, %v1318
      %v1600 = vsel %vm1584, %v1567, %v1320
      %v1602 = vsel %vm1584, %v1569, %v1322
      %v1604 = vsel %vm1584, %v1571, %v1324
      %v1606 = vsel %vm1584, %v1573, %v1326
      %v1608 = vsel %vm1584, %v1575, %v1328
      %v1610 = vsel %vm1584, %v1577, %v1330
      %v1612 = vsel %vm1584, %v1579, %v1332
      %v1614 = vsel %vm1584, %v1581, %v1334
      %v1616 = vsel %vm1584, %v1583, %v1336
      %v1617 = vld [vmem:[%s1] sm:$0xf]
      %v1618 = vld [vmem:[%s1 + $0x4] sm:$0xf]
      %v1619 = vld [vmem:[%s1 + $0x8] sm:$0xf]
      %v1620 = vld [vmem:[%s1 + $0xc] sm:$0xf]
      %v1621 = vld [vmem:[%s1 + $0x10] sm:$0x3]
      %v1627 = vunpack.c.l.b16 %v1617
      %v1628 = vunpack.c.l.b16 %v1618
      %v1629 = vunpack.c.l.b16 %v1619
      %v1630 = vunpack.c.l.b16 %v1620
      %v1631 = vunpack.c.l.b16 %v1621
      %v1632 = vpack.c.b16 %v1628, %v1627
      %v1633 = vpack.c.b16 %v1630, %v1629
      %v1634 = vpack.c.b16 %v1631, %v1631
      %vm1637 = vcmask 293888
      %v1638 = vsel %vm1637, %v1586, 0
      %v1640 = vsel %vm1637, %v1588, 0
      %v1642 = vsel %vm1637, %v1590, 0
      %v1644 = vsel %vm1637, %v1592, 0
      %v1646 = vsel %vm1637, %v1594, 0
      %v1648 = vsel %vm1637, %v1596, 0
      %v1650 = vsel %vm1637, %v1598, 0
      %v1652 = vsel %vm1637, %v1600, 0
      %v1654 = vsel %vm1637, %v1602, 0
      %v1656 = vsel %vm1637, %v1604, 0
      %v1658 = vsel %vm1637, %v1606, 0
      %v1660 = vsel %vm1637, %v1608, 0
      %v1662 = vsel %vm1637, %v1610, 0
      %v1664 = vsel %vm1637, %v1612, 0
      %v1666 = vsel %vm1637, %v1614, 0
      %v1668 = vsel %vm1637, %v1616, 0
      %vm1670 = vcmask 1041408
      %v1672 = vsel %vm1670, %v1634, 0
      %1674 = vmatprep.subr.bf16.mxu0 0
      %1675 = vmatpush1.bf16.msra.mxu0 %v1632
      %1676 = vmatprep.subr.bf16.mxu0 0
      %1677 = vmatpush1.bf16.msra.mxu0 %v1633
      %1678 = vmatprep.subr.bf16.mxu0 0
      %1679 = vmatpush1.bf16.msra.mxu0 %v1672
      %1680 = vmatprep.subr.bf16.mxu0 0
      %1681 = vmatpush1.bf16.msra.mxu0 0
      %1682 = vmatprep.subr.bf16.mxu0 0
      %1683 = vmatpush1.bf16.msra.mxu0 0
      %1684 = vmatprep.subr.bf16.mxu0 0
      %1685 = vmatpush1.bf16.msra.mxu0 0
      %1686 = vmatprep.subr.bf16.mxu0 0
      %1687 = vmatpush1.bf16.msra.mxu0 0
      %1688 = vmatprep.subr.bf16.mxu0 0
      %1689 = vmatpush1.bf16.msra.mxu0 0
      %1690 = vmatprep.subr.bf16.mxu0 0
      %1691 = vmatpush1.bf16.msra.mxu0 0
      %1692 = vmatprep.subr.bf16.mxu0 0
      %1693 = vmatpush1.bf16.msra.mxu0 0
      %1694 = vmatprep.subr.bf16.mxu0 0
      %1695 = vmatpush1.bf16.msra.mxu0 0
      %1696 = vmatprep.subr.bf16.mxu0 0
      %1697 = vmatpush1.bf16.msra.mxu0 0
      %1698 = vmatprep.subr.bf16.mxu0 0
      %1699 = vmatpush1.bf16.msra.mxu0 0
      %1700 = vmatprep.subr.bf16.mxu0 0
      %1701 = vmatpush1.bf16.msra.mxu0 0
      %1702 = vmatprep.subr.bf16.mxu0 0
      %1703 = vmatpush1.bf16.msra.mxu0 0
      %1704 = vmatprep.subr.bf16.mxu0 0
      %1705 = vmatpush1.bf16.msra.mxu0 0
      %1706 = vmatprep.mubr.bf16.mxu0 0
      %1707 = vmatmul.mubr.bf16.gmra.mrb[0].mxu0 %v1638
      %v1708 = vpop.f32.mrb[0].mxu0
      %v1709 = vadd.f32 0.0, %v1708
      %v1710 = vpop.f32.mrb[0].mxu0
      %v1711 = vpop.f32.mrb[0].mxu0
      %v1712 = vadd.f32 0.0, %v1711
      %v1713 = vpop.f32.mrb[0].mxu0
      %1714 = vmatprep.mubr.bf16.mxu0 0
      %1715 = vmatmul.mubr.bf16.gmra.mrb[0].mxu0 %v1640
      %v1716 = vpop.f32.mrb[0].mxu0
      %v1717 = vadd.f32 0.0, %v1716
      %v1718 = vpop.f32.mrb[0].mxu0
      %v1719 = vpop.f32.mrb[0].mxu0
      %v1720 = vadd.f32 0.0, %v1719
      %v1721 = vpop.f32.mrb[0].mxu0
      %1722 = vmatprep.mubr.bf16.mxu0 0
      %1723 = vmatmul.mubr.bf16.gmra.mrb[0].mxu0 %v1642
      %v1724 = vpop.f32.mrb[0].mxu0
      %v1725 = vadd.f32 0.0, %v1724
      %v1726 = vpop.f32.mrb[0].mxu0
      %v1727 = vpop.f32.mrb[0].mxu0
      %v1728 = vadd.f32 0.0, %v1727
      %v1729 = vpop.f32.mrb[0].mxu0
      %1730 = vmatprep.mubr.bf16.mxu0 0
      %1731 = vmatmul.mubr.bf16.gmra.mrb[0].mxu0 %v1644
      %v1732 = vpop.f32.mrb[0].mxu0
      %v1733 = vadd.f32 0.0, %v1732
      %v1734 = vpop.f32.mrb[0].mxu0
      %v1735 = vpop.f32.mrb[0].mxu0
      %v1736 = vadd.f32 0.0, %v1735
      %v1737 = vpop.f32.mrb[0].mxu0
      %1738 = vmatprep.mubr.bf16.mxu0 0
      %1739 = vmatmul.mubr.bf16.gmra.mrb[0].mxu0 %v1646
      %v1740 = vpop.f32.mrb[0].mxu0
      %v1741 = vadd.f32 0.0, %v1740
      %v1742 = vpop.f32.mrb[0].mxu0
      %v1743 = vpop.f32.mrb[0].mxu0
      %v1744 = vadd.f32 0.0, %v1743
      %v1745 = vpop.f32.mrb[0].mxu0
      %1746 = vmatprep.mubr.bf16.mxu0 0
      %1747 = vmatmul.mubr.bf16.gmra.mrb[0].mxu0 %v1648
      %v1748 = vpop.f32.mrb[0].mxu0
      %v1749 = vadd.f32 0.0, %v1748
      %v1750 = vpop.f32.mrb[0].mxu0
      %v1751 = vpop.f32.mrb[0].mxu0
      %v1752 = vadd.f32 0.0, %v1751
      %v1753 = vpop.f32.mrb[0].mxu0
      %1754 = vmatprep.mubr.bf16.mxu0 0
      %1755 = vmatmul.mubr.bf16.gmra.mrb[0].mxu0 %v1650
      %v1756 = vpop.f32.mrb[0].mxu0
      %v1757 = vadd.f32 0.0, %v1756
      %v1758 = vpop.f32.mrb[0].mxu0
      %v1759 = vpop.f32.mrb[0].mxu0
      %v1760 = vadd.f32 0.0, %v1759
      %v1761 = vpop.f32.mrb[0].mxu0
      %1762 = vmatprep.mubr.bf16.mxu0 0
      %1763 = vmatmul.mubr.bf16.gmra.mrb[0].mxu0 %v1652
      %v1764 = vpop.f32.mrb[0].mxu0
      %v1765 = vadd.f32 0.0, %v1764
      %v1766 = vpop.f32.mrb[0].mxu0
      %v1767 = vpop.f32.mrb[0].mxu0
      %v1768 = vadd.f32 0.0, %v1767
      %v1769 = vpop.f32.mrb[0].mxu0
      %1770 = vmatprep.mubr.bf16.mxu0 0
      %1771 = vmatmul.mubr.bf16.gmra.mrb[0].mxu0 %v1654
      %v1772 = vpop.f32.mrb[0].mxu0
      %v1773 = vadd.f32 0.0, %v1772
      %v1774 = vpop.f32.mrb[0].mxu0
      %v1775 = vpop.f32.mrb[0].mxu0
      %v1776 = vadd.f32 0.0, %v1775
      %v1777 = vpop.f32.mrb[0].mxu0
      %1778 = vmatprep.mubr.bf16.mxu0 0
      %1779 = vmatmul.mubr.bf16.gmra.mrb[0].mxu0 %v1656
      %v1780 = vpop.f32.mrb[0].mxu0
      %v1781 = vadd.f32 0.0, %v1780
      %v1782 = vpop.f32.mrb[0].mxu0
      %v1783 = vpop.f32.mrb[0].mxu0
      %v1784 = vadd.f32 0.0, %v1783
      %v1785 = vpop.f32.mrb[0].mxu0
      %1786 = vmatprep.mubr.bf16.mxu0 0
      %1787 = vmatmul.mubr.bf16.gmra.mrb[0].mxu0 %v1658
      %v1788 = vpop.f32.mrb[0].mxu0
      %v1789 = vadd.f32 0.0, %v1788
      %v1790 = vpop.f32.mrb[0].mxu0
      %v1791 = vpop.f32.mrb[0].mxu0
      %v1792 = vadd.f32 0.0, %v1791
      %v1793 = vpop.f32.mrb[0].mxu0
      %1794 = vmatprep.mubr.bf16.mxu0 0
      %1795 = vmatmul.mubr.bf16.gmra.mrb[0].mxu0 %v1660
      %v1796 = vpop.f32.mrb[0].mxu0
      %v1797 = vadd.f32 0.0, %v1796
      %v1798 = vpop.f32.mrb[0].mxu0
      %v1799 = vpop.f32.mrb[0].mxu0
      %v1800 = vadd.f32 0.0, %v1799
      %v1801 = vpop.f32.mrb[0].mxu0
      %1802 = vmatprep.mubr.bf16.mxu0 0
      %1803 = vmatmul.mubr.bf16.gmra.mrb[0].mxu0 %v1662
      %v1804 = vpop.f32.mrb[0].mxu0
      %v1805 = vadd.f32 0.0, %v1804
      %v1806 = vpop.f32.mrb[0].mxu0
      %v1807 = vpop.f32.mrb[0].mxu0
      %v1808 = vadd.f32 0.0, %v1807
      %v1809 = vpop.f32.mrb[0].mxu0
      %1810 = vmatprep.mubr.bf16.mxu0 0
      %1811 = vmatmul.mubr.bf16.gmra.mrb[0].mxu0 %v1664
      %v1812 = vpop.f32.mrb[0].mxu0
      %v1813 = vadd.f32 0.0, %v1812
      %v1814 = vpop.f32.mrb[0].mxu0
      %v1815 = vpop.f32.mrb[0].mxu0
      %v1816 = vadd.f32 0.0, %v1815
      %v1817 = vpop.f32.mrb[0].mxu0
      %1818 = vmatprep.mubr.bf16.mxu0 0
      %1819 = vmatmul.mubr.bf16.gmra.mrb[0].mxu0 %v1666
      %v1820 = vpop.f32.mrb[0].mxu0
      %v1821 = vadd.f32 0.0, %v1820
      %v1822 = vpop.f32.mrb[0].mxu0
      %v1823 = vpop.f32.mrb[0].mxu0
      %v1824 = vadd.f32 0.0, %v1823
      %v1825 = vpop.f32.mrb[0].mxu0
      %1826 = vmatprep.mubr.bf16.mxu0 0
      %1827 = vmatmul.mubr.bf16.gmra.mrb[0].mxu0 %v1668
      %v1828 = vpop.f32.mrb[0].mxu0
      %v1829 = vadd.f32 0.0, %v1828
      %v1830 = vpop.f32.mrb[0].mxu0
      %v1831 = vpop.f32.mrb[0].mxu0
      %v1832 = vadd.f32 0.0, %v1831
      %v1833 = vpop.f32.mrb[0].mxu0
      %1834 = vdwg.mxu0
      %v1835 = vpack.c.bf16 %v1712, %v1709
      %v1836 = vpack.c.bf16 %v1720, %v1717
      %v1837 = vpack.c.bf16 %v1728, %v1725
      %v1838 = vpack.c.bf16 %v1736, %v1733
      %v1839 = vpack.c.bf16 %v1744, %v1741
      %v1840 = vpack.c.bf16 %v1752, %v1749
      %v1841 = vpack.c.bf16 %v1760, %v1757
      %v1842 = vpack.c.bf16 %v1768, %v1765
      %v1843 = vpack.c.bf16 %v1776, %v1773
      %v1844 = vpack.c.bf16 %v1784, %v1781
      %v1845 = vpack.c.bf16 %v1792, %v1789
      %v1846 = vpack.c.bf16 %v1800, %v1797
      %v1847 = vpack.c.bf16 %v1808, %v1805
      %v1848 = vpack.c.bf16 %v1816, %v1813
      %v1849 = vpack.c.bf16 %v1824, %v1821
      %v1850 = vpack.c.bf16 %v1832, %v1829
      %v1867 = vunpack.c.l.b16 %v1835
      %v1868 = vunpack.c.h.b16 %v1835
      %v1869 = vunpack.c.l.b16 %v1836
      %v1870 = vunpack.c.h.b16 %v1836
      %v1871 = vunpack.c.l.b16 %v1837
      %v1872 = vunpack.c.h.b16 %v1837
      %v1873 = vunpack.c.l.b16 %v1838
      %v1874 = vunpack.c.h.b16 %v1838
      %v1875 = vunpack.c.l.b16 %v1839
      %v1876 = vunpack.c.h.b16 %v1839
      %v1877 = vunpack.c.l.b16 %v1840
      %v1878 = vunpack.c.h.b16 %v1840
      %v1879 = vunpack.c.l.b16 %v1841
      %v1880 = vunpack.c.h.b16 %v1841
      %v1881 = vunpack.c.l.b16 %v1842
      %v1882 = vunpack.c.h.b16 %v1842
      %v1883 = vunpack.c.l.b16 %v1843
      %v1884 = vunpack.c.h.b16 %v1843
      %v1885 = vunpack.c.l.b16 %v1844
      %v1886 = vunpack.c.h.b16 %v1844
      %v1887 = vunpack.c.l.b16 %v1845
      %v1888 = vunpack.c.h.b16 %v1845
      %v1889 = vunpack.c.l.b16 %v1846
      %v1890 = vunpack.c.h.b16 %v1846
      %v1891 = vunpack.c.l.b16 %v1847
      %v1892 = vunpack.c.h.b16 %v1847
      %v1893 = vunpack.c.l.b16 %v1848
      %v1894 = vunpack.c.h.b16 %v1848
      %v1895 = vunpack.c.l.b16 %v1849
      %v1896 = vunpack.c.h.b16 %v1849
      %v1897 = vunpack.c.l.b16 %v1850
      %v1898 = vunpack.c.h.b16 %v1850
      %v1899 = vpack.c.b16 %v1867, %v1867
      %v1900 = vpack.c.b16 %v1868, %v1868
      %v1901 = vpack.c.b16 %v1869, %v1869
      %v1902 = vpack.c.b16 %v1870, %v1870
      %v1903 = vpack.c.b16 %v1871, %v1871
      %v1904 = vpack.c.b16 %v1872, %v1872
      %v1905 = vpack.c.b16 %v1873, %v1873
      %v1906 = vpack.c.b16 %v1874, %v1874
      %v1907 = vpack.c.b16 %v1875, %v1875
      %v1908 = vpack.c.b16 %v1876, %v1876
      %v1909 = vpack.c.b16 %v1877, %v1877
      %v1910 = vpack.c.b16 %v1878, %v1878
      %v1911 = vpack.c.b16 %v1879, %v1879
      %v1912 = vpack.c.b16 %v1880, %v1880
      %v1913 = vpack.c.b16 %v1881, %v1881
      %v1914 = vpack.c.b16 %v1882, %v1882
      %v1915 = vpack.c.b16 %v1883, %v1883
      %v1916 = vpack.c.b16 %v1884, %v1884
      %v1917 = vpack.c.b16 %v1885, %v1885
      %v1918 = vpack.c.b16 %v1886, %v1886
      %v1919 = vpack.c.b16 %v1887, %v1887
      %v1920 = vpack.c.b16 %v1888, %v1888
      %v1921 = vpack.c.b16 %v1889, %v1889
      %v1922 = vpack.c.b16 %v1890, %v1890
      %v1923 = vpack.c.b16 %v1891, %v1891
      %v1924 = vpack.c.b16 %v1892, %v1892
      %v1925 = vpack.c.b16 %v1893, %v1893
      %v1926 = vpack.c.b16 %v1894, %v1894
      %v1927 = vpack.c.b16 %v1895, %v1895
      %v1928 = vpack.c.b16 %v1896, %v1896
      %v1929 = vpack.c.b16 %v1897, %v1897
      %v1930 = vpack.c.b16 %v1898, %v1898
      %vm1963 = vcmask 27648
      %1964 = vst.msk [vmem:[%s231] sm:$0xf] %vm1963, %v1899
      %1965 = vst.msk [vmem:[%s231 + $0x4] sm:$0xf] %vm1963, %v1900
      %1966 = vst.msk [vmem:[%s231 + $0x8] sm:$0xf] %vm1963, %v1901
      %1967 = vst.msk [vmem:[%s231 + $0xc] sm:$0xf] %vm1963, %v1902
      %1968 = vst.msk [vmem:[%s231 + $0x10] sm:$0xf] %vm1963, %v1903
      %1969 = vst.msk [vmem:[%s231 + $0x14] sm:$0xf] %vm1963, %v1904
      %1970 = vst.msk [vmem:[%s231 + $0x18] sm:$0xf] %vm1963, %v1905
      %1971 = vst.msk [vmem:[%s231 + $0x1c] sm:$0xf] %vm1963, %v1906
      %1972 = vst.msk [vmem:[%s231 + $0x20] sm:$0xf] %vm1963, %v1907
      %1973 = vst.msk [vmem:[%s231 + $0x24] sm:$0xf] %vm1963, %v1908
      %1974 = vst.msk [vmem:[%s231 + $0x28] sm:$0xf] %vm1963, %v1909
      %1975 = vst.msk [vmem:[%s231 + $0x2c] sm:$0xf] %vm1963, %v1910
      %1976 = vst.msk [vmem:[%s231 + $0x30] sm:$0xf] %vm1963, %v1911
      %1977 = vst.msk [vmem:[%s231 + $0x34] sm:$0xf] %vm1963, %v1912
      %1978 = vst.msk [vmem:[%s231 + $0x38] sm:$0xf] %vm1963, %v1913
      %1979 = vst.msk [vmem:[%s231 + $0x3c] sm:$0xf] %vm1963, %v1914
      %1980 = vst.msk [vmem:[%s231 + $0x40] sm:$0xf] %vm1963, %v1915
      %1981 = vst.msk [vmem:[%s231 + $0x44] sm:$0xf] %vm1963, %v1916
      %1982 = vst.msk [vmem:[%s231 + $0x48] sm:$0xf] %vm1963, %v1917
      %1983 = vst.msk [vmem:[%s231 + $0x4c] sm:$0xf] %vm1963, %v1918
      %1984 = vst.msk [vmem:[%s231 + $0x50] sm:$0xf] %vm1963, %v1919
      %1985 = vst.msk [vmem:[%s231 + $0x54] sm:$0xf] %vm1963, %v1920
      %1986 = vst.msk [vmem:[%s231 + $0x58] sm:$0xf] %vm1963, %v1921
      %1987 = vst.msk [vmem:[%s231 + $0x5c] sm:$0xf] %vm1963, %v1922
      %1988 = vst.msk [vmem:[%s231 + $0x60] sm:$0xf] %vm1963, %v1923
      %1989 = vst.msk [vmem:[%s231 + $0x64] sm:$0xf] %vm1963, %v1924
      %1990 = vst.msk [vmem:[%s231 + $0x68] sm:$0xf] %vm1963, %v1925
      %1991 = vst.msk [vmem:[%s231 + $0x6c] sm:$0xf] %vm1963, %v1926
      %1992 = vst.msk [vmem:[%s231 + $0x70] sm:$0xf] %vm1963, %v1927
      %1993 = vst.msk [vmem:[%s231 + $0x74] sm:$0xf] %vm1963, %v1928
      %1994 = vst.msk [vmem:[%s231 + $0x78] sm:$0xf] %vm1963, %v1929
      %1995 = vst.msk [vmem:[%s231 + $0x7c] sm:$0xf] %vm1963, %v1930
      %v1996 = vld [vmem:[%s235] sm:$0x1]
      %v1997 = vsel %vm1337, %v1709, 0.0
      %v1998 = vsel %vm1337, %v1712, 0.0
      %v1999 = vadd.f32 %v1997, %v1998
      %v2000 = vsel %vm1337, %v1717, 0.0
      %v2001 = vadd.f32 %v1999, %v2000
      %v2002 = vsel %vm1337, %v1720, 0.0
      %v2003 = vadd.f32 %v2001, %v2002
      %v2004 = vsel %vm1337, %v1725, 0.0
      %v2005 = vadd.f32 %v2003, %v2004
      %v2006 = vsel %vm1337, %v1728, 0.0
      %v2007 = vadd.f32 %v2005, %v2006
      %v2008 = vsel %vm1337, %v1733, 0.0
      %v2009 = vadd.f32 %v2007, %v2008
      %v2010 = vsel %vm1337, %v1736, 0.0
      %v2011 = vadd.f32 %v2009, %v2010
      %v2012 = vsel %vm1337, %v1741, 0.0
      %v2013 = vadd.f32 %v2011, %v2012
      %v2014 = vsel %vm1337, %v1744, 0.0
      %v2015 = vadd.f32 %v2013, %v2014
      %v2016 = vsel %vm1337, %v1749, 0.0
      %v2017 = vadd.f32 %v2015, %v2016
      %v2018 = vsel %vm1337, %v1752, 0.0
      %v2019 = vadd.f32 %v2017, %v2018
      %v2020 = vsel %vm1337, %v1757, 0.0
      %v2021 = vadd.f32 %v2019, %v2020
      %v2022 = vsel %vm1337, %v1760, 0.0
      %v2023 = vadd.f32 %v2021, %v2022
      %v2024 = vsel %vm1337, %v1765, 0.0
      %v2025 = vadd.f32 %v2023, %v2024
      %v2026 = vsel %vm1337, %v1768, 0.0
      %v2027 = vadd.f32 %v2025, %v2026
      %v2028 = vsel %vm1337, %v1773, 0.0
      %v2029 = vadd.f32 %v2027, %v2028
      %v2030 = vsel %vm1337, %v1776, 0.0
      %v2031 = vadd.f32 %v2029, %v2030
      %v2032 = vsel %vm1337, %v1781, 0.0
      %v2033 = vadd.f32 %v2031, %v2032
      %v2034 = vsel %vm1337, %v1784, 0.0
      %v2035 = vadd.f32 %v2033, %v2034
      %v2036 = vsel %vm1337, %v1789, 0.0
      %v2037 = vadd.f32 %v2035, %v2036
      %v2038 = vsel %vm1337, %v1792, 0.0
      %v2039 = vadd.f32 %v2037, %v2038
      %v2040 = vsel %vm1337, %v1797, 0.0
      %v2041 = vadd.f32 %v2039, %v2040
      %v2042 = vsel %vm1337, %v1800, 0.0
      %v2043 = vadd.f32 %v2041, %v2042
      %v2044 = vsel %vm1337, %v1805, 0.0
      %v2045 = vadd.f32 %v2043, %v2044
      %v2046 = vsel %vm1337, %v1808, 0.0
      %v2047 = vadd.f32 %v2045, %v2046
      %v2048 = vsel %vm1337, %v1813, 0.0
      %v2049 = vadd.f32 %v2047, %v2048
      %v2050 = vsel %vm1337, %v1816, 0.0
      %v2051 = vadd.f32 %v2049, %v2050
      %v2052 = vsel %vm1337, %v1821, 0.0
      %v2053 = vadd.f32 %v2051, %v2052
      %v2054 = vsel %vm1337, %v1824, 0.0
      %v2055 = vadd.f32 %v2053, %v2054
      %v2056 = vsel %vm1337, %v1829, 0.0
      %v2057 = vadd.f32 %v2055, %v2056
      %v2058 = vsel %vm1337, %v1832, 0.0
      %v2059 = vadd.f32 %v2057, %v2058
      %v2060 = vrot.slane %v2059, 4
      %v2061 = vadd.f32 %v2059, %v2060
      %v2062 = vrot.slane %v2061, 2
      %v2063 = vadd.f32 %v2061, %v2062
      %v2064 = vrot.slane %v2063, 1
      %v2065 = vadd.f32 %v2063, %v2064
      %v2066 = vadd.f32 %v1996, %v2065
      %vm2067 = vcmask 24576
      %2068 = vst.msk [vmem:[%s235] sm:$0x1] %vm2067, %v2066
      %v2069 = vld [vmem:[%s238] sm:$0x1]
      %v2070 = vmul.f32 %v1709, %v1709
      %v2071 = vmul.f32 %v1712, %v1712
      %v2072 = vmul.f32 %v1717, %v1717
      %v2073 = vmul.f32 %v1720, %v1720
      %v2074 = vmul.f32 %v1725, %v1725
      %v2075 = vmul.f32 %v1728, %v1728
      %v2076 = vmul.f32 %v1733, %v1733
      %v2077 = vmul.f32 %v1736, %v1736
      %v2078 = vmul.f32 %v1741, %v1741
      %v2079 = vmul.f32 %v1744, %v1744
      %v2080 = vmul.f32 %v1749, %v1749
      %v2081 = vmul.f32 %v1752, %v1752
      %v2082 = vmul.f32 %v1757, %v1757
      %v2083 = vmul.f32 %v1760, %v1760
      %v2084 = vmul.f32 %v1765, %v1765
      %v2085 = vmul.f32 %v1768, %v1768
      %v2086 = vmul.f32 %v1773, %v1773
      %v2087 = vmul.f32 %v1776, %v1776
      %v2088 = vmul.f32 %v1781, %v1781
      %v2089 = vmul.f32 %v1784, %v1784
      %v2090 = vmul.f32 %v1789, %v1789
      %v2091 = vmul.f32 %v1792, %v1792
      %v2092 = vmul.f32 %v1797, %v1797
      %v2093 = vmul.f32 %v1800, %v1800
      %v2094 = vmul.f32 %v1805, %v1805
      %v2095 = vmul.f32 %v1808, %v1808
      %v2096 = vmul.f32 %v1813, %v1813
      %v2097 = vmul.f32 %v1816, %v1816
      %v2098 = vmul.f32 %v1821, %v1821
      %v2099 = vmul.f32 %v1824, %v1824
      %v2100 = vmul.f32 %v1829, %v1829
      %v2101 = vmul.f32 %v1832, %v1832
      %v2102 = vsel %vm1337, %v2070, 0.0
      %v2103 = vsel %vm1337, %v2071, 0.0
      %v2104 = vadd.f32 %v2102, %v2103
      %v2105 = vsel %vm1337, %v2072, 0.0
      %v2106 = vadd.f32 %v2104, %v2105
      %v2107 = vsel %vm1337, %v2073, 0.0
      %v2108 = vadd.f32 %v2106, %v2107
      %v2109 = vsel %vm1337, %v2074, 0.0
      %v2110 = vadd.f32 %v2108, %v2109
      %v2111 = vsel %vm1337, %v2075, 0.0
      %v2112 = vadd.f32 %v2110, %v2111
      %v2113 = vsel %vm1337, %v2076, 0.0
      %v2114 = vadd.f32 %v2112, %v2113
      %v2115 = vsel %vm1337, %v2077, 0.0
      %v2116 = vadd.f32 %v2114, %v2115
      %v2117 = vsel %vm1337, %v2078, 0.0
      %v2118 = vadd.f32 %v2116, %v2117
      %v2119 = vsel %vm1337, %v2079, 0.0
      %v2120 = vadd.f32 %v2118, %v2119
      %v2121 = vsel %vm1337, %v2080, 0.0
      %v2122 = vadd.f32 %v2120, %v2121
      %v2123 = vsel %vm1337, %v2081, 0.0
      %v2124 = vadd.f32 %v2122, %v2123
      %v2125 = vsel %vm1337, %v2082, 0.0
      %v2126 = vadd.f32 %v2124, %v2125
      %v2127 = vsel %vm1337, %v2083, 0.0
      %v2128 = vadd.f32 %v2126, %v2127
      %v2129 = vsel %vm1337, %v2084, 0.0
      %v2130 = vadd.f32 %v2128, %v2129
      %v2131 = vsel %vm1337, %v2085, 0.0
      %v2132 = vadd.f32 %v2130, %v2131
      %v2133 = vsel %vm1337, %v2086, 0.0
      %v2134 = vadd.f32 %v2132, %v2133
      %v2135 = vsel %vm1337, %v2087, 0.0
      %v2136 = vadd.f32 %v2134, %v2135
      %v2137 = vsel %vm1337, %v2088, 0.0
      %v2138 = vadd.f32 %v2136, %v2137
      %v2139 = vsel %vm1337, %v2089, 0.0
      %v2140 = vadd.f32 %v2138, %v2139
      %v2141 = vsel %vm1337, %v2090, 0.0
      %v2142 = vadd.f32 %v2140, %v2141
      %v2143 = vsel %vm1337, %v2091, 0.0
      %v2144 = vadd.f32 %v2142, %v2143
      %v2145 = vsel %vm1337, %v2092, 0.0
      %v2146 = vadd.f32 %v2144, %v2145
      %v2147 = vsel %vm1337, %v2093, 0.0
      %v2148 = vadd.f32 %v2146, %v2147
      %v2149 = vsel %vm1337, %v2094, 0.0
      %v2150 = vadd.f32 %v2148, %v2149
      %v2151 = vsel %vm1337, %v2095, 0.0
      %v2152 = vadd.f32 %v2150, %v2151
      %v2153 = vsel %vm1337, %v2096, 0.0
      %v2154 = vadd.f32 %v2152, %v2153
      %v2155 = vsel %vm1337, %v2097, 0.0
      %v2156 = vadd.f32 %v2154, %v2155
      %v2157 = vsel %vm1337, %v2098, 0.0
      %v2158 = vadd.f32 %v2156, %v2157
      %v2159 = vsel %vm1337, %v2099, 0.0
      %v2160 = vadd.f32 %v2158, %v2159
      %v2161 = vsel %vm1337, %v2100, 0.0
      %v2162 = vadd.f32 %v2160, %v2161
      %v2163 = vsel %vm1337, %v2101, 0.0
      %v2164 = vadd.f32 %v2162, %v2163
      %v2165 = vrot.slane %v2164, 4
      %v2166 = vadd.f32 %v2164, %v2165
      %v2167 = vrot.slane %v2166, 2
      %v2168 = vadd.f32 %v2166, %v2167
      %v2169 = vrot.slane %v2168, 1
      %v2170 = vadd.f32 %v2168, %v2169
      %v2171 = vadd.f32 %v2069, %v2170
      %2172 = vst.msk [vmem:[%s238] sm:$0x1] %vm2067, %v2171
      %s2173 = sadd.s32 %s20, %s21
      %p2174 = scmp.lt.s32.totalorder %s2173, 1
      %s2175 = scalar_select %p2174, %s2173, 1
      %s2176 = smul.addr %s2175, 32
      %s2177 = smul.addr %s2176, 4
      %s2178 = scalar_lea.vmem %s2, %s2177
      %p2179 = scmp.lt.s32.totalorder %s20, 1
      %s2180 = scalar_select %p2179, %s20, 1
      %s2181 = scalar_lea.vmem %s3, %s2180
      %p2182 = scmp.lt.s32.totalorder %s20, 1
      %s2183 = scalar_select %p2182, %s20, 1
      %s2184 = scalar_lea.vmem %s4, %s2183
      // Predicated region
      $region33: #{small_block_forward.2} parent=27 // pred_check
        %p2185 = pneg %p97
      $region34: #{small_block_forward.2} parent=27 // pred_check_branch
        %2187 = sbr.rel (%p2185) target = $region36
      $region35: #{small_block_forward.2} parent=27 // pred_region
        %s2188 = sadd.s32 %s20, %s21
      $region36: #{small_block_forward.2} parent=27 // pred_fallthru
        _
      // Predicated region
      $region37: #{small_block_forward.2} parent=27 // pred_check
        %p2189 = pneg %p123
      $region38: #{small_block_forward.2} parent=27 // pred_check_branch
        %2191 = sbr.rel (%p2189) target = $region40
      $region39: #{small_block_forward.2} parent=27 // pred_region
        _
      $region40: #{small_block_forward.2} parent=27 // pred_fallthru
        _
      // Predicated region
      $region41: #{small_block_forward.2} parent=27 // pred_check
        %p2192 = pneg %p149
      $region42: #{small_block_forward.2} parent=27 // pred_check_branch
        %2194 = sbr.rel (%p2192) target = $region44
      $region43: #{small_block_forward.2} parent=27 // pred_region
        _
      $region44: #{small_block_forward.2} parent=27 // pred_fallthru
        _
    $region28: #{small_block_forward.2} parent=5 // pred_fallthru
      _
    %p2195 = scmp.le.s32.totalorder 2, %s11
    // Predicated region
    $region45: #{small_block_forward.2} parent=5 // pred_check
      %p2196 = pneg %p2195
    $region46: #{small_block_forward.2} parent=5 // pred_check_branch
      %2198 = sbr.rel (%p2196) target = $region48
    $region47: #{small_block_forward.2} parent=5 // pred_region
      %s2199 = ssub.s32 %s11, 2
      // Predicated region
      $region49: #{small_block_forward.2} parent=47 // pred_check
        %p2200 = pneg %p103
      $region50: #{small_block_forward.2} parent=47 // pred_check_branch
        %2202 = sbr.rel (%p2200) target = $region52
      $region51: #{small_block_forward.2} parent=47 // pred_region
        %s2203 = sadd.s32 %s22, %s23
        %p2204 = scmp.lt.s32.totalorder %s2203, 1
        %s2205 = scalar_select %p2204, %s2203, 1
        %s2206 = smul.addr %s2205, 32
        %s2207 = smul.addr %s2206, 4
        %s2208 = scalar_lea.vmem %s2, %s2207
      $region52: #{small_block_forward.2} parent=47 // pred_fallthru
        _
      // Predicated region
      $region53: #{small_block_forward.2} parent=47 // pred_check
        %p2209 = pneg %p129
      $region54: #{small_block_forward.2} parent=47 // pred_check_branch
        %2211 = sbr.rel (%p2209) target = $region56
      $region55: #{small_block_forward.2} parent=47 // pred_region
        %p2212 = scmp.lt.s32.totalorder %s22, 1
        %s2213 = scalar_select %p2212, %s22, 1
        %s2214 = scalar_lea.vmem %s3, %s2213
      $region56: #{small_block_forward.2} parent=47 // pred_fallthru
        _
      // Predicated region
      $region57: #{small_block_forward.2} parent=47 // pred_check
        %p2215 = pneg %p155
      $region58: #{small_block_forward.2} parent=47 // pred_check_branch
        %2217 = sbr.rel (%p2215) target = $region60
      $region59: #{small_block_forward.2} parent=47 // pred_region
        %p2218 = scmp.lt.s32.totalorder %s22, 1
        %s2219 = scalar_select %p2218, %s22, 1
        %s2220 = scalar_lea.vmem %s4, %s2219
      $region60: #{small_block_forward.2} parent=47 // pred_fallthru
        _
    $region48: #{small_block_forward.2} parent=5 // pred_fallthru
      _
  $region6: #{small_block_forward.2} parent=0 // loop_footer
    %s15 = sadd.s32 1, %s11
  $region7: #{small_block_forward.2} parent=0 // loop_footer_branch
    %10 = sbr.rel target = $region3
  $region8: #{small_block_forward.2} parent=0 // loop_exit
    _

</llo_original>
